<compile_context>
chip_gen: v6e
topology: v6e:2x2x1
jax: 0.10.0
libtpu: 0.0.40
codegen_flags: <defaults>
</compile_context>

<pallas_src>
import functools

import jax
import jax.numpy as jnp
from jax.experimental import pallas as pl
from jax.experimental.pallas import tpu as pltpu


def _round_up(n: int, m: int) -> int:
    return ((n + m - 1) // m) * m


def _choose_batch_tile(B: int) -> int:
    """Sublane-aligned tile; >= 2 grid steps once the batch exceeds one tile."""
    Bp = _round_up(max(B, 1), 8)
    if Bp <= 256:
        return Bp          # one small tile; nothing useful to split
    if Bp < 1024:
        return 256         # >= 2 grid steps (v7x has 2 TensorCores)
    if Bp < 2048:
        return 512
    return 1024            # fat tiles amortize per-step overhead


def mlp_kernel(x_ref, w1_ref, b1_ref, w2_ref, b2_ref, w3_ref, b3_ref, o_ref):
    # Layer 1: (TB,784)bf16 @ (784,512)bf16 -> f32, +bias, ReLU (f32 VPU path).
    h1 = jnp.dot(x_ref[...], w1_ref[...], preferred_element_type=jnp.float32)
    h1 = jnp.maximum(h1 + b1_ref[...], 0.0)
    # Layer 2: (TB,512) @ (512,256) -> f32, +bias, ReLU (216 padded to 256).
    h2 = jnp.dot(h1.astype(jnp.bfloat16), w2_ref[...],
                 preferred_element_type=jnp.float32)
    h2 = jnp.maximum(h2 + b2_ref[...], 0.0)
    # Layer 3: (TB,256) @ (256,128) -> f32 logits (47 padded to 128), +bias.
    out = jnp.dot(h2.astype(jnp.bfloat16), w3_ref[...],
                  preferred_element_type=jnp.float32)
    o_ref[...] = (out + b3_ref[...]).astype(o_ref.dtype)


def prepare_params(params):
    """One-time, outside the per-call hot path: pad lane dims to multiples of
    128 and cast weights to bf16 (biases stay f32 for the VPU bias-add)."""
    w1, b1, w2, b2, w3, b3 = params
    H2, NC = w2.shape[1], w3.shape[1]
    H2p, NCp = _round_up(H2, 128), _round_up(NC, 128)
    b1 = jnp.asarray(b1).reshape(1, -1)
    b2 = jnp.asarray(b2).reshape(1, -1)
    b3 = jnp.asarray(b3).reshape(1, -1)
    w2p = jnp.pad(w2, ((0, 0), (0, H2p - H2)))
    b2p = jnp.pad(b2, ((0, 0), (0, H2p - H2)))
    w3p = jnp.pad(w3, ((0, H2p - H2), (0, NCp - NC)))
    b3p = jnp.pad(b3, ((0, 0), (0, NCp - NC)))
    return (w1.astype(jnp.bfloat16), b1.astype(jnp.float32),
            w2p.astype(jnp.bfloat16), b2p.astype(jnp.float32),
            w3p.astype(jnp.bfloat16), b3p.astype(jnp.float32))


@functools.partial(jax.jit, static_argnames=("num_classes", "single_buffer"))
def _forward_impl(x, prepared, *, num_classes, single_buffer):
    w1, b1, w2, b2, w3, b3 = prepared
    B = x.shape[0]
    # nn.Flatten() + bf16 cast for the MXU (fused with the producer under jit,
    # so no standalone read-f32/write-bf16 pass).
    x2d = x.reshape(B, -1).astype(jnp.bfloat16)
    D_in = x2d.shape[1]                       # 784 (not padded — see note #6)
    H1, H2p, NCp = w1.shape[1], w2.shape[1], w3.shape[1]

    TB = _choose_batch_tile(B)
    B_pad = _round_up(B, TB)
    if B_pad != B:
        x2d = jnp.pad(x2d, ((0, B_pad - B), (0, 0)))
    grid = (B_pad // TB,)

    # Weights/biases have constant index_maps -> fetched once, stay resident.
    resident = {"pipeline_mode": pl.Buffered(1)} if single_buffer else {}

    flops = 2 * B_pad * (D_in * H1 + H1 * H2p + H2p * NCp)
    bytes_accessed = (B_pad * D_in * 2                        # x (bf16)
                      + (w1.size + w2.size + w3.size) * 2     # weights (bf16)
                      + (b1.size + b2.size + b3.size) * 4     # biases (f32)
                      + B_pad * NCp * 4)                      # logits (f32)

    out = pl.pallas_call(
        mlp_kernel,
        out_shape=jax.ShapeDtypeStruct((B_pad, NCp), jnp.float32),
        grid=grid,
        in_specs=[
            pl.BlockSpec((TB, D_in), lambda i: (i, 0)),            # x tiled
            pl.BlockSpec((D_in, H1), lambda i: (0, 0), **resident),
            pl.BlockSpec((1, H1), lambda i: (0, 0), **resident),
            pl.BlockSpec((H1, H2p), lambda i: (0, 0), **resident),
            pl.BlockSpec((1, H2p), lambda i: (0, 0), **resident),
            pl.BlockSpec((H2p, NCp), lambda i: (0, 0), **resident),
            pl.BlockSpec((1, NCp), lambda i: (0, 0), **resident),
        ],
        out_specs=pl.BlockSpec((TB, NCp), lambda i: (i, 0)),        # lane-dense
        compiler_params=pltpu.CompilerParams(
            dimension_semantics=("parallel",),
            vmem_limit_bytes=32 * 1024 * 1024,
        ),
        cost_estimate=pl.CostEstimate(
            flops=flops, transcendentals=0, bytes_accessed=bytes_accessed),
    )(x2d, w1, b1, w2, b2, w3, b3)

    # Slice off batch padding and padded logit lanes BEFORE any softmax/loss.
    return out[:B, :num_classes]


_SINGLE_BUFFER_OK = True


def ann_forward(x, prepared, num_classes=47):
    """x: (B,1,28,28) / (B,28,28) / (B,784). Returns (B, num_classes) f32.
    Prefers single-buffered resident weights; falls back to default
    double-buffering if this JAX build rejects BlockSpec.pipeline_mode."""
    global _SINGLE_BUFFER_OK
    if _SINGLE_BUFFER_OK:
        try:
            return _forward_impl(x, prepared, num_classes=num_classes,
                                 single_buffer=True)
        except Exception:
            _SINGLE_BUFFER_OK = False   # portable fallback, same kernel math
    return _forward_impl(x, prepared, num_classes=num_classes,
                         single_buffer=False)


def init_params(key, num_classes=47):
    """Deterministic init matching torch.nn.Linear default:
    U(-1/sqrt(fan_in), 1/sqrt(fan_in)) for weight and bias.
    Weights stored (in_features, out_features) so the hot path is x @ W + b."""
    dims = [(28 * 28, 512), (512, 216), (216, num_classes)]
    params = []
    for (fan_in, fan_out) in dims:
        key, kw, kb = jax.random.split(key, 3)
        bound = 1.0 / jnp.sqrt(jnp.float32(fan_in))
        w = jax.random.uniform(kw, (fan_in, fan_out), jnp.float32, -bound, bound)
        b = jax.random.uniform(kb, (1, fan_out), jnp.float32, -bound, bound)
        params.extend([w, b])
    return tuple(params)


if __name__ == "__main__":
    key = jax.random.PRNGKey(0)
    key, kx = jax.random.split(key)
    # Small MNIST-like batch: (batch=2, channels=1, 28, 28)
    x = jax.random.normal(kx, (2, 1, 28, 28), jnp.float32)
    params = init_params(key, num_classes=47)
    prepared = prepare_params(params)       # one-time pad + bf16 cast

    out = ann_forward(x, prepared, num_classes=47)
    out = jax.block_until_ready(out)

    # Pure-JAX f32 reference of the same math (kernel uses bf16 MXU inputs
    # with f32 accumulation, so compare with a loose-but-tight-enough tol).
    w1, b1, w2, b2, w3, b3 = params
    xf = x.reshape(x.shape[0], -1)
    ref = jnp.maximum(xf @ w1 + b1, 0.0)
    ref = jnp.maximum(ref @ w2 + b2, 0.0)
    ref = ref @ w3 + b3

    assert out.shape == (2, 47), out.shape
    err = float(jnp.max(jnp.abs(out - ref)))
    assert jnp.allclose(out, ref, atol=5e-2, rtol=5e-2), err
    print("KERNEL_OK")
</pallas_src>

<mosaic_0001>
module attributes {stable_mosaic.version = 11 : i64} {
  func.func @mlp_kernel(%arg0: i32, %arg1: memref<8x784xbf16, #tpu.memory_space<vmem>>, %arg2: memref<784x512xbf16, #tpu.memory_space<vmem>>, %arg3: memref<1x512xf32, #tpu.memory_space<vmem>>, %arg4: memref<512x256xbf16, #tpu.memory_space<vmem>>, %arg5: memref<1x256xf32, #tpu.memory_space<vmem>>, %arg6: memref<256x128xbf16, #tpu.memory_space<vmem>>, %arg7: memref<1x128xf32, #tpu.memory_space<vmem>>, %arg8: memref<8x128xf32, #tpu.memory_space<vmem>>) attributes {dimension_semantics = [#tpu.dimension_semantics<parallel>], iteration_bounds = array<i64: 1>, scalar_prefetch = 0 : i64, scratch_operands = 0 : i64, tpu.core_type = #tpu.core_type<tc>, window_params = [{transform_indices = @transform_0, window_bounds = array<i64: 8, 784>}, {pipeline_mode = #tpu.pipeline_mode<synchronous>, transform_indices = @transform_1, window_bounds = array<i64: 784, 512>}, {pipeline_mode = #tpu.pipeline_mode<synchronous>, transform_indices = @transform_2, window_bounds = array<i64: 1, 512>}, {pipeline_mode = #tpu.pipeline_mode<synchronous>, transform_indices = @transform_3, window_bounds = array<i64: 512, 256>}, {pipeline_mode = #tpu.pipeline_mode<synchronous>, transform_indices = @transform_4, window_bounds = array<i64: 1, 256>}, {pipeline_mode = #tpu.pipeline_mode<synchronous>, transform_indices = @transform_5, window_bounds = array<i64: 256, 128>}, {pipeline_mode = #tpu.pipeline_mode<synchronous>, transform_indices = @transform_6, window_bounds = array<i64: 1, 128>}, {transform_indices = @transform_7, window_bounds = array<i64: 8, 128>}]} {
    %c0 = arith.constant 0 : index
    %c0_0 = arith.constant 0 : index
    %0 = vector.load %arg1[%c0, %c0_0] : memref<8x784xbf16, #tpu.memory_space<vmem>>, vector<8x784xbf16>
    %c0_1 = arith.constant 0 : index
    %c0_2 = arith.constant 0 : index
    %1 = vector.load %arg2[%c0_1, %c0_2] : memref<784x512xbf16, #tpu.memory_space<vmem>>, vector<784x512xbf16>
    %cst = arith.constant dense<0.000000e+00> : vector<8x512xf32>
    %2 = tpu.matmul %0, %1, %cst {dimension_numbers = #tpu.dot_dimension_numbers<[1], [0], [0], [1], [0, 0, 1, 1], [], []>} : vector<8x784xbf16>, vector<784x512xbf16>, vector<8x512xf32> -> vector<8x512xf32>
    %c0_3 = arith.constant 0 : index
    %c0_4 = arith.constant 0 : index
    %3 = vector.load %arg3[%c0_3, %c0_4] : memref<1x512xf32, #tpu.memory_space<vmem>>, vector<1x512xf32>
    %4 = vector.broadcast %3 : vector<1x512xf32> to vector<8x512xf32>
    %5 = arith.addf %2, %4 : vector<8x512xf32>
    %cst_5 = arith.constant 0.000000e+00 : f32
    %6 = vector.broadcast %cst_5 : f32 to vector<8x512xf32>
    %7 = arith.maximumf %5, %6 : vector<8x512xf32>
    %8 = arith.truncf %7 : vector<8x512xf32> to vector<8x512xbf16>
    %c0_6 = arith.constant 0 : index
    %c0_7 = arith.constant 0 : index
    %9 = vector.load %arg4[%c0_6, %c0_7] : memref<512x256xbf16, #tpu.memory_space<vmem>>, vector<512x256xbf16>
    %cst_8 = arith.constant dense<0.000000e+00> : vector<8x256xf32>
    %10 = tpu.matmul %8, %9, %cst_8 {dimension_numbers = #tpu.dot_dimension_numbers<[1], [0], [0], [1], [0, 0, 1, 1], [], []>} : vector<8x512xbf16>, vector<512x256xbf16>, vector<8x256xf32> -> vector<8x256xf32>
    %c0_9 = arith.constant 0 : index
    %c0_10 = arith.constant 0 : index
    %11 = vector.load %arg5[%c0_9, %c0_10] : memref<1x256xf32, #tpu.memory_space<vmem>>, vector<1x256xf32>
    %12 = vector.broadcast %11 : vector<1x256xf32> to vector<8x256xf32>
    %13 = arith.addf %10, %12 : vector<8x256xf32>
    %cst_11 = arith.constant 0.000000e+00 : f32
    %14 = vector.broadcast %cst_11 : f32 to vector<8x256xf32>
    %15 = arith.maximumf %13, %14 : vector<8x256xf32>
    %16 = arith.truncf %15 : vector<8x256xf32> to vector<8x256xbf16>
    %c0_12 = arith.constant 0 : index
    %c0_13 = arith.constant 0 : index
    %17 = vector.load %arg6[%c0_12, %c0_13] : memref<256x128xbf16, #tpu.memory_space<vmem>>, vector<256x128xbf16>
    %cst_14 = arith.constant dense<0.000000e+00> : vector<8x128xf32>
    %18 = tpu.matmul %16, %17, %cst_14 {dimension_numbers = #tpu.dot_dimension_numbers<[1], [0], [0], [1], [0, 0, 1, 1], [], []>} : vector<8x256xbf16>, vector<256x128xbf16>, vector<8x128xf32> -> vector<8x128xf32>
    %c0_15 = arith.constant 0 : index
    %c0_16 = arith.constant 0 : index
    %19 = vector.load %arg7[%c0_15, %c0_16] : memref<1x128xf32, #tpu.memory_space<vmem>>, vector<1x128xf32>
    %20 = vector.broadcast %19 : vector<1x128xf32> to vector<8x128xf32>
    %21 = arith.addf %18, %20 : vector<8x128xf32>
    %c0_17 = arith.constant 0 : index
    %c0_18 = arith.constant 0 : index
    %22 = vector.load %arg8[%c0_17, %c0_18] : memref<8x128xf32, #tpu.memory_space<vmem>>, vector<8x128xf32>
    tpu.vector_store %arg8[%c0_17, %c0_18], %21 {strides = array<i32>} : memref<8x128xf32, #tpu.memory_space<vmem>>, vector<8x128xf32>,
    return
  }
  func.func @transform_0(%arg0: i32) -> (i32, i32) {
    %c0_i32 = arith.constant 0 : i32
    %c0_i32_0 = arith.constant 0 : i32
    return %arg0, %c0_i32 : i32, i32
  }
  func.func @transform_1(%arg0: i32) -> (i32, i32) {
    %c0_i32 = arith.constant 0 : i32
    %c0_i32_0 = arith.constant 0 : i32
    %c0_i32_1 = arith.constant 0 : i32
    return %c0_i32, %c0_i32_0 : i32, i32
  }
  func.func @transform_2(%arg0: i32) -> (i32, i32) {
    %c0_i32 = arith.constant 0 : i32
    %c0_i32_0 = arith.constant 0 : i32
    %c0_i32_1 = arith.constant 0 : i32
    return %c0_i32, %c0_i32_0 : i32, i32
  }
  func.func @transform_3(%arg0: i32) -> (i32, i32) {
    %c0_i32 = arith.constant 0 : i32
    %c0_i32_0 = arith.constant 0 : i32
    %c0_i32_1 = arith.constant 0 : i32
    return %c0_i32, %c0_i32_0 : i32, i32
  }
  func.func @transform_4(%arg0: i32) -> (i32, i32) {
    %c0_i32 = arith.constant 0 : i32
    %c0_i32_0 = arith.constant 0 : i32
    %c0_i32_1 = arith.constant 0 : i32
    return %c0_i32, %c0_i32_0 : i32, i32
  }
  func.func @transform_5(%arg0: i32) -> (i32, i32) {
    %c0_i32 = arith.constant 0 : i32
    %c0_i32_0 = arith.constant 0 : i32
    %c0_i32_1 = arith.constant 0 : i32
    return %c0_i32, %c0_i32_0 : i32, i32
  }
  func.func @transform_6(%arg0: i32) -> (i32, i32) {
    %c0_i32 = arith.constant 0 : i32
    %c0_i32_0 = arith.constant 0 : i32
    %c0_i32_1 = arith.constant 0 : i32
    return %c0_i32, %c0_i32_0 : i32, i32
  }
  func.func @transform_7(%arg0: i32) -> (i32, i32) {
    %c0_i32 = arith.constant 0 : i32
    %c0_i32_0 = arith.constant 0 : i32
    return %arg0, %c0_i32 : i32, i32
  }
}

module attributes {stable_mosaic.version = 11 : i64} {
  func.func @mlp_kernel(%arg0: i32, %arg1: memref<8x784xbf16, #tpu.memory_space<vmem>>, %arg2: memref<784x512xbf16, #tpu.memory_space<vmem>>, %arg3: memref<1x512xf32, #tpu.memory_space<vmem>>, %arg4: memref<512x256xbf16, #tpu.memory_space<vmem>>, %arg5: memref<1x256xf32, #tpu.memory_space<vmem>>, %arg6: memref<256x128xbf16, #tpu.memory_space<vmem>>, %arg7: memref<1x128xf32, #tpu.memory_space<vmem>>, %arg8: memref<8x128xf32, #tpu.memory_space<vmem>>) attributes {dimension_semantics = [#tpu.dimension_semantics<parallel>], iteration_bounds = array<i64: 1>, scalar_prefetch = 0 : i64, scratch_operands = 0 : i64, tpu.core_type = #tpu.core_type<tc>, window_params = [{transform_indices = @transform_0, window_bounds = array<i64: 8, 784>}, {pipeline_mode = #tpu.pipeline_mode<synchronous>, transform_indices = @transform_1, window_bounds = array<i64: 784, 512>}, {pipeline_mode = #tpu.pipeline_mode<synchronous>, transform_indices = @transform_2, window_bounds = array<i64: 1, 512>}, {pipeline_mode = #tpu.pipeline_mode<synchronous>, transform_indices = @transform_3, window_bounds = array<i64: 512, 256>}, {pipeline_mode = #tpu.pipeline_mode<synchronous>, transform_indices = @transform_4, window_bounds = array<i64: 1, 256>}, {pipeline_mode = #tpu.pipeline_mode<synchronous>, transform_indices = @transform_5, window_bounds = array<i64: 256, 128>}, {pipeline_mode = #tpu.pipeline_mode<synchronous>, transform_indices = @transform_6, window_bounds = array<i64: 1, 128>}, {transform_indices = @transform_7, window_bounds = array<i64: 8, 128>}]} {
    %c0 = arith.constant 0 : index
    %c0_0 = arith.constant 0 : index
    %0 = vector.load %arg1[%c0, %c0_0] : memref<8x784xbf16, #tpu.memory_space<vmem>>, vector<8x784xbf16>
    %c0_1 = arith.constant 0 : index
    %c0_2 = arith.constant 0 : index
    %1 = vector.load %arg2[%c0_1, %c0_2] : memref<784x512xbf16, #tpu.memory_space<vmem>>, vector<784x512xbf16>
    %cst = arith.constant dense<0.000000e+00> : vector<8x512xf32>
    %2 = tpu.matmul %0, %1, %cst {dimension_numbers = #tpu.dot_dimension_numbers<[1], [0], [0], [1], [0, 0, 1, 1], [], []>} : vector<8x784xbf16>, vector<784x512xbf16>, vector<8x512xf32> -> vector<8x512xf32>
    %c0_3 = arith.constant 0 : index
    %c0_4 = arith.constant 0 : index
    %3 = vector.load %arg3[%c0_3, %c0_4] : memref<1x512xf32, #tpu.memory_space<vmem>>, vector<1x512xf32>
    %4 = vector.broadcast %3 : vector<1x512xf32> to vector<8x512xf32>
    %5 = arith.addf %2, %4 : vector<8x512xf32>
    %cst_5 = arith.constant 0.000000e+00 : f32
    %6 = vector.broadcast %cst_5 : f32 to vector<8x512xf32>
    %7 = arith.maximumf %5, %6 : vector<8x512xf32>
    %8 = arith.truncf %7 : vector<8x512xf32> to vector<8x512xbf16>
    %c0_6 = arith.constant 0 : index
    %c0_7 = arith.constant 0 : index
    %9 = vector.load %arg4[%c0_6, %c0_7] : memref<512x256xbf16, #tpu.memory_space<vmem>>, vector<512x256xbf16>
    %cst_8 = arith.constant dense<0.000000e+00> : vector<8x256xf32>
    %10 = tpu.matmul %8, %9, %cst_8 {dimension_numbers = #tpu.dot_dimension_numbers<[1], [0], [0], [1], [0, 0, 1, 1], [], []>} : vector<8x512xbf16>, vector<512x256xbf16>, vector<8x256xf32> -> vector<8x256xf32>
    %c0_9 = arith.constant 0 : index
    %c0_10 = arith.constant 0 : index
    %11 = vector.load %arg5[%c0_9, %c0_10] : memref<1x256xf32, #tpu.memory_space<vmem>>, vector<1x256xf32>
    %12 = vector.broadcast %11 : vector<1x256xf32> to vector<8x256xf32>
    %13 = arith.addf %10, %12 : vector<8x256xf32>
    %cst_11 = arith.constant 0.000000e+00 : f32
    %14 = vector.broadcast %cst_11 : f32 to vector<8x256xf32>
    %15 = arith.maximumf %13, %14 : vector<8x256xf32>
    %16 = arith.truncf %15 : vector<8x256xf32> to vector<8x256xbf16>
    %c0_12 = arith.constant 0 : index
    %c0_13 = arith.constant 0 : index
    %17 = vector.load %arg6[%c0_12, %c0_13] : memref<256x128xbf16, #tpu.memory_space<vmem>>, vector<256x128xbf16>
    %cst_14 = arith.constant dense<0.000000e+00> : vector<8x128xf32>
    %18 = tpu.matmul %16, %17, %cst_14 {dimension_numbers = #tpu.dot_dimension_numbers<[1], [0], [0], [1], [0, 0, 1, 1], [], []>} : vector<8x256xbf16>, vector<256x128xbf16>, vector<8x128xf32> -> vector<8x128xf32>
    %c0_15 = arith.constant 0 : index
    %c0_16 = arith.constant 0 : index
    %19 = vector.load %arg7[%c0_15, %c0_16] : memref<1x128xf32, #tpu.memory_space<vmem>>, vector<1x128xf32>
    %20 = vector.broadcast %19 : vector<1x128xf32> to vector<8x128xf32>
    %21 = arith.addf %18, %20 : vector<8x128xf32>
    %c0_17 = arith.constant 0 : index
    %c0_18 = arith.constant 0 : index
    %22 = vector.load %arg8[%c0_17, %c0_18] : memref<8x128xf32, #tpu.memory_space<vmem>>, vector<8x128xf32>
    tpu.vector_store %arg8[%c0_17, %c0_18], %21 {strides = array<i32>} : memref<8x128xf32, #tpu.memory_space<vmem>>, vector<8x128xf32>,
    return
  }
  func.func @transform_0(%arg0: i32) -> (i32, i32) {
    %c0_i32 = arith.constant 0 : i32
    %c0_i32_0 = arith.constant 0 : i32
    return %arg0, %c0_i32 : i32, i32
  }
  func.func @transform_1(%arg0: i32) -> (i32, i32) {
    %c0_i32 = arith.constant 0 : i32
    %c0_i32_0 = arith.constant 0 : i32
    %c0_i32_1 = arith.constant 0 : i32
    return %c0_i32, %c0_i32_0 : i32, i32
  }
  func.func @transform_2(%arg0: i32) -> (i32, i32) {
    %c0_i32 = arith.constant 0 : i32
    %c0_i32_0 = arith.constant 0 : i32
    %c0_i32_1 = arith.constant 0 : i32
    return %c0_i32, %c0_i32_0 : i32, i32
  }
  func.func @transform_3(%arg0: i32) -> (i32, i32) {
    %c0_i32 = arith.constant 0 : i32
    %c0_i32_0 = arith.constant 0 : i32
    %c0_i32_1 = arith.constant 0 : i32
    return %c0_i32, %c0_i32_0 : i32, i32
  }
  func.func @transform_4(%arg0: i32) -> (i32, i32) {
    %c0_i32 = arith.constant 0 : i32
    %c0_i32_0 = arith.constant 0 : i32
    %c0_i32_1 = arith.constant 0 : i32
    return %c0_i32, %c0_i32_0 : i32, i32
  }
  func.func @transform_5(%arg0: i32) -> (i32, i32) {
    %c0_i32 = arith.constant 0 : i32
    %c0_i32_0 = arith.constant 0 : i32
    %c0_i32_1 = arith.constant 0 : i32
    return %c0_i32, %c0_i32_0 : i32, i32
  }
  func.func @transform_6(%arg0: i32) -> (i32, i32) {
    %c0_i32 = arith.constant 0 : i32
    %c0_i32_0 = arith.constant 0 : i32
    %c0_i32_1 = arith.constant 0 : i32
    return %c0_i32, %c0_i32_0 : i32, i32
  }
  func.func @transform_7(%arg0: i32) -> (i32, i32) {
    %c0_i32 = arith.constant 0 : i32
    %c0_i32_0 = arith.constant 0 : i32
    return %arg0, %c0_i32 : i32, i32
  }
}

</mosaic_0001>

<llo_original>
// kernel: _forward_impl.1
$region0: #{_forward_impl.1}
  #allocation0 [shape = 'u32[]', space=smem, size = 0x4, offset = 0x4, fixed_abs, tag = 'smem constant byte address 0x4 - core index']
  #allocation1 [shape = 'u32[144,128]{1,0:T(1,128)}', space=vmem, size = 0x12000, scoped, tag = 'internal scratch']
  %s0 = inlined_call_operand.vmem [shape: bf16[8,784], index: 0, kind: input, shape index: {}]
  %s1 = inlined_call_operand.hbm [shape: bf16[784,512], index: 1, kind: input, shape index: {}]
  %s2 = inlined_call_operand.vmem [shape: f32[1,512], index: 2, kind: input, shape index: {}]
  %s3 = inlined_call_operand.hbm [shape: bf16[512,256], index: 3, kind: input, shape index: {}]
  %s4 = inlined_call_operand.vmem [shape: f32[1,256], index: 4, kind: input, shape index: {}]
  %s5 = inlined_call_operand.vmem [shape: bf16[256,128], index: 5, kind: input, shape index: {}]
  %s6 = inlined_call_operand.vmem [shape: f32[1,128], index: 6, kind: input, shape index: {}]
  %s7 = inlined_call_operand.vmem [shape: f32[8,128], index: 7, kind: output, shape index: {}]
  %s8 = sld [smem:[#allocation0]]
  $region46: #{_forward_impl.1} parent=0
    _
  %s10 = ssub.s32 1, %s8
  %s11 = scalar_select 0, %s10, %s8
  $region1: #{_forward_impl.1} parent=0
    #allocation2 [shape = 'u8[802816]{0}', space=vmem, size = 0xc4000, scoped, tag = 'input window, operand 1, single buffered']
    #allocation3 [shape = 's32[1]{0}', space=sflag, size = 0x4, scoped, tag = 'scoped memory for _forward_impl.1']
    #allocation4 [shape = 'u8[262144]{0}', space=vmem, size = 0x40000, scoped, tag = 'input window, operand 3, single buffered']
    #allocation5 [shape = 's32[1]{0}', space=sflag, size = 0x4, scoped, tag = 'scoped memory for _forward_impl.1']
    %12 = vsyncpa [#allocation3], 0
    %13 = vsyncpa [#allocation5], 0
    // Predicated region
    $region2: #{_forward_impl.1} parent=1 // pred_check
      _
    $region3: #{_forward_impl.1} parent=1 // pred_check_branch
      %15 = sbr.rel (0) target = $region5
    $region4: #{_forward_impl.1} parent=1 // pred_region
      _
    $region5: #{_forward_impl.1} parent=1 // pred_fallthru
      _
    // Predicated region
    $region6: #{_forward_impl.1} parent=1 // pred_check
      _
    $region7: #{_forward_impl.1} parent=1 // pred_check_branch
      %17 = sbr.rel (0) target = $region9
    $region8: #{_forward_impl.1} parent=1 // pred_region
      %s19 = ssub.s32 25088, 25088
      %20 = vsyncadd [#allocation3], %s19
      %s21 = sshll.u32 [#allocation2], 4
      %s22 = int_to_ptr.vmem [resolvable:$true] %s21
      %27 = dma.hbm_to_vmem [thread:$0]  %s1, 25088, %s22, [#allocation3], 256, 256, 16
    $region9: #{_forward_impl.1} parent=1 // pred_fallthru
      _
    // Predicated region
    $region10: #{_forward_impl.1} parent=1 // pred_check
      _
    $region11: #{_forward_impl.1} parent=1 // pred_check_branch
      %29 = sbr.rel (0) target = $region13
    $region12: #{_forward_impl.1} parent=1 // pred_region
      _
    $region13: #{_forward_impl.1} parent=1 // pred_fallthru
      _
    // Predicated region
    $region14: #{_forward_impl.1} parent=1 // pred_check
      _
    $region15: #{_forward_impl.1} parent=1 // pred_check_branch
      %31 = sbr.rel (0) target = $region17
    $region16: #{_forward_impl.1} parent=1 // pred_region
      %s33 = ssub.s32 8192, 8192
      %34 = vsyncadd [#allocation5], %s33
      %s35 = sshll.u32 [#allocation4], 4
      %s36 = int_to_ptr.vmem [resolvable:$true] %s35
      %41 = dma.hbm_to_vmem [thread:$0]  %s3, 8192, %s36, [#allocation5], 128, 128, 8
    $region17: #{_forward_impl.1} parent=1 // pred_fallthru
      _
    // Predicated region
    $region18: #{_forward_impl.1} parent=1 // pred_check
      _
    $region19: #{_forward_impl.1} parent=1 // pred_check_branch
      %43 = sbr.rel (0) target = $region21
    $region20: #{_forward_impl.1} parent=1 // pred_region
      _
    $region21: #{_forward_impl.1} parent=1 // pred_fallthru
      _
    // Predicated region
    $region22: #{_forward_impl.1} parent=1 // pred_check
      _
    $region23: #{_forward_impl.1} parent=1 // pred_check_branch
      %45 = sbr.rel (0) target = $region25
    $region24: #{_forward_impl.1} parent=1 // pred_region
      _
    $region25: #{_forward_impl.1} parent=1 // pred_fallthru
      _
    // Predicated region
    $region26: #{_forward_impl.1} parent=1 // pred_check
      _
    $region27: #{_forward_impl.1} parent=1 // pred_check_branch
      %47 = sbr.rel (0) target = $region29
    $region28: #{_forward_impl.1} parent=1 // pred_region
      _
    $region29: #{_forward_impl.1} parent=1 // pred_fallthru
      _
    // Predicated region
    $region30: #{_forward_impl.1} parent=1 // pred_check
      _
    $region31: #{_forward_impl.1} parent=1 // pred_check_branch
      %49 = sbr.rel (0) target = $region33
    $region32: #{_forward_impl.1} parent=1 // pred_region
      %50 = dma.done [#allocation3], 25088
    $region33: #{_forward_impl.1} parent=1 // pred_fallthru
      _
    // Predicated region
    $region34: #{_forward_impl.1} parent=1 // pred_check
      _
    $region35: #{_forward_impl.1} parent=1 // pred_check_branch
      %52 = sbr.rel (0) target = $region37
    $region36: #{_forward_impl.1} parent=1 // pred_region
      %53 = dma.done [#allocation5], 8192
    $region37: #{_forward_impl.1} parent=1 // pred_fallthru
      _
    %v55 = vld [vmem:[%s0] sm:$0xff]
    %v56 = vld [vmem:[%s0 + $0x8] sm:$0xff]
    %v57 = vld [vmem:[%s0 + $0x10] sm:$0xff]
    %v58 = vld [vmem:[%s0 + $0x18] sm:$0xf]
    %v59 = vld [vmem:[#allocation2] sm:$0xff]
    %v60 = vld [vmem:[#allocation2 + $0x8] sm:$0xff]
    %v61 = vld [vmem:[#allocation2 + $0x10] sm:$0xff]
    %v62 = vld [vmem:[#allocation2 + $0x18] sm:$0xff]
    %v63 = vld [vmem:[#allocation2 + $0x20] sm:$0xff]
    %v64 = vld [vmem:[#allocation2 + $0x28] sm:$0xff]
    %v65 = vld [vmem:[#allocation2 + $0x30] sm:$0xff]
    %v66 = vld [vmem:[#allocation2 + $0x38] sm:$0xff]
    %v67 = vld [vmem:[#allocation2 + $0x40] sm:$0xff]
    %v68 = vld [vmem:[#allocation2 + $0x48] sm:$0xff]
    %v69 = vld [vmem:[#allocation2 + $0x50] sm:$0xff]
    %v70 = vld [vmem:[#allocation2 + $0x58] sm:$0xff]
    %v71 = vld [vmem:[#allocation2 + $0x60] sm:$0xff]
    %v72 = vld [vmem:[#allocation2 + $0x68] sm:$0xff]
    %v73 = vld [vmem:[#allocation2 + $0x70] sm:$0xff]
    %v74 = vld [vmem:[#allocation2 + $0x78] sm:$0xff]
    %v75 = vld [vmem:[#allocation2 + $0x80] sm:$0xff]
    %v76 = vld [vmem:[#allocation2 + $0x88] sm:$0xff]
    %v77 = vld [vmem:[#allocation2 + $0x90] sm:$0xff]
    %v78 = vld [vmem:[#allocation2 + $0x98] sm:$0xff]
    %v79 = vld [vmem:[#allocation2 + $0xa0] sm:$0xff]
    %v80 = vld [vmem:[#allocation2 + $0xa8] sm:$0xff]
    %v81 = vld [vmem:[#allocation2 + $0xb0] sm:$0xff]
    %v82 = vld [vmem:[#allocation2 + $0xb8] sm:$0xff]
    %v83 = vld [vmem:[#allocation2 + $0xc0] sm:$0xff]
    %v84 = vld [vmem:[#allocation2 + $0xc8] sm:$0xff]
    %v85 = vld [vmem:[#allocation2 + $0xd0] sm:$0xff]
    %v86 = vld [vmem:[#allocation2 + $0xd8] sm:$0xff]
    %v87 = vld [vmem:[#allocation2 + $0xe0] sm:$0xff]
    %v88 = vld [vmem:[#allocation2 + $0xe8] sm:$0xff]
    %v89 = vld [vmem:[#allocation2 + $0xf0] sm:$0xff]
    %v90 = vld [vmem:[#allocation2 + $0xf8] sm:$0xff]
    %v91 = vld [vmem:[#allocation2 + $0x100] sm:$0xff]
    %v92 = vld [vmem:[#allocation2 + $0x108] sm:$0xff]
    %v93 = vld [vmem:[#allocation2 + $0x110] sm:$0xff]
    %v94 = vld [vmem:[#allocation2 + $0x118] sm:$0xff]
    %v95 = vld [vmem:[#allocation2 + $0x120] sm:$0xff]
    %v96 = vld [vmem:[#allocation2 + $0x128] sm:$0xff]
    %v97 = vld [vmem:[#allocation2 + $0x130] sm:$0xff]
    %v98 = vld [vmem:[#allocation2 + $0x138] sm:$0xff]
    %v99 = vld [vmem:[#allocation2 + $0x140] sm:$0xff]
    %v100 = vld [vmem:[#allocation2 + $0x148] sm:$0xff]
    %v101 = vld [vmem:[#allocation2 + $0x150] sm:$0xff]
    %v102 = vld [vmem:[#allocation2 + $0x158] sm:$0xff]
    %v103 = vld [vmem:[#allocation2 + $0x160] sm:$0xff]
    %v104 = vld [vmem:[#allocation2 + $0x168] sm:$0xff]
    %v105 = vld [vmem:[#allocation2 + $0x170] sm:$0xff]
    %v106 = vld [vmem:[#allocation2 + $0x178] sm:$0xff]
    %v107 = vld [vmem:[#allocation2 + $0x180] sm:$0xff]
    %v108 = vld [vmem:[#allocation2 + $0x188] sm:$0xff]
    %v109 = vld [vmem:[#allocation2 + $0x190] sm:$0xff]
    %v110 = vld [vmem:[#allocation2 + $0x198] sm:$0xff]
    %v111 = vld [vmem:[#allocation2 + $0x1a0] sm:$0xff]
    %v112 = vld [vmem:[#allocation2 + $0x1a8] sm:$0xff]
    %v113 = vld [vmem:[#allocation2 + $0x1b0] sm:$0xff]
    %v114 = vld [vmem:[#allocation2 + $0x1b8] sm:$0xff]
    %v115 = vld [vmem:[#allocation2 + $0x1c0] sm:$0xff]
    %v116 = vld [vmem:[#allocation2 + $0x1c8] sm:$0xff]
    %v117 = vld [vmem:[#allocation2 + $0x1d0] sm:$0xff]
    %v118 = vld [vmem:[#allocation2 + $0x1d8] sm:$0xff]
    %v119 = vld [vmem:[#allocation2 + $0x1e0] sm:$0xff]
    %v120 = vld [vmem:[#allocation2 + $0x1e8] sm:$0xff]
    %v121 = vld [vmem:[#allocation2 + $0x1f0] sm:$0xff]
    %v122 = vld [vmem:[#allocation2 + $0x1f8] sm:$0xff]
    %v123 = vld [vmem:[#allocation2 + $0x200] sm:$0xff]
    %v124 = vld [vmem:[#allocation2 + $0x208] sm:$0xff]
    %v125 = vld [vmem:[#allocation2 + $0x210] sm:$0xff]
    %v126 = vld [vmem:[#allocation2 + $0x218] sm:$0xff]
    %v127 = vld [vmem:[#allocation2 + $0x220] sm:$0xff]
    %v128 = vld [vmem:[#allocation2 + $0x228] sm:$0xff]
    %v129 = vld [vmem:[#allocation2 + $0x230] sm:$0xff]
    %v130 = vld [vmem:[#allocation2 + $0x238] sm:$0xff]
    %v131 = vld [vmem:[#allocation2 + $0x240] sm:$0xff]
    %v132 = vld [vmem:[#allocation2 + $0x248] sm:$0xff]
    %v133 = vld [vmem:[#allocation2 + $0x250] sm:$0xff]
    %v134 = vld [vmem:[#allocation2 + $0x258] sm:$0xff]
    %v135 = vld [vmem:[#allocation2 + $0x260] sm:$0xff]
    %v136 = vld [vmem:[#allocation2 + $0x268] sm:$0xff]
    %v137 = vld [vmem:[#allocation2 + $0x270] sm:$0xff]
    %v138 = vld [vmem:[#allocation2 + $0x278] sm:$0xff]
    %v139 = vld [vmem:[#allocation2 + $0x280] sm:$0xff]
    %v140 = vld [vmem:[#allocation2 + $0x288] sm:$0xff]
    %v141 = vld [vmem:[#allocation2 + $0x290] sm:$0xff]
    %v142 = vld [vmem:[#allocation2 + $0x298] sm:$0xff]
    %v143 = vld [vmem:[#allocation2 + $0x2a0] sm:$0xff]
    %v144 = vld [vmem:[#allocation2 + $0x2a8] sm:$0xff]
    %v145 = vld [vmem:[#allocation2 + $0x2b0] sm:$0xff]
    %v146 = vld [vmem:[#allocation2 + $0x2b8] sm:$0xff]
    %v147 = vld [vmem:[#allocation2 + $0x2c0] sm:$0xff]
    %v148 = vld [vmem:[#allocation2 + $0x2c8] sm:$0xff]
    %v149 = vld [vmem:[#allocation2 + $0x2d0] sm:$0xff]
    %v150 = vld [vmem:[#allocation2 + $0x2d8] sm:$0xff]
    %v151 = vld [vmem:[#allocation2 + $0x2e0] sm:$0xff]
    %v152 = vld [vmem:[#allocation2 + $0x2e8] sm:$0xff]
    %v153 = vld [vmem:[#allocation2 + $0x2f0] sm:$0xff]
    %v154 = vld [vmem:[#allocation2 + $0x2f8] sm:$0xff]
    %v155 = vld [vmem:[#allocation2 + $0x300] sm:$0xff]
    %v156 = vld [vmem:[#allocation2 + $0x308] sm:$0xff]
    %v157 = vld [vmem:[#allocation2 + $0x310] sm:$0xff]
    %v158 = vld [vmem:[#allocation2 + $0x318] sm:$0xff]
    %v159 = vld [vmem:[#allocation2 + $0x320] sm:$0xff]
    %v160 = vld [vmem:[#allocation2 + $0x328] sm:$0xff]
    %v161 = vld [vmem:[#allocation2 + $0x330] sm:$0xff]
    %v162 = vld [vmem:[#allocation2 + $0x338] sm:$0xff]
    %v163 = vld [vmem:[#allocation2 + $0x340] sm:$0xff]
    %v164 = vld [vmem:[#allocation2 + $0x348] sm:$0xff]
    %v165 = vld [vmem:[#allocation2 + $0x350] sm:$0xff]
    %v166 = vld [vmem:[#allocation2 + $0x358] sm:$0xff]
    %v167 = vld [vmem:[#allocation2 + $0x360] sm:$0xff]
    %v168 = vld [vmem:[#allocation2 + $0x368] sm:$0xff]
    %v169 = vld [vmem:[#allocation2 + $0x370] sm:$0xff]
    %v170 = vld [vmem:[#allocation2 + $0x378] sm:$0xff]
    %v171 = vld [vmem:[#allocation2 + $0x380] sm:$0xff]
    %v172 = vld [vmem:[#allocation2 + $0x388] sm:$0xff]
    %v173 = vld [vmem:[#allocation2 + $0x390] sm:$0xff]
    %v174 = vld [vmem:[#allocation2 + $0x398] sm:$0xff]
    %v175 = vld [vmem:[#allocation2 + $0x3a0] sm:$0xff]
    %v176 = vld [vmem:[#allocation2 + $0x3a8] sm:$0xff]
    %v177 = vld [vmem:[#allocation2 + $0x3b0] sm:$0xff]
    %v178 = vld [vmem:[#allocation2 + $0x3b8] sm:$0xff]
    %v179 = vld [vmem:[#allocation2 + $0x3c0] sm:$0xff]
    %v180 = vld [vmem:[#allocation2 + $0x3c8] sm:$0xff]
    %v181 = vld [vmem:[#allocation2 + $0x3d0] sm:$0xff]
    %v182 = vld [vmem:[#allocation2 + $0x3d8] sm:$0xff]
    %v183 = vld [vmem:[#allocation2 + $0x3e0] sm:$0xff]
    %v184 = vld [vmem:[#allocation2 + $0x3e8] sm:$0xff]
    %v185 = vld [vmem:[#allocation2 + $0x3f0] sm:$0xff]
    %v186 = vld [vmem:[#allocation2 + $0x3f8] sm:$0xff]
    %v187 = vld [vmem:[#allocation2 + $0x400] sm:$0xff]
    %v188 = vld [vmem:[#allocation2 + $0x408] sm:$0xff]
    %v189 = vld [vmem:[#allocation2 + $0x410] sm:$0xff]
    %v190 = vld [vmem:[#allocation2 + $0x418] sm:$0xff]
    %v191 = vld [vmem:[#allocation2 + $0x420] sm:$0xff]
    %v192 = vld [vmem:[#allocation2 + $0x428] sm:$0xff]
    %v193 = vld [vmem:[#allocation2 + $0x430] sm:$0xff]
    %v194 = vld [vmem:[#allocation2 + $0x438] sm:$0xff]
    %v195 = vld [vmem:[#allocation2 + $0x440] sm:$0xff]
    %v196 = vld [vmem:[#allocation2 + $0x448] sm:$0xff]
    %v197 = vld [vmem:[#allocation2 + $0x450] sm:$0xff]
    %v198 = vld [vmem:[#allocation2 + $0x458] sm:$0xff]
    %v199 = vld [vmem:[#allocation2 + $0x460] sm:$0xff]
    %v200 = vld [vmem:[#allocation2 + $0x468] sm:$0xff]
    %v201 = vld [vmem:[#allocation2 + $0x470] sm:$0xff]
    %v202 = vld [vmem:[#allocation2 + $0x478] sm:$0xff]
    %v203 = vld [vmem:[#allocation2 + $0x480] sm:$0xff]
    %v204 = vld [vmem:[#allocation2 + $0x488] sm:$0xff]
    %v205 = vld [vmem:[#allocation2 + $0x490] sm:$0xff]
    %v206 = vld [vmem:[#allocation2 + $0x498] sm:$0xff]
    %v207 = vld [vmem:[#allocation2 + $0x4a0] sm:$0xff]
    %v208 = vld [vmem:[#allocation2 + $0x4a8] sm:$0xff]
    %v209 = vld [vmem:[#allocation2 + $0x4b0] sm:$0xff]
    %v210 = vld [vmem:[#allocation2 + $0x4b8] sm:$0xff]
    %v211 = vld [vmem:[#allocation2 + $0x4c0] sm:$0xff]
    %v212 = vld [vmem:[#allocation2 + $0x4c8] sm:$0xff]
    %v213 = vld [vmem:[#allocation2 + $0x4d0] sm:$0xff]
    %v214 = vld [vmem:[#allocation2 + $0x4d8] sm:$0xff]
    %v215 = vld [vmem:[#allocation2 + $0x4e0] sm:$0xff]
    %v216 = vld [vmem:[#allocation2 + $0x4e8] sm:$0xff]
    %v217 = vld [vmem:[#allocation2 + $0x4f0] sm:$0xff]
    %v218 = vld [vmem:[#allocation2 + $0x4f8] sm:$0xff]
    %v219 = vld [vmem:[#allocation2 + $0x500] sm:$0xff]
    %v220 = vld [vmem:[#allocation2 + $0x508] sm:$0xff]
    %v221 = vld [vmem:[#allocation2 + $0x510] sm:$0xff]
    %v222 = vld [vmem:[#allocation2 + $0x518] sm:$0xff]
    %v223 = vld [vmem:[#allocation2 + $0x520] sm:$0xff]
    %v224 = vld [vmem:[#allocation2 + $0x528] sm:$0xff]
    %v225 = vld [vmem:[#allocation2 + $0x530] sm:$0xff]
    %v226 = vld [vmem:[#allocation2 + $0x538] sm:$0xff]
    %v227 = vld [vmem:[#allocation2 + $0x540] sm:$0xff]
    %v228 = vld [vmem:[#allocation2 + $0x548] sm:$0xff]
    %v229 = vld [vmem:[#allocation2 + $0x550] sm:$0xff]
    %v230 = vld [vmem:[#allocation2 + $0x558] sm:$0xff]
    %v231 = vld [vmem:[#allocation2 + $0x560] sm:$0xff]
    %v232 = vld [vmem:[#allocation2 + $0x568] sm:$0xff]
    %v233 = vld [vmem:[#allocation2 + $0x570] sm:$0xff]
    %v234 = vld [vmem:[#allocation2 + $0x578] sm:$0xff]
    %v235 = vld [vmem:[#allocation2 + $0x580] sm:$0xff]
    %v236 = vld [vmem:[#allocation2 + $0x588] sm:$0xff]
    %v237 = vld [vmem:[#allocation2 + $0x590] sm:$0xff]
    %v238 = vld [vmem:[#allocation2 + $0x598] sm:$0xff]
    %v239 = vld [vmem:[#allocation2 + $0x5a0] sm:$0xff]
    %v240 = vld [vmem:[#allocation2 + $0x5a8] sm:$0xff]
    %v241 = vld [vmem:[#allocation2 + $0x5b0] sm:$0xff]
    %v242 = vld [vmem:[#allocation2 + $0x5b8] sm:$0xff]
    %v243 = vld [vmem:[#allocation2 + $0x5c0] sm:$0xff]
    %v244 = vld [vmem:[#allocation2 + $0x5c8] sm:$0xff]
    %v245 = vld [vmem:[#allocation2 + $0x5d0] sm:$0xff]
    %v246 = vld [vmem:[#allocation2 + $0x5d8] sm:$0xff]
    %v247 = vld [vmem:[#allocation2 + $0x5e0] sm:$0xff]
    %v248 = vld [vmem:[#allocation2 + $0x5e8] sm:$0xff]
    %v249 = vld [vmem:[#allocation2 + $0x5f0] sm:$0xff]
    %v250 = vld [vmem:[#allocation2 + $0x5f8] sm:$0xff]
    %v251 = vld [vmem:[#allocation2 + $0x600] sm:$0xff]
    %v252 = vld [vmem:[#allocation2 + $0x608] sm:$0xff]
    %v253 = vld [vmem:[#allocation2 + $0x610] sm:$0xff]
    %v254 = vld [vmem:[#allocation2 + $0x618] sm:$0xff]
    %v255 = vld [vmem:[%s2] sm:$0xf]
    %v257 = vlaneseq
    %v258 = vshrl.u32 %v257, 7
    %v259 = vsub.s32 0, %v258
    %v260 = vrot.slane %v255, %v259
    %v261 = vlaneseq
    %v262 = vshrl.u32 %v261, 7
    %v263 = vsub.s32 1, %v262
    %v264 = vrot.slane %v255, %v263
    %v265 = vlaneseq
    %v266 = vshrl.u32 %v265, 7
    %v267 = vsub.s32 2, %v266
    %v268 = vrot.slane %v255, %v267
    %v269 = vlaneseq
    %v270 = vshrl.u32 %v269, 7
    %v271 = vsub.s32 3, %v270
    %v272 = vrot.slane %v255, %v271
    %v281 = vunpack.c.l.b16 %v55
    %v282 = vunpack.c.h.b16 %v55
    %v283 = vunpack.c.l.b16 %v56
    %v284 = vunpack.c.h.b16 %v56
    %v285 = vunpack.c.l.b16 %v57
    %v286 = vunpack.c.h.b16 %v57
    %v287 = vunpack.c.l.b16 %v58
    %v288 = vpack.c.b16 %v281, %v281
    %v289 = vpack.c.b16 %v282, %v282
    %v290 = vpack.c.b16 %v283, %v283
    %v291 = vpack.c.b16 %v284, %v284
    %v292 = vpack.c.b16 %v285, %v285
    %v293 = vpack.c.b16 %v286, %v286
    %v294 = vpack.c.b16 %v287, %v287
    %v497 = vunpack.c.l.b16 %v59
    %v498 = vunpack.c.h.b16 %v59
    %v499 = vunpack.c.l.b16 %v60
    %v500 = vunpack.c.h.b16 %v60
    %v501 = vunpack.c.l.b16 %v61
    %v502 = vunpack.c.h.b16 %v61
    %v503 = vunpack.c.l.b16 %v62
    %v504 = vunpack.c.h.b16 %v62
    %v505 = vunpack.c.l.b16 %v63
    %v506 = vunpack.c.h.b16 %v63
    %v507 = vunpack.c.l.b16 %v64
    %v508 = vunpack.c.h.b16 %v64
    %v509 = vunpack.c.l.b16 %v65
    %v510 = vunpack.c.h.b16 %v65
    %v511 = vunpack.c.l.b16 %v66
    %v512 = vunpack.c.h.b16 %v66
    %v513 = vunpack.c.l.b16 %v67
    %v514 = vunpack.c.h.b16 %v67
    %v515 = vunpack.c.l.b16 %v68
    %v516 = vunpack.c.h.b16 %v68
    %v517 = vunpack.c.l.b16 %v69
    %v518 = vunpack.c.h.b16 %v69
    %v519 = vunpack.c.l.b16 %v70
    %v520 = vunpack.c.h.b16 %v70
    %v521 = vunpack.c.l.b16 %v71
    %v522 = vunpack.c.h.b16 %v71
    %v523 = vunpack.c.l.b16 %v72
    %v524 = vunpack.c.h.b16 %v72
    %v525 = vunpack.c.l.b16 %v73
    %v526 = vunpack.c.h.b16 %v73
    %v527 = vunpack.c.l.b16 %v74
    %v528 = vunpack.c.h.b16 %v74
    %v529 = vunpack.c.l.b16 %v75
    %v530 = vunpack.c.h.b16 %v75
    %v531 = vunpack.c.l.b16 %v76
    %v532 = vunpack.c.h.b16 %v76
    %v533 = vunpack.c.l.b16 %v77
    %v534 = vunpack.c.h.b16 %v77
    %v535 = vunpack.c.l.b16 %v78
    %v536 = vunpack.c.h.b16 %v78
    %v537 = vunpack.c.l.b16 %v79
    %v538 = vunpack.c.h.b16 %v79
    %v539 = vunpack.c.l.b16 %v80
    %v540 = vunpack.c.h.b16 %v80
    %v541 = vunpack.c.l.b16 %v81
    %v542 = vunpack.c.h.b16 %v81
    %v543 = vunpack.c.l.b16 %v82
    %v544 = vunpack.c.h.b16 %v82
    %v545 = vunpack.c.l.b16 %v83
    %v546 = vunpack.c.h.b16 %v83
    %v547 = vunpack.c.l.b16 %v84
    %v548 = vunpack.c.h.b16 %v84
    %v549 = vunpack.c.l.b16 %v85
    %v550 = vunpack.c.h.b16 %v85
    %v551 = vunpack.c.l.b16 %v86
    %v552 = vunpack.c.h.b16 %v86
    %v553 = vunpack.c.l.b16 %v87
    %v554 = vunpack.c.h.b16 %v87
    %v555 = vunpack.c.l.b16 %v88
    %v556 = vunpack.c.h.b16 %v88
    %v557 = vunpack.c.l.b16 %v89
    %v558 = vunpack.c.h.b16 %v89
    %v559 = vunpack.c.l.b16 %v90
    %v560 = vunpack.c.h.b16 %v90
    %v561 = vunpack.c.l.b16 %v91
    %v562 = vunpack.c.h.b16 %v91
    %v563 = vunpack.c.l.b16 %v92
    %v564 = vunpack.c.h.b16 %v92
    %v565 = vunpack.c.l.b16 %v93
    %v566 = vunpack.c.h.b16 %v93
    %v567 = vunpack.c.l.b16 %v94
    %v568 = vunpack.c.h.b16 %v94
    %v569 = vunpack.c.l.b16 %v95
    %v570 = vunpack.c.h.b16 %v95
    %v571 = vunpack.c.l.b16 %v96
    %v572 = vunpack.c.h.b16 %v96
    %v573 = vunpack.c.l.b16 %v97
    %v574 = vunpack.c.h.b16 %v97
    %v575 = vunpack.c.l.b16 %v98
    %v576 = vunpack.c.h.b16 %v98
    %v577 = vunpack.c.l.b16 %v99
    %v578 = vunpack.c.h.b16 %v99
    %v579 = vunpack.c.l.b16 %v100
    %v580 = vunpack.c.h.b16 %v100
    %v581 = vunpack.c.l.b16 %v101
    %v582 = vunpack.c.h.b16 %v101
    %v583 = vunpack.c.l.b16 %v102
    %v584 = vunpack.c.h.b16 %v102
    %v585 = vunpack.c.l.b16 %v103
    %v586 = vunpack.c.h.b16 %v103
    %v587 = vunpack.c.l.b16 %v104
    %v588 = vunpack.c.h.b16 %v104
    %v589 = vunpack.c.l.b16 %v105
    %v590 = vunpack.c.h.b16 %v105
    %v591 = vunpack.c.l.b16 %v106
    %v592 = vunpack.c.h.b16 %v106
    %v593 = vunpack.c.l.b16 %v107
    %v594 = vunpack.c.h.b16 %v107
    %v595 = vunpack.c.l.b16 %v108
    %v596 = vunpack.c.h.b16 %v108
    %v597 = vunpack.c.l.b16 %v109
    %v598 = vunpack.c.h.b16 %v109
    %v599 = vunpack.c.l.b16 %v110
    %v600 = vunpack.c.h.b16 %v110
    %v601 = vunpack.c.l.b16 %v111
    %v602 = vunpack.c.h.b16 %v111
    %v603 = vunpack.c.l.b16 %v112
    %v604 = vunpack.c.h.b16 %v112
    %v605 = vunpack.c.l.b16 %v113
    %v606 = vunpack.c.h.b16 %v113
    %v607 = vunpack.c.l.b16 %v114
    %v608 = vunpack.c.h.b16 %v114
    %v609 = vunpack.c.l.b16 %v115
    %v610 = vunpack.c.h.b16 %v115
    %v611 = vunpack.c.l.b16 %v116
    %v612 = vunpack.c.h.b16 %v116
    %v613 = vunpack.c.l.b16 %v117
    %v614 = vunpack.c.h.b16 %v117
    %v615 = vunpack.c.l.b16 %v118
    %v616 = vunpack.c.h.b16 %v118
    %v617 = vunpack.c.l.b16 %v119
    %v618 = vunpack.c.h.b16 %v119
    %v619 = vunpack.c.l.b16 %v120
    %v620 = vunpack.c.h.b16 %v120
    %v621 = vunpack.c.l.b16 %v121
    %v622 = vunpack.c.h.b16 %v121
    %v623 = vunpack.c.l.b16 %v122
    %v624 = vunpack.c.h.b16 %v122
    %v625 = vunpack.c.l.b16 %v123
    %v626 = vunpack.c.h.b16 %v123
    %v627 = vunpack.c.l.b16 %v124
    %v628 = vunpack.c.h.b16 %v124
    %v629 = vunpack.c.l.b16 %v125
    %v630 = vunpack.c.h.b16 %v125
    %v631 = vunpack.c.l.b16 %v126
    %v632 = vunpack.c.h.b16 %v126
    %v633 = vunpack.c.l.b16 %v127
    %v634 = vunpack.c.h.b16 %v127
    %v635 = vunpack.c.l.b16 %v128
    %v636 = vunpack.c.h.b16 %v128
    %v637 = vunpack.c.l.b16 %v129
    %v638 = vunpack.c.h.b16 %v129
    %v639 = vunpack.c.l.b16 %v130
    %v640 = vunpack.c.h.b16 %v130
    %v641 = vunpack.c.l.b16 %v131
    %v642 = vunpack.c.h.b16 %v131
    %v643 = vunpack.c.l.b16 %v132
    %v644 = vunpack.c.h.b16 %v132
    %v645 = vunpack.c.l.b16 %v133
    %v646 = vunpack.c.h.b16 %v133
    %v647 = vunpack.c.l.b16 %v134
    %v648 = vunpack.c.h.b16 %v134
    %v649 = vunpack.c.l.b16 %v135
    %v650 = vunpack.c.h.b16 %v135
    %v651 = vunpack.c.l.b16 %v136
    %v652 = vunpack.c.h.b16 %v136
    %v653 = vunpack.c.l.b16 %v137
    %v654 = vunpack.c.h.b16 %v137
    %v655 = vunpack.c.l.b16 %v138
    %v656 = vunpack.c.h.b16 %v138
    %v657 = vunpack.c.l.b16 %v139
    %v658 = vunpack.c.h.b16 %v139
    %v659 = vunpack.c.l.b16 %v140
    %v660 = vunpack.c.h.b16 %v140
    %v661 = vunpack.c.l.b16 %v141
    %v662 = vunpack.c.h.b16 %v141
    %v663 = vunpack.c.l.b16 %v142
    %v664 = vunpack.c.h.b16 %v142
    %v665 = vunpack.c.l.b16 %v143
    %v666 = vunpack.c.h.b16 %v143
    %v667 = vunpack.c.l.b16 %v144
    %v668 = vunpack.c.h.b16 %v144
    %v669 = vunpack.c.l.b16 %v145
    %v670 = vunpack.c.h.b16 %v145
    %v671 = vunpack.c.l.b16 %v146
    %v672 = vunpack.c.h.b16 %v146
    %v673 = vunpack.c.l.b16 %v147
    %v674 = vunpack.c.h.b16 %v147
    %v675 = vunpack.c.l.b16 %v148
    %v676 = vunpack.c.h.b16 %v148
    %v677 = vunpack.c.l.b16 %v149
    %v678 = vunpack.c.h.b16 %v149
    %v679 = vunpack.c.l.b16 %v150
    %v680 = vunpack.c.h.b16 %v150
    %v681 = vunpack.c.l.b16 %v151
    %v682 = vunpack.c.h.b16 %v151
    %v683 = vunpack.c.l.b16 %v152
    %v684 = vunpack.c.h.b16 %v152
    %v685 = vunpack.c.l.b16 %v153
    %v686 = vunpack.c.h.b16 %v153
    %v687 = vunpack.c.l.b16 %v154
    %v688 = vunpack.c.h.b16 %v154
    %v689 = vunpack.c.l.b16 %v155
    %v690 = vunpack.c.h.b16 %v155
    %v691 = vunpack.c.l.b16 %v156
    %v692 = vunpack.c.h.b16 %v156
    %v693 = vunpack.c.l.b16 %v157
    %v694 = vunpack.c.h.b16 %v157
    %v695 = vunpack.c.l.b16 %v158
    %v696 = vunpack.c.h.b16 %v158
    %v697 = vunpack.c.l.b16 %v159
    %v698 = vunpack.c.h.b16 %v159
    %v699 = vunpack.c.l.b16 %v160
    %v700 = vunpack.c.h.b16 %v160
    %v701 = vunpack.c.l.b16 %v161
    %v702 = vunpack.c.h.b16 %v161
    %v703 = vunpack.c.l.b16 %v162
    %v704 = vunpack.c.h.b16 %v162
    %v705 = vunpack.c.l.b16 %v163
    %v706 = vunpack.c.h.b16 %v163
    %v707 = vunpack.c.l.b16 %v164
    %v708 = vunpack.c.h.b16 %v164
    %v709 = vunpack.c.l.b16 %v165
    %v710 = vunpack.c.h.b16 %v165
    %v711 = vunpack.c.l.b16 %v166
    %v712 = vunpack.c.h.b16 %v166
    %v713 = vunpack.c.l.b16 %v167
    %v714 = vunpack.c.h.b16 %v167
    %v715 = vunpack.c.l.b16 %v168
    %v716 = vunpack.c.h.b16 %v168
    %v717 = vunpack.c.l.b16 %v169
    %v718 = vunpack.c.h.b16 %v169
    %v719 = vunpack.c.l.b16 %v170
    %v720 = vunpack.c.h.b16 %v170
    %v721 = vunpack.c.l.b16 %v171
    %v722 = vunpack.c.h.b16 %v171
    %v723 = vunpack.c.l.b16 %v172
    %v724 = vunpack.c.h.b16 %v172
    %v725 = vunpack.c.l.b16 %v173
    %v726 = vunpack.c.h.b16 %v173
    %v727 = vunpack.c.l.b16 %v174
    %v728 = vunpack.c.h.b16 %v174
    %v729 = vunpack.c.l.b16 %v175
    %v730 = vunpack.c.h.b16 %v175
    %v731 = vunpack.c.l.b16 %v176
    %v732 = vunpack.c.h.b16 %v176
    %v733 = vunpack.c.l.b16 %v177
    %v734 = vunpack.c.h.b16 %v177
    %v735 = vunpack.c.l.b16 %v178
    %v736 = vunpack.c.h.b16 %v178
    %v737 = vunpack.c.l.b16 %v179
    %v738 = vunpack.c.h.b16 %v179
    %v739 = vunpack.c.l.b16 %v180
    %v740 = vunpack.c.h.b16 %v180
    %v741 = vunpack.c.l.b16 %v181
    %v742 = vunpack.c.h.b16 %v181
    %v743 = vunpack.c.l.b16 %v182
    %v744 = vunpack.c.h.b16 %v182
    %v745 = vunpack.c.l.b16 %v183
    %v746 = vunpack.c.h.b16 %v183
    %v747 = vunpack.c.l.b16 %v184
    %v748 = vunpack.c.h.b16 %v184
    %v749 = vunpack.c.l.b16 %v185
    %v750 = vunpack.c.h.b16 %v185
    %v751 = vunpack.c.l.b16 %v186
    %v752 = vunpack.c.h.b16 %v186
    %v753 = vunpack.c.l.b16 %v187
    %v754 = vunpack.c.h.b16 %v187
    %v755 = vunpack.c.l.b16 %v188
    %v756 = vunpack.c.h.b16 %v188
    %v757 = vunpack.c.l.b16 %v189
    %v758 = vunpack.c.h.b16 %v189
    %v759 = vunpack.c.l.b16 %v190
    %v760 = vunpack.c.h.b16 %v190
    %v761 = vunpack.c.l.b16 %v191
    %v762 = vunpack.c.h.b16 %v191
    %v763 = vunpack.c.l.b16 %v192
    %v764 = vunpack.c.h.b16 %v192
    %v765 = vunpack.c.l.b16 %v193
    %v766 = vunpack.c.h.b16 %v193
    %v767 = vunpack.c.l.b16 %v194
    %v768 = vunpack.c.h.b16 %v194
    %v769 = vunpack.c.l.b16 %v195
    %v770 = vunpack.c.h.b16 %v195
    %v771 = vunpack.c.l.b16 %v196
    %v772 = vunpack.c.h.b16 %v196
    %v773 = vunpack.c.l.b16 %v197
    %v774 = vunpack.c.h.b16 %v197
    %v775 = vunpack.c.l.b16 %v198
    %v776 = vunpack.c.h.b16 %v198
    %v777 = vunpack.c.l.b16 %v199
    %v778 = vunpack.c.h.b16 %v199
    %v779 = vunpack.c.l.b16 %v200
    %v780 = vunpack.c.h.b16 %v200
    %v781 = vunpack.c.l.b16 %v201
    %v782 = vunpack.c.h.b16 %v201
    %v783 = vunpack.c.l.b16 %v202
    %v784 = vunpack.c.h.b16 %v202
    %v785 = vunpack.c.l.b16 %v203
    %v786 = vunpack.c.h.b16 %v203
    %v787 = vunpack.c.l.b16 %v204
    %v788 = vunpack.c.h.b16 %v204
    %v789 = vunpack.c.l.b16 %v205
    %v790 = vunpack.c.h.b16 %v205
    %v791 = vunpack.c.l.b16 %v206
    %v792 = vunpack.c.h.b16 %v206
    %v793 = vunpack.c.l.b16 %v207
    %v794 = vunpack.c.h.b16 %v207
    %v795 = vunpack.c.l.b16 %v208
    %v796 = vunpack.c.h.b16 %v208
    %v797 = vunpack.c.l.b16 %v209
    %v798 = vunpack.c.h.b16 %v209
    %v799 = vunpack.c.l.b16 %v210
    %v800 = vunpack.c.h.b16 %v210
    %v801 = vunpack.c.l.b16 %v211
    %v802 = vunpack.c.h.b16 %v211
    %v803 = vunpack.c.l.b16 %v212
    %v804 = vunpack.c.h.b16 %v212
    %v805 = vunpack.c.l.b16 %v213
    %v806 = vunpack.c.h.b16 %v213
    %v807 = vunpack.c.l.b16 %v214
    %v808 = vunpack.c.h.b16 %v214
    %v809 = vunpack.c.l.b16 %v215
    %v810 = vunpack.c.h.b16 %v215
    %v811 = vunpack.c.l.b16 %v216
    %v812 = vunpack.c.h.b16 %v216
    %v813 = vunpack.c.l.b16 %v217
    %v814 = vunpack.c.h.b16 %v217
    %v815 = vunpack.c.l.b16 %v218
    %v816 = vunpack.c.h.b16 %v218
    %v817 = vunpack.c.l.b16 %v219
    %v818 = vunpack.c.h.b16 %v219
    %v819 = vunpack.c.l.b16 %v220
    %v820 = vunpack.c.h.b16 %v220
    %v821 = vunpack.c.l.b16 %v221
    %v822 = vunpack.c.h.b16 %v221
    %v823 = vunpack.c.l.b16 %v222
    %v824 = vunpack.c.h.b16 %v222
    %v825 = vunpack.c.l.b16 %v223
    %v826 = vunpack.c.h.b16 %v223
    %v827 = vunpack.c.l.b16 %v224
    %v828 = vunpack.c.h.b16 %v224
    %v829 = vunpack.c.l.b16 %v225
    %v830 = vunpack.c.h.b16 %v225
    %v831 = vunpack.c.l.b16 %v226
    %v832 = vunpack.c.h.b16 %v226
    %v833 = vunpack.c.l.b16 %v227
    %v834 = vunpack.c.h.b16 %v227
    %v835 = vunpack.c.l.b16 %v228
    %v836 = vunpack.c.h.b16 %v228
    %v837 = vunpack.c.l.b16 %v229
    %v838 = vunpack.c.h.b16 %v229
    %v839 = vunpack.c.l.b16 %v230
    %v840 = vunpack.c.h.b16 %v230
    %v841 = vunpack.c.l.b16 %v231
    %v842 = vunpack.c.h.b16 %v231
    %v843 = vunpack.c.l.b16 %v232
    %v844 = vunpack.c.h.b16 %v232
    %v845 = vunpack.c.l.b16 %v233
    %v846 = vunpack.c.h.b16 %v233
    %v847 = vunpack.c.l.b16 %v234
    %v848 = vunpack.c.h.b16 %v234
    %v849 = vunpack.c.l.b16 %v235
    %v850 = vunpack.c.h.b16 %v235
    %v851 = vunpack.c.l.b16 %v236
    %v852 = vunpack.c.h.b16 %v236
    %v853 = vunpack.c.l.b16 %v237
    %v854 = vunpack.c.h.b16 %v237
    %v855 = vunpack.c.l.b16 %v238
    %v856 = vunpack.c.h.b16 %v238
    %v857 = vunpack.c.l.b16 %v239
    %v858 = vunpack.c.h.b16 %v239
    %v859 = vunpack.c.l.b16 %v240
    %v860 = vunpack.c.h.b16 %v240
    %v861 = vunpack.c.l.b16 %v241
    %v862 = vunpack.c.h.b16 %v241
    %v863 = vunpack.c.l.b16 %v242
    %v864 = vunpack.c.h.b16 %v242
    %v865 = vunpack.c.l.b16 %v243
    %v866 = vunpack.c.h.b16 %v243
    %v867 = vunpack.c.l.b16 %v244
    %v868 = vunpack.c.h.b16 %v244
    %v869 = vunpack.c.l.b16 %v245
    %v870 = vunpack.c.h.b16 %v245
    %v871 = vunpack.c.l.b16 %v246
    %v872 = vunpack.c.h.b16 %v246
    %v873 = vunpack.c.l.b16 %v247
    %v874 = vunpack.c.h.b16 %v247
    %v875 = vunpack.c.l.b16 %v248
    %v876 = vunpack.c.h.b16 %v248
    %v877 = vunpack.c.l.b16 %v249
    %v878 = vunpack.c.h.b16 %v249
    %v879 = vunpack.c.l.b16 %v250
    %v880 = vunpack.c.h.b16 %v250
    %v881 = vunpack.c.l.b16 %v251
    %v882 = vunpack.c.h.b16 %v251
    %v883 = vunpack.c.l.b16 %v252
    %v884 = vunpack.c.h.b16 %v252
    %v885 = vunpack.c.l.b16 %v253
    %v886 = vunpack.c.h.b16 %v253
    %v887 = vunpack.c.l.b16 %v254
    %v888 = vunpack.c.h.b16 %v254
    %v889 = vpack.c.b16 %v501, %v497
    %v890 = vpack.c.b16 %v502, %v498
    %v891 = vpack.c.b16 %v503, %v499
    %v892 = vpack.c.b16 %v504, %v500
    %v893 = vpack.c.b16 %v509, %v505
    %v894 = vpack.c.b16 %v510, %v506
    %v895 = vpack.c.b16 %v511, %v507
    %v896 = vpack.c.b16 %v512, %v508
    %v897 = vpack.c.b16 %v517, %v513
    %v898 = vpack.c.b16 %v518, %v514
    %v899 = vpack.c.b16 %v519, %v515
    %v900 = vpack.c.b16 %v520, %v516
    %v901 = vpack.c.b16 %v525, %v521
    %v902 = vpack.c.b16 %v526, %v522
    %v903 = vpack.c.b16 %v527, %v523
    %v904 = vpack.c.b16 %v528, %v524
    %v905 = vpack.c.b16 %v533, %v529
    %v906 = vpack.c.b16 %v534, %v530
    %v907 = vpack.c.b16 %v535, %v531
    %v908 = vpack.c.b16 %v536, %v532
    %v909 = vpack.c.b16 %v541, %v537
    %v910 = vpack.c.b16 %v542, %v538
    %v911 = vpack.c.b16 %v543, %v539
    %v912 = vpack.c.b16 %v544, %v540
    %v913 = vpack.c.b16 %v549, %v545
    %v914 = vpack.c.b16 %v550, %v546
    %v915 = vpack.c.b16 %v551, %v547
    %v916 = vpack.c.b16 %v552, %v548
    %v917 = vpack.c.b16 %v557, %v553
    %v918 = vpack.c.b16 %v558, %v554
    %v919 = vpack.c.b16 %v559, %v555
    %v920 = vpack.c.b16 %v560, %v556
    %v921 = vpack.c.b16 %v565, %v561
    %v922 = vpack.c.b16 %v566, %v562
    %v923 = vpack.c.b16 %v567, %v563
    %v924 = vpack.c.b16 %v568, %v564
    %v925 = vpack.c.b16 %v573, %v569
    %v926 = vpack.c.b16 %v574, %v570
    %v927 = vpack.c.b16 %v575, %v571
    %v928 = vpack.c.b16 %v576, %v572
    %v929 = vpack.c.b16 %v581, %v577
    %v930 = vpack.c.b16 %v582, %v578
    %v931 = vpack.c.b16 %v583, %v579
    %v932 = vpack.c.b16 %v584, %v580
    %v933 = vpack.c.b16 %v589, %v585
    %v934 = vpack.c.b16 %v590, %v586
    %v935 = vpack.c.b16 %v591, %v587
    %v936 = vpack.c.b16 %v592, %v588
    %v937 = vpack.c.b16 %v597, %v593
    %v938 = vpack.c.b16 %v598, %v594
    %v939 = vpack.c.b16 %v599, %v595
    %v940 = vpack.c.b16 %v600, %v596
    %v941 = vpack.c.b16 %v605, %v601
    %v942 = vpack.c.b16 %v606, %v602
    %v943 = vpack.c.b16 %v607, %v603
    %v944 = vpack.c.b16 %v608, %v604
    %v945 = vpack.c.b16 %v613, %v609
    %v946 = vpack.c.b16 %v614, %v610
    %v947 = vpack.c.b16 %v615, %v611
    %v948 = vpack.c.b16 %v616, %v612
    %v949 = vpack.c.b16 %v621, %v617
    %v950 = vpack.c.b16 %v622, %v618
    %v951 = vpack.c.b16 %v623, %v619
    %v952 = vpack.c.b16 %v624, %v620
    %v953 = vpack.c.b16 %v629, %v625
    %v954 = vpack.c.b16 %v630, %v626
    %v955 = vpack.c.b16 %v631, %v627
    %v956 = vpack.c.b16 %v632, %v628
    %v957 = vpack.c.b16 %v637, %v633
    %v958 = vpack.c.b16 %v638, %v634
    %v959 = vpack.c.b16 %v639, %v635
    %v960 = vpack.c.b16 %v640, %v636
    %v961 = vpack.c.b16 %v645, %v641
    %v962 = vpack.c.b16 %v646, %v642
    %v963 = vpack.c.b16 %v647, %v643
    %v964 = vpack.c.b16 %v648, %v644
    %v965 = vpack.c.b16 %v653, %v649
    %v966 = vpack.c.b16 %v654, %v650
    %v967 = vpack.c.b16 %v655, %v651
    %v968 = vpack.c.b16 %v656, %v652
    %v969 = vpack.c.b16 %v661, %v657
    %v970 = vpack.c.b16 %v662, %v658
    %v971 = vpack.c.b16 %v663, %v659
    %v972 = vpack.c.b16 %v664, %v660
    %v973 = vpack.c.b16 %v669, %v665
    %v974 = vpack.c.b16 %v670, %v666
    %v975 = vpack.c.b16 %v671, %v667
    %v976 = vpack.c.b16 %v672, %v668
    %v977 = vpack.c.b16 %v677, %v673
    %v978 = vpack.c.b16 %v678, %v674
    %v979 = vpack.c.b16 %v679, %v675
    %v980 = vpack.c.b16 %v680, %v676
    %v981 = vpack.c.b16 %v685, %v681
    %v982 = vpack.c.b16 %v686, %v682
    %v983 = vpack.c.b16 %v687, %v683
    %v984 = vpack.c.b16 %v688, %v684
    %v985 = vpack.c.b16 %v693, %v689
    %v986 = vpack.c.b16 %v694, %v690
    %v987 = vpack.c.b16 %v695, %v691
    %v988 = vpack.c.b16 %v696, %v692
    %v989 = vpack.c.b16 %v701, %v697
    %v990 = vpack.c.b16 %v702, %v698
    %v991 = vpack.c.b16 %v703, %v699
    %v992 = vpack.c.b16 %v704, %v700
    %v993 = vpack.c.b16 %v709, %v705
    %v994 = vpack.c.b16 %v710, %v706
    %v995 = vpack.c.b16 %v711, %v707
    %v996 = vpack.c.b16 %v712, %v708
    %v997 = vpack.c.b16 %v717, %v713
    %v998 = vpack.c.b16 %v718, %v714
    %v999 = vpack.c.b16 %v719, %v715
    %v1000 = vpack.c.b16 %v720, %v716
    %v1001 = vpack.c.b16 %v725, %v721
    %v1002 = vpack.c.b16 %v726, %v722
    %v1003 = vpack.c.b16 %v727, %v723
    %v1004 = vpack.c.b16 %v728, %v724
    %v1005 = vpack.c.b16 %v733, %v729
    %v1006 = vpack.c.b16 %v734, %v730
    %v1007 = vpack.c.b16 %v735, %v731
    %v1008 = vpack.c.b16 %v736, %v732
    %v1009 = vpack.c.b16 %v741, %v737
    %v1010 = vpack.c.b16 %v742, %v738
    %v1011 = vpack.c.b16 %v743, %v739
    %v1012 = vpack.c.b16 %v744, %v740
    %v1013 = vpack.c.b16 %v749, %v745
    %v1014 = vpack.c.b16 %v750, %v746
    %v1015 = vpack.c.b16 %v751, %v747
    %v1016 = vpack.c.b16 %v752, %v748
    %v1017 = vpack.c.b16 %v757, %v753
    %v1018 = vpack.c.b16 %v758, %v754
    %v1019 = vpack.c.b16 %v759, %v755
    %v1020 = vpack.c.b16 %v760, %v756
    %v1021 = vpack.c.b16 %v765, %v761
    %v1022 = vpack.c.b16 %v766, %v762
    %v1023 = vpack.c.b16 %v767, %v763
    %v1024 = vpack.c.b16 %v768, %v764
    %v1025 = vpack.c.b16 %v773, %v769
    %v1026 = vpack.c.b16 %v774, %v770
    %v1027 = vpack.c.b16 %v775, %v771
    %v1028 = vpack.c.b16 %v776, %v772
    %v1029 = vpack.c.b16 %v781, %v777
    %v1030 = vpack.c.b16 %v782, %v778
    %v1031 = vpack.c.b16 %v783, %v779
    %v1032 = vpack.c.b16 %v784, %v780
    %v1033 = vpack.c.b16 %v789, %v785
    %v1034 = vpack.c.b16 %v790, %v786
    %v1035 = vpack.c.b16 %v791, %v787
    %v1036 = vpack.c.b16 %v792, %v788
    %v1037 = vpack.c.b16 %v797, %v793
    %v1038 = vpack.c.b16 %v798, %v794
    %v1039 = vpack.c.b16 %v799, %v795
    %v1040 = vpack.c.b16 %v800, %v796
    %v1041 = vpack.c.b16 %v805, %v801
    %v1042 = vpack.c.b16 %v806, %v802
    %v1043 = vpack.c.b16 %v807, %v803
    %v1044 = vpack.c.b16 %v808, %v804
    %v1045 = vpack.c.b16 %v813, %v809
    %v1046 = vpack.c.b16 %v814, %v810
    %v1047 = vpack.c.b16 %v815, %v811
    %v1048 = vpack.c.b16 %v816, %v812
    %v1049 = vpack.c.b16 %v821, %v817
    %v1050 = vpack.c.b16 %v822, %v818
    %v1051 = vpack.c.b16 %v823, %v819
    %v1052 = vpack.c.b16 %v824, %v820
    %v1053 = vpack.c.b16 %v829, %v825
    %v1054 = vpack.c.b16 %v830, %v826
    %v1055 = vpack.c.b16 %v831, %v827
    %v1056 = vpack.c.b16 %v832, %v828
    %v1057 = vpack.c.b16 %v837, %v833
    %v1058 = vpack.c.b16 %v838, %v834
    %v1059 = vpack.c.b16 %v839, %v835
    %v1060 = vpack.c.b16 %v840, %v836
    %v1061 = vpack.c.b16 %v845, %v841
    %v1062 = vpack.c.b16 %v846, %v842
    %v1063 = vpack.c.b16 %v847, %v843
    %v1064 = vpack.c.b16 %v848, %v844
    %v1065 = vpack.c.b16 %v853, %v849
    %v1066 = vpack.c.b16 %v854, %v850
    %v1067 = vpack.c.b16 %v855, %v851
    %v1068 = vpack.c.b16 %v856, %v852
    %v1069 = vpack.c.b16 %v861, %v857
    %v1070 = vpack.c.b16 %v862, %v858
    %v1071 = vpack.c.b16 %v863, %v859
    %v1072 = vpack.c.b16 %v864, %v860
    %v1073 = vpack.c.b16 %v869, %v865
    %v1074 = vpack.c.b16 %v870, %v866
    %v1075 = vpack.c.b16 %v871, %v867
    %v1076 = vpack.c.b16 %v872, %v868
    %v1077 = vpack.c.b16 %v877, %v873
    %v1078 = vpack.c.b16 %v878, %v874
    %v1079 = vpack.c.b16 %v879, %v875
    %v1080 = vpack.c.b16 %v880, %v876
    %v1081 = vpack.c.b16 %v885, %v881
    %v1082 = vpack.c.b16 %v886, %v882
    %v1083 = vpack.c.b16 %v887, %v883
    %v1084 = vpack.c.b16 %v888, %v884
    %vm1281 = vcmask 130048
    %v1283 = vsel %vm1281, %v294, 0
    %1285 = vmatprep.subr.bf16.mxu0 %v918
    %1286 = vmatpush1.bf16.msra.mxu0 %v917
    %1287 = vmatprep.subr.bf16.mxu0 %v914
    %1288 = vmatpush1.bf16.msra.mxu0 %v913
    %1289 = vmatprep.subr.bf16.mxu0 %v910
    %1290 = vmatpush1.bf16.msra.mxu0 %v909
    %1291 = vmatprep.subr.bf16.mxu0 %v906
    %1292 = vmatpush1.bf16.msra.mxu0 %v905
    %1293 = vmatprep.subr.bf16.mxu0 %v902
    %1294 = vmatpush1.bf16.msra.mxu0 %v901
    %1295 = vmatprep.subr.bf16.mxu0 %v898
    %1296 = vmatpush1.bf16.msra.mxu0 %v897
    %1297 = vmatprep.subr.bf16.mxu0 %v894
    %1298 = vmatpush1.bf16.msra.mxu0 %v893
    %1299 = vmatprep.subr.bf16.mxu0 %v890
    %1300 = vmatpush1.bf16.msra.mxu0 %v889
    %1301 = vmatprep.subr.bf16.mxu0 %v950
    %1302 = vmatpush2.bf16.msra.mxu0 %v949
    %1303 = vmatprep.subr.bf16.mxu0 %v946
    %1304 = vmatpush2.bf16.msra.mxu0 %v945
    %1305 = vmatprep.subr.bf16.mxu0 %v942
    %1306 = vmatpush2.bf16.msra.mxu0 %v941
    %1307 = vmatprep.subr.bf16.mxu0 %v938
    %1308 = vmatpush2.bf16.msra.mxu0 %v937
    %1309 = vmatprep.subr.bf16.mxu0 %v934
    %1310 = vmatpush2.bf16.msra.mxu0 %v933
    %1311 = vmatprep.subr.bf16.mxu0 %v930
    %1312 = vmatpush2.bf16.msra.mxu0 %v929
    %1313 = vmatprep.subr.bf16.mxu0 %v926
    %1314 = vmatpush2.bf16.msra.mxu0 %v925
    %1315 = vmatprep.subr.bf16.mxu0 %v922
    %1316 = vmatpush2.bf16.msra.mxu0 %v921
    %1317 = vmatprep.mubr.bf16.mxu0 %v289
    %1318 = vmatmul.mubr.bf16.gmra.mxu0 %v288
    %v1319 = vpop.f32.mrf.mxu0
    %v1320 = vadd.f32 %v260, %v1319
    %v1321 = vpop.f32.mrf.mxu0
    %v1322 = vadd.f32 %v264, %v1321
    %v1323 = vpop.f32.mrf.mxu0
    %v1324 = vpop.f32.mrf.mxu0
    %1325 = vdwg.mxu0
    %1326 = vmatprep.subr.bf16.mxu0 %v982
    %1327 = vmatpush1.bf16.msra.mxu0 %v981
    %1328 = vmatprep.subr.bf16.mxu0 %v978
    %1329 = vmatpush1.bf16.msra.mxu0 %v977
    %1330 = vmatprep.subr.bf16.mxu0 %v974
    %1331 = vmatpush1.bf16.msra.mxu0 %v973
    %1332 = vmatprep.subr.bf16.mxu0 %v970
    %1333 = vmatpush1.bf16.msra.mxu0 %v969
    %1334 = vmatprep.subr.bf16.mxu0 %v966
    %1335 = vmatpush1.bf16.msra.mxu0 %v965
    %1336 = vmatprep.subr.bf16.mxu0 %v962
    %1337 = vmatpush1.bf16.msra.mxu0 %v961
    %1338 = vmatprep.subr.bf16.mxu0 %v958
    %1339 = vmatpush1.bf16.msra.mxu0 %v957
    %1340 = vmatprep.subr.bf16.mxu0 %v954
    %1341 = vmatpush1.bf16.msra.mxu0 %v953
    %1342 = vmatprep.subr.bf16.mxu0 %v1014
    %1343 = vmatpush2.bf16.msra.mxu0 %v1013
    %1344 = vmatprep.subr.bf16.mxu0 %v1010
    %1345 = vmatpush2.bf16.msra.mxu0 %v1009
    %1346 = vmatprep.subr.bf16.mxu0 %v1006
    %1347 = vmatpush2.bf16.msra.mxu0 %v1005
    %1348 = vmatprep.subr.bf16.mxu0 %v1002
    %1349 = vmatpush2.bf16.msra.mxu0 %v1001
    %1350 = vmatprep.subr.bf16.mxu0 %v998
    %1351 = vmatpush2.bf16.msra.mxu0 %v997
    %1352 = vmatprep.subr.bf16.mxu0 %v994
    %1353 = vmatpush2.bf16.msra.mxu0 %v993
    %1354 = vmatprep.subr.bf16.mxu0 %v990
    %1355 = vmatpush2.bf16.msra.mxu0 %v989
    %1356 = vmatprep.subr.bf16.mxu0 %v986
    %1357 = vmatpush2.bf16.msra.mxu0 %v985
    %1358 = vmatprep.mubr.bf16.mxu0 %v291
    %1359 = vmatmul.mubr.bf16.gmra.mxu0 %v290
    %v1360 = vpop.f32.mrf.mxu0
    %v1361 = vadd.f32 %v1320, %v1360
    %v1362 = vpop.f32.mrf.mxu0
    %v1363 = vadd.f32 %v1322, %v1362
    %v1364 = vpop.f32.mrf.mxu0
    %v1365 = vpop.f32.mrf.mxu0
    %1366 = vdwg.mxu0
    %1367 = vmatprep.subr.bf16.mxu0 %v1046
    %1368 = vmatpush1.bf16.msra.mxu0 %v1045
    %1369 = vmatprep.subr.bf16.mxu0 %v1042
    %1370 = vmatpush1.bf16.msra.mxu0 %v1041
    %1371 = vmatprep.subr.bf16.mxu0 %v1038
    %1372 = vmatpush1.bf16.msra.mxu0 %v1037
    %1373 = vmatprep.subr.bf16.mxu0 %v1034
    %1374 = vmatpush1.bf16.msra.mxu0 %v1033
    %1375 = vmatprep.subr.bf16.mxu0 %v1030
    %1376 = vmatpush1.bf16.msra.mxu0 %v1029
    %1377 = vmatprep.subr.bf16.mxu0 %v1026
    %1378 = vmatpush1.bf16.msra.mxu0 %v1025
    %1379 = vmatprep.subr.bf16.mxu0 %v1022
    %1380 = vmatpush1.bf16.msra.mxu0 %v1021
    %1381 = vmatprep.subr.bf16.mxu0 %v1018
    %1382 = vmatpush1.bf16.msra.mxu0 %v1017
    %1383 = vmatprep.subr.bf16.mxu0 %v1078
    %1384 = vmatpush2.bf16.msra.mxu0 %v1077
    %1385 = vmatprep.subr.bf16.mxu0 %v1074
    %1386 = vmatpush2.bf16.msra.mxu0 %v1073
    %1387 = vmatprep.subr.bf16.mxu0 %v1070
    %1388 = vmatpush2.bf16.msra.mxu0 %v1069
    %1389 = vmatprep.subr.bf16.mxu0 %v1066
    %1390 = vmatpush2.bf16.msra.mxu0 %v1065
    %1391 = vmatprep.subr.bf16.mxu0 %v1062
    %1392 = vmatpush2.bf16.msra.mxu0 %v1061
    %1393 = vmatprep.subr.bf16.mxu0 %v1058
    %1394 = vmatpush2.bf16.msra.mxu0 %v1057
    %1395 = vmatprep.subr.bf16.mxu0 %v1054
    %1396 = vmatpush2.bf16.msra.mxu0 %v1053
    %1397 = vmatprep.subr.bf16.mxu0 %v1050
    %1398 = vmatpush2.bf16.msra.mxu0 %v1049
    %1399 = vmatprep.mubr.bf16.mxu0 %v293
    %1400 = vmatmul.mubr.bf16.gmra.mxu0 %v292
    %v1401 = vpop.f32.mrf.mxu0
    %v1402 = vadd.f32 %v1361, %v1401
    %v1403 = vpop.f32.mrf.mxu0
    %v1404 = vadd.f32 %v1363, %v1403
    %v1405 = vpop.f32.mrf.mxu0
    %v1406 = vpop.f32.mrf.mxu0
    %1407 = vdwg.mxu0
    %1408 = vmatprep.subr.bf16.mxu0 0
    %1409 = vmatpush1.bf16.msra.mxu0 0
    %1410 = vmatprep.subr.bf16.mxu0 0
    %1411 = vmatpush1.bf16.msra.mxu0 0
    %1412 = vmatprep.subr.bf16.mxu0 0
    %1413 = vmatpush1.bf16.msra.mxu0 0
    %1414 = vmatprep.subr.bf16.mxu0 0
    %1415 = vmatpush1.bf16.msra.mxu0 0
    %1416 = vmatprep.subr.bf16.mxu0 0
    %1417 = vmatpush1.bf16.msra.mxu0 0
    %1418 = vmatprep.subr.bf16.mxu0 0
    %1419 = vmatpush1.bf16.msra.mxu0 0
    %1420 = vmatprep.subr.bf16.mxu0 0
    %1421 = vmatpush1.bf16.msra.mxu0 0
    %1422 = vmatprep.subr.bf16.mxu0 %v1082
    %1423 = vmatpush1.bf16.msra.mxu0 %v1081
    %1424 = vmatprep.subr.bf16.mxu0 0
    %1425 = vmatpush2.bf16.msra.mxu0 0
    %1426 = vmatprep.subr.bf16.mxu0 0
    %1427 = vmatpush2.bf16.msra.mxu0 0
    %1428 = vmatprep.subr.bf16.mxu0 0
    %1429 = vmatpush2.bf16.msra.mxu0 0
    %1430 = vmatprep.subr.bf16.mxu0 0
    %1431 = vmatpush2.bf16.msra.mxu0 0
    %1432 = vmatprep.subr.bf16.mxu0 0
    %1433 = vmatpush2.bf16.msra.mxu0 0
    %1434 = vmatprep.subr.bf16.mxu0 0
    %1435 = vmatpush2.bf16.msra.mxu0 0
    %1436 = vmatprep.subr.bf16.mxu0 0
    %1437 = vmatpush2.bf16.msra.mxu0 0
    %1438 = vmatprep.subr.bf16.mxu0 0
    %1439 = vmatpush2.bf16.msra.mxu0 0
    %1440 = vmatprep.mubr.bf16.mxu0 0
    %1441 = vmatmul.mubr.bf16.gmra.mxu0 %v1283
    %v1442 = vpop.f32.mrf.mxu0
    %v1443 = vadd.f32 %v1402, %v1442
    %v1444 = vpop.f32.mrf.mxu0
    %v1445 = vadd.f32 %v1404, %v1444
    %v1446 = vpop.f32.mrf.mxu0
    %v1447 = vpop.f32.mrf.mxu0
    %1448 = vdwg.mxu0
    %1449 = vmatprep.subr.bf16.mxu0 %v920
    %1450 = vmatpush1.bf16.msra.mxu0 %v919
    %1451 = vmatprep.subr.bf16.mxu0 %v916
    %1452 = vmatpush1.bf16.msra.mxu0 %v915
    %1453 = vmatprep.subr.bf16.mxu0 %v912
    %1454 = vmatpush1.bf16.msra.mxu0 %v911
    %1455 = vmatprep.subr.bf16.mxu0 %v908
    %1456 = vmatpush1.bf16.msra.mxu0 %v907
    %1457 = vmatprep.subr.bf16.mxu0 %v904
    %1458 = vmatpush1.bf16.msra.mxu0 %v903
    %1459 = vmatprep.subr.bf16.mxu0 %v900
    %1460 = vmatpush1.bf16.msra.mxu0 %v899
    %1461 = vmatprep.subr.bf16.mxu0 %v896
    %1462 = vmatpush1.bf16.msra.mxu0 %v895
    %1463 = vmatprep.subr.bf16.mxu0 %v892
    %1464 = vmatpush1.bf16.msra.mxu0 %v891
    %1465 = vmatprep.subr.bf16.mxu0 %v952
    %1466 = vmatpush2.bf16.msra.mxu0 %v951
    %1467 = vmatprep.subr.bf16.mxu0 %v948
    %1468 = vmatpush2.bf16.msra.mxu0 %v947
    %1469 = vmatprep.subr.bf16.mxu0 %v944
    %1470 = vmatpush2.bf16.msra.mxu0 %v943
    %1471 = vmatprep.subr.bf16.mxu0 %v940
    %1472 = vmatpush2.bf16.msra.mxu0 %v939
    %1473 = vmatprep.subr.bf16.mxu0 %v936
    %1474 = vmatpush2.bf16.msra.mxu0 %v935
    %1475 = vmatprep.subr.bf16.mxu0 %v932
    %1476 = vmatpush2.bf16.msra.mxu0 %v931
    %1477 = vmatprep.subr.bf16.mxu0 %v928
    %1478 = vmatpush2.bf16.msra.mxu0 %v927
    %1479 = vmatprep.subr.bf16.mxu0 %v924
    %1480 = vmatpush2.bf16.msra.mxu0 %v923
    %1481 = vmatprep.mubr.bf16.mxu0 %v289
    %1482 = vmatmul.mubr.bf16.gmra.mxu0 %v288
    %v1483 = vpop.f32.mrf.mxu0
    %v1484 = vadd.f32 %v268, %v1483
    %v1485 = vpop.f32.mrf.mxu0
    %v1486 = vadd.f32 %v272, %v1485
    %v1487 = vpop.f32.mrf.mxu0
    %v1488 = vpop.f32.mrf.mxu0
    %1489 = vdwg.mxu0
    %1490 = vmatprep.subr.bf16.mxu0 %v984
    %1491 = vmatpush1.bf16.msra.mxu0 %v983
    %1492 = vmatprep.subr.bf16.mxu0 %v980
    %1493 = vmatpush1.bf16.msra.mxu0 %v979
    %1494 = vmatprep.subr.bf16.mxu0 %v976
    %1495 = vmatpush1.bf16.msra.mxu0 %v975
    %1496 = vmatprep.subr.bf16.mxu0 %v972
    %1497 = vmatpush1.bf16.msra.mxu0 %v971
    %1498 = vmatprep.subr.bf16.mxu0 %v968
    %1499 = vmatpush1.bf16.msra.mxu0 %v967
    %1500 = vmatprep.subr.bf16.mxu0 %v964
    %1501 = vmatpush1.bf16.msra.mxu0 %v963
    %1502 = vmatprep.subr.bf16.mxu0 %v960
    %1503 = vmatpush1.bf16.msra.mxu0 %v959
    %1504 = vmatprep.subr.bf16.mxu0 %v956
    %1505 = vmatpush1.bf16.msra.mxu0 %v955
    %1506 = vmatprep.subr.bf16.mxu0 %v1016
    %1507 = vmatpush2.bf16.msra.mxu0 %v1015
    %1508 = vmatprep.subr.bf16.mxu0 %v1012
    %1509 = vmatpush2.bf16.msra.mxu0 %v1011
    %1510 = vmatprep.subr.bf16.mxu0 %v1008
    %1511 = vmatpush2.bf16.msra.mxu0 %v1007
    %1512 = vmatprep.subr.bf16.mxu0 %v1004
    %1513 = vmatpush2.bf16.msra.mxu0 %v1003
    %1514 = vmatprep.subr.bf16.mxu0 %v1000
    %1515 = vmatpush2.bf16.msra.mxu0 %v999
    %1516 = vmatprep.subr.bf16.mxu0 %v996
    %1517 = vmatpush2.bf16.msra.mxu0 %v995
    %1518 = vmatprep.subr.bf16.mxu0 %v992
    %1519 = vmatpush2.bf16.msra.mxu0 %v991
    %1520 = vmatprep.subr.bf16.mxu0 %v988
    %1521 = vmatpush2.bf16.msra.mxu0 %v987
    %1522 = vmatprep.mubr.bf16.mxu0 %v291
    %1523 = vmatmul.mubr.bf16.gmra.mxu0 %v290
    %v1524 = vpop.f32.mrf.mxu0
    %v1525 = vadd.f32 %v1484, %v1524
    %v1526 = vpop.f32.mrf.mxu0
    %v1527 = vadd.f32 %v1486, %v1526
    %v1528 = vpop.f32.mrf.mxu0
    %v1529 = vpop.f32.mrf.mxu0
    %1530 = vdwg.mxu0
    %1531 = vmatprep.subr.bf16.mxu0 %v1048
    %1532 = vmatpush1.bf16.msra.mxu0 %v1047
    %1533 = vmatprep.subr.bf16.mxu0 %v1044
    %1534 = vmatpush1.bf16.msra.mxu0 %v1043
    %1535 = vmatprep.subr.bf16.mxu0 %v1040
    %1536 = vmatpush1.bf16.msra.mxu0 %v1039
    %1537 = vmatprep.subr.bf16.mxu0 %v1036
    %1538 = vmatpush1.bf16.msra.mxu0 %v1035
    %1539 = vmatprep.subr.bf16.mxu0 %v1032
    %1540 = vmatpush1.bf16.msra.mxu0 %v1031
    %1541 = vmatprep.subr.bf16.mxu0 %v1028
    %1542 = vmatpush1.bf16.msra.mxu0 %v1027
    %1543 = vmatprep.subr.bf16.mxu0 %v1024
    %1544 = vmatpush1.bf16.msra.mxu0 %v1023
    %1545 = vmatprep.subr.bf16.mxu0 %v1020
    %1546 = vmatpush1.bf16.msra.mxu0 %v1019
    %1547 = vmatprep.subr.bf16.mxu0 %v1080
    %1548 = vmatpush2.bf16.msra.mxu0 %v1079
    %1549 = vmatprep.subr.bf16.mxu0 %v1076
    %1550 = vmatpush2.bf16.msra.mxu0 %v1075
    %1551 = vmatprep.subr.bf16.mxu0 %v1072
    %1552 = vmatpush2.bf16.msra.mxu0 %v1071
    %1553 = vmatprep.subr.bf16.mxu0 %v1068
    %1554 = vmatpush2.bf16.msra.mxu0 %v1067
    %1555 = vmatprep.subr.bf16.mxu0 %v1064
    %1556 = vmatpush2.bf16.msra.mxu0 %v1063
    %1557 = vmatprep.subr.bf16.mxu0 %v1060
    %1558 = vmatpush2.bf16.msra.mxu0 %v1059
    %1559 = vmatprep.subr.bf16.mxu0 %v1056
    %1560 = vmatpush2.bf16.msra.mxu0 %v1055
    %1561 = vmatprep.subr.bf16.mxu0 %v1052
    %1562 = vmatpush2.bf16.msra.mxu0 %v1051
    %1563 = vmatprep.mubr.bf16.mxu0 %v293
    %1564 = vmatmul.mubr.bf16.gmra.mxu0 %v292
    %v1565 = vpop.f32.mrf.mxu0
    %v1566 = vadd.f32 %v1525, %v1565
    %v1567 = vpop.f32.mrf.mxu0
    %v1568 = vadd.f32 %v1527, %v1567
    %v1569 = vpop.f32.mrf.mxu0
    %v1570 = vpop.f32.mrf.mxu0
    %1571 = vdwg.mxu0
    %1572 = vmatprep.subr.bf16.mxu0 0
    %1573 = vmatpush1.bf16.msra.mxu0 0
    %1574 = vmatprep.subr.bf16.mxu0 0
    %1575 = vmatpush1.bf16.msra.mxu0 0
    %1576 = vmatprep.subr.bf16.mxu0 0
    %1577 = vmatpush1.bf16.msra.mxu0 0
    %1578 = vmatprep.subr.bf16.mxu0 0
    %1579 = vmatpush1.bf16.msra.mxu0 0
    %1580 = vmatprep.subr.bf16.mxu0 0
    %1581 = vmatpush1.bf16.msra.mxu0 0
    %1582 = vmatprep.subr.bf16.mxu0 0
    %1583 = vmatpush1.bf16.msra.mxu0 0
    %1584 = vmatprep.subr.bf16.mxu0 0
    %1585 = vmatpush1.bf16.msra.mxu0 0
    %1586 = vmatprep.subr.bf16.mxu0 %v1084
    %1587 = vmatpush1.bf16.msra.mxu0 %v1083
    %1588 = vmatprep.subr.bf16.mxu0 0
    %1589 = vmatpush2.bf16.msra.mxu0 0
    %1590 = vmatprep.subr.bf16.mxu0 0
    %1591 = vmatpush2.bf16.msra.mxu0 0
    %1592 = vmatprep.subr.bf16.mxu0 0
    %1593 = vmatpush2.bf16.msra.mxu0 0
    %1594 = vmatprep.subr.bf16.mxu0 0
    %1595 = vmatpush2.bf16.msra.mxu0 0
    %1596 = vmatprep.subr.bf16.mxu0 0
    %1597 = vmatpush2.bf16.msra.mxu0 0
    %1598 = vmatprep.subr.bf16.mxu0 0
    %1599 = vmatpush2.bf16.msra.mxu0 0
    %1600 = vmatprep.subr.bf16.mxu0 0
    %1601 = vmatpush2.bf16.msra.mxu0 0
    %1602 = vmatprep.subr.bf16.mxu0 0
    %1603 = vmatpush2.bf16.msra.mxu0 0
    %1604 = vmatprep.mubr.bf16.mxu0 0
    %1605 = vmatmul.mubr.bf16.gmra.mxu0 %v1283
    %v1606 = vpop.f32.mrf.mxu0
    %v1607 = vadd.f32 %v1566, %v1606
    %v1608 = vpop.f32.mrf.mxu0
    %v1609 = vadd.f32 %v1568, %v1608
    %v1610 = vpop.f32.mrf.mxu0
    %v1611 = vpop.f32.mrf.mxu0
    %1612 = vdwg.mxu0
    %v1613 = vmax.f32 %v1443, 0.0
    %v1614 = vmax.f32 %v1445, 0.0
    %v1615 = vmax.f32 %v1607, 0.0
    %v1616 = vmax.f32 %v1609, 0.0
    %v1617 = vpack.c.bf16 %v1613, %v1613
    %v1618 = vpack.c.bf16 %v1614, %v1614
    %v1619 = vpack.c.bf16 %v1615, %v1615
    %v1620 = vpack.c.bf16 %v1616, %v1616
    %v1621 = vld [vmem:[#allocation4] sm:$0xff]
    %v1622 = vld [vmem:[#allocation4 + $0x8] sm:$0xff]
    %v1623 = vld [vmem:[#allocation4 + $0x10] sm:$0xff]
    %v1624 = vld [vmem:[#allocation4 + $0x18] sm:$0xff]
    %v1625 = vld [vmem:[#allocation4 + $0x20] sm:$0xff]
    %v1626 = vld [vmem:[#allocation4 + $0x28] sm:$0xff]
    %v1627 = vld [vmem:[#allocation4 + $0x30] sm:$0xff]
    %v1628 = vld [vmem:[#allocation4 + $0x38] sm:$0xff]
    %v1629 = vld [vmem:[#allocation4 + $0x40] sm:$0xff]
    %v1630 = vld [vmem:[#allocation4 + $0x48] sm:$0xff]
    %v1631 = vld [vmem:[#allocation4 + $0x50] sm:$0xff]
    %v1632 = vld [vmem:[#allocation4 + $0x58] sm:$0xff]
    %v1633 = vld [vmem:[#allocation4 + $0x60] sm:$0xff]
    %v1634 = vld [vmem:[#allocation4 + $0x68] sm:$0xff]
    %v1635 = vld [vmem:[#allocation4 + $0x70] sm:$0xff]
    %v1636 = vld [vmem:[#allocation4 + $0x78] sm:$0xff]
    %v1637 = vld [vmem:[#allocation4 + $0x80] sm:$0xff]
    %v1638 = vld [vmem:[#allocation4 + $0x88] sm:$0xff]
    %v1639 = vld [vmem:[#allocation4 + $0x90] sm:$0xff]
    %v1640 = vld [vmem:[#allocation4 + $0x98] sm:$0xff]
    %v1641 = vld [vmem:[#allocation4 + $0xa0] sm:$0xff]
    %v1642 = vld [vmem:[#allocation4 + $0xa8] sm:$0xff]
    %v1643 = vld [vmem:[#allocation4 + $0xb0] sm:$0xff]
    %v1644 = vld [vmem:[#allocation4 + $0xb8] sm:$0xff]
    %v1645 = vld [vmem:[#allocation4 + $0xc0] sm:$0xff]
    %v1646 = vld [vmem:[#allocation4 + $0xc8] sm:$0xff]
    %v1647 = vld [vmem:[#allocation4 + $0xd0] sm:$0xff]
    %v1648 = vld [vmem:[#allocation4 + $0xd8] sm:$0xff]
    %v1649 = vld [vmem:[#allocation4 + $0xe0] sm:$0xff]
    %v1650 = vld [vmem:[#allocation4 + $0xe8] sm:$0xff]
    %v1651 = vld [vmem:[#allocation4 + $0xf0] sm:$0xff]
    %v1652 = vld [vmem:[#allocation4 + $0xf8] sm:$0xff]
    %v1653 = vld [vmem:[#allocation4 + $0x100] sm:$0xff]
    %v1654 = vld [vmem:[#allocation4 + $0x108] sm:$0xff]
    %v1655 = vld [vmem:[#allocation4 + $0x110] sm:$0xff]
    %v1656 = vld [vmem:[#allocation4 + $0x118] sm:$0xff]
    %v1657 = vld [vmem:[#allocation4 + $0x120] sm:$0xff]
    %v1658 = vld [vmem:[#allocation4 + $0x128] sm:$0xff]
    %v1659 = vld [vmem:[#allocation4 + $0x130] sm:$0xff]
    %v1660 = vld [vmem:[#allocation4 + $0x138] sm:$0xff]
    %v1661 = vld [vmem:[#allocation4 + $0x140] sm:$0xff]
    %v1662 = vld [vmem:[#allocation4 + $0x148] sm:$0xff]
    %v1663 = vld [vmem:[#allocation4 + $0x150] sm:$0xff]
    %v1664 = vld [vmem:[#allocation4 + $0x158] sm:$0xff]
    %v1665 = vld [vmem:[#allocation4 + $0x160] sm:$0xff]
    %v1666 = vld [vmem:[#allocation4 + $0x168] sm:$0xff]
    %v1667 = vld [vmem:[#allocation4 + $0x170] sm:$0xff]
    %v1668 = vld [vmem:[#allocation4 + $0x178] sm:$0xff]
    %v1669 = vld [vmem:[#allocation4 + $0x180] sm:$0xff]
    %v1670 = vld [vmem:[#allocation4 + $0x188] sm:$0xff]
    %v1671 = vld [vmem:[#allocation4 + $0x190] sm:$0xff]
    %v1672 = vld [vmem:[#allocation4 + $0x198] sm:$0xff]
    %v1673 = vld [vmem:[#allocation4 + $0x1a0] sm:$0xff]
    %v1674 = vld [vmem:[#allocation4 + $0x1a8] sm:$0xff]
    %v1675 = vld [vmem:[#allocation4 + $0x1b0] sm:$0xff]
    %v1676 = vld [vmem:[#allocation4 + $0x1b8] sm:$0xff]
    %v1677 = vld [vmem:[#allocation4 + $0x1c0] sm:$0xff]
    %v1678 = vld [vmem:[#allocation4 + $0x1c8] sm:$0xff]
    %v1679 = vld [vmem:[#allocation4 + $0x1d0] sm:$0xff]
    %v1680 = vld [vmem:[#allocation4 + $0x1d8] sm:$0xff]
    %v1681 = vld [vmem:[#allocation4 + $0x1e0] sm:$0xff]
    %v1682 = vld [vmem:[#allocation4 + $0x1e8] sm:$0xff]
    %v1683 = vld [vmem:[#allocation4 + $0x1f0] sm:$0xff]
    %v1684 = vld [vmem:[#allocation4 + $0x1f8] sm:$0xff]
    %v1685 = vld [vmem:[%s4] sm:$0x3]
    %v1687 = vlaneseq
    %v1688 = vshrl.u32 %v1687, 7
    %v1689 = vsub.s32 0, %v1688
    %v1690 = vrot.slane %v1685, %v1689
    %v1691 = vlaneseq
    %v1692 = vshrl.u32 %v1691, 7
    %v1693 = vsub.s32 1, %v1692
    %v1694 = vrot.slane %v1685, %v1693
    %v1761 = vunpack.c.l.b16 %v1621
    %v1762 = vunpack.c.h.b16 %v1621
    %v1763 = vunpack.c.l.b16 %v1622
    %v1764 = vunpack.c.h.b16 %v1622
    %v1765 = vunpack.c.l.b16 %v1623
    %v1766 = vunpack.c.h.b16 %v1623
    %v1767 = vunpack.c.l.b16 %v1624
    %v1768 = vunpack.c.h.b16 %v1624
    %v1769 = vunpack.c.l.b16 %v1625
    %v1770 = vunpack.c.h.b16 %v1625
    %v1771 = vunpack.c.l.b16 %v1626
    %v1772 = vunpack.c.h.b16 %v1626
    %v1773 = vunpack.c.l.b16 %v1627
    %v1774 = vunpack.c.h.b16 %v1627
    %v1775 = vunpack.c.l.b16 %v1628
    %v1776 = vunpack.c.h.b16 %v1628
    %v1777 = vunpack.c.l.b16 %v1629
    %v1778 = vunpack.c.h.b16 %v1629
    %v1779 = vunpack.c.l.b16 %v1630
    %v1780 = vunpack.c.h.b16 %v1630
    %v1781 = vunpack.c.l.b16 %v1631
    %v1782 = vunpack.c.h.b16 %v1631
    %v1783 = vunpack.c.l.b16 %v1632
    %v1784 = vunpack.c.h.b16 %v1632
    %v1785 = vunpack.c.l.b16 %v1633
    %v1786 = vunpack.c.h.b16 %v1633
    %v1787 = vunpack.c.l.b16 %v1634
    %v1788 = vunpack.c.h.b16 %v1634
    %v1789 = vunpack.c.l.b16 %v1635
    %v1790 = vunpack.c.h.b16 %v1635
    %v1791 = vunpack.c.l.b16 %v1636
    %v1792 = vunpack.c.h.b16 %v1636
    %v1793 = vunpack.c.l.b16 %v1637
    %v1794 = vunpack.c.h.b16 %v1637
    %v1795 = vunpack.c.l.b16 %v1638
    %v1796 = vunpack.c.h.b16 %v1638
    %v1797 = vunpack.c.l.b16 %v1639
    %v1798 = vunpack.c.h.b16 %v1639
    %v1799 = vunpack.c.l.b16 %v1640
    %v1800 = vunpack.c.h.b16 %v1640
    %v1801 = vunpack.c.l.b16 %v1641
    %v1802 = vunpack.c.h.b16 %v1641
    %v1803 = vunpack.c.l.b16 %v1642
    %v1804 = vunpack.c.h.b16 %v1642
    %v1805 = vunpack.c.l.b16 %v1643
    %v1806 = vunpack.c.h.b16 %v1643
    %v1807 = vunpack.c.l.b16 %v1644
    %v1808 = vunpack.c.h.b16 %v1644
    %v1809 = vunpack.c.l.b16 %v1645
    %v1810 = vunpack.c.h.b16 %v1645
    %v1811 = vunpack.c.l.b16 %v1646
    %v1812 = vunpack.c.h.b16 %v1646
    %v1813 = vunpack.c.l.b16 %v1647
    %v1814 = vunpack.c.h.b16 %v1647
    %v1815 = vunpack.c.l.b16 %v1648
    %v1816 = vunpack.c.h.b16 %v1648
    %v1817 = vunpack.c.l.b16 %v1649
    %v1818 = vunpack.c.h.b16 %v1649
    %v1819 = vunpack.c.l.b16 %v1650
    %v1820 = vunpack.c.h.b16 %v1650
    %v1821 = vunpack.c.l.b16 %v1651
    %v1822 = vunpack.c.h.b16 %v1651
    %v1823 = vunpack.c.l.b16 %v1652
    %v1824 = vunpack.c.h.b16 %v1652
    %v1825 = vunpack.c.l.b16 %v1653
    %v1826 = vunpack.c.h.b16 %v1653
    %v1827 = vunpack.c.l.b16 %v1654
    %v1828 = vunpack.c.h.b16 %v1654
    %v1829 = vunpack.c.l.b16 %v1655
    %v1830 = vunpack.c.h.b16 %v1655
    %v1831 = vunpack.c.l.b16 %v1656
    %v1832 = vunpack.c.h.b16 %v1656
    %v1833 = vunpack.c.l.b16 %v1657
    %v1834 = vunpack.c.h.b16 %v1657
    %v1835 = vunpack.c.l.b16 %v1658
    %v1836 = vunpack.c.h.b16 %v1658
    %v1837 = vunpack.c.l.b16 %v1659
    %v1838 = vunpack.c.h.b16 %v1659
    %v1839 = vunpack.c.l.b16 %v1660
    %v1840 = vunpack.c.h.b16 %v1660
    %v1841 = vunpack.c.l.b16 %v1661
    %v1842 = vunpack.c.h.b16 %v1661
    %v1843 = vunpack.c.l.b16 %v1662
    %v1844 = vunpack.c.h.b16 %v1662
    %v1845 = vunpack.c.l.b16 %v1663
    %v1846 = vunpack.c.h.b16 %v1663
    %v1847 = vunpack.c.l.b16 %v1664
    %v1848 = vunpack.c.h.b16 %v1664
    %v1849 = vunpack.c.l.b16 %v1665
    %v1850 = vunpack.c.h.b16 %v1665
    %v1851 = vunpack.c.l.b16 %v1666
    %v1852 = vunpack.c.h.b16 %v1666
    %v1853 = vunpack.c.l.b16 %v1667
    %v1854 = vunpack.c.h.b16 %v1667
    %v1855 = vunpack.c.l.b16 %v1668
    %v1856 = vunpack.c.h.b16 %v1668
    %v1857 = vunpack.c.l.b16 %v1669
    %v1858 = vunpack.c.h.b16 %v1669
    %v1859 = vunpack.c.l.b16 %v1670
    %v1860 = vunpack.c.h.b16 %v1670
    %v1861 = vunpack.c.l.b16 %v1671
    %v1862 = vunpack.c.h.b16 %v1671
    %v1863 = vunpack.c.l.b16 %v1672
    %v1864 = vunpack.c.h.b16 %v1672
    %v1865 = vunpack.c.l.b16 %v1673
    %v1866 = vunpack.c.h.b16 %v1673
    %v1867 = vunpack.c.l.b16 %v1674
    %v1868 = vunpack.c.h.b16 %v1674
    %v1869 = vunpack.c.l.b16 %v1675
    %v1870 = vunpack.c.h.b16 %v1675
    %v1871 = vunpack.c.l.b16 %v1676
    %v1872 = vunpack.c.h.b16 %v1676
    %v1873 = vunpack.c.l.b16 %v1677
    %v1874 = vunpack.c.h.b16 %v1677
    %v1875 = vunpack.c.l.b16 %v1678
    %v1876 = vunpack.c.h.b16 %v1678
    %v1877 = vunpack.c.l.b16 %v1679
    %v1878 = vunpack.c.h.b16 %v1679
    %v1879 = vunpack.c.l.b16 %v1680
    %v1880 = vunpack.c.h.b16 %v1680
    %v1881 = vunpack.c.l.b16 %v1681
    %v1882 = vunpack.c.h.b16 %v1681
    %v1883 = vunpack.c.l.b16 %v1682
    %v1884 = vunpack.c.h.b16 %v1682
    %v1885 = vunpack.c.l.b16 %v1683
    %v1886 = vunpack.c.h.b16 %v1683
    %v1887 = vunpack.c.l.b16 %v1684
    %v1888 = vunpack.c.h.b16 %v1684
    %v1889 = vpack.c.b16 %v1763, %v1761
    %v1890 = vpack.c.b16 %v1764, %v1762
    %v1891 = vpack.c.b16 %v1767, %v1765
    %v1892 = vpack.c.b16 %v1768, %v1766
    %v1893 = vpack.c.b16 %v1771, %v1769
    %v1894 = vpack.c.b16 %v1772, %v1770
    %v1895 = vpack.c.b16 %v1775, %v1773
    %v1896 = vpack.c.b16 %v1776, %v1774
    %v1897 = vpack.c.b16 %v1779, %v1777
    %v1898 = vpack.c.b16 %v1780, %v1778
    %v1899 = vpack.c.b16 %v1783, %v1781
    %v1900 = vpack.c.b16 %v1784, %v1782
    %v1901 = vpack.c.b16 %v1787, %v1785
    %v1902 = vpack.c.b16 %v1788, %v1786
    %v1903 = vpack.c.b16 %v1791, %v1789
    %v1904 = vpack.c.b16 %v1792, %v1790
    %v1905 = vpack.c.b16 %v1795, %v1793
    %v1906 = vpack.c.b16 %v1796, %v1794
    %v1907 = vpack.c.b16 %v1799, %v1797
    %v1908 = vpack.c.b16 %v1800, %v1798
    %v1909 = vpack.c.b16 %v1803, %v1801
    %v1910 = vpack.c.b16 %v1804, %v1802
    %v1911 = vpack.c.b16 %v1807, %v1805
    %v1912 = vpack.c.b16 %v1808, %v1806
    %v1913 = vpack.c.b16 %v1811, %v1809
    %v1914 = vpack.c.b16 %v1812, %v1810
    %v1915 = vpack.c.b16 %v1815, %v1813
    %v1916 = vpack.c.b16 %v1816, %v1814
    %v1917 = vpack.c.b16 %v1819, %v1817
    %v1918 = vpack.c.b16 %v1820, %v1818
    %v1919 = vpack.c.b16 %v1823, %v1821
    %v1920 = vpack.c.b16 %v1824, %v1822
    %v1921 = vpack.c.b16 %v1827, %v1825
    %v1922 = vpack.c.b16 %v1828, %v1826
    %v1923 = vpack.c.b16 %v1831, %v1829
    %v1924 = vpack.c.b16 %v1832, %v1830
    %v1925 = vpack.c.b16 %v1835, %v1833
    %v1926 = vpack.c.b16 %v1836, %v1834
    %v1927 = vpack.c.b16 %v1839, %v1837
    %v1928 = vpack.c.b16 %v1840, %v1838
    %v1929 = vpack.c.b16 %v1843, %v1841
    %v1930 = vpack.c.b16 %v1844, %v1842
    %v1931 = vpack.c.b16 %v1847, %v1845
    %v1932 = vpack.c.b16 %v1848, %v1846
    %v1933 = vpack.c.b16 %v1851, %v1849
    %v1934 = vpack.c.b16 %v1852, %v1850
    %v1935 = vpack.c.b16 %v1855, %v1853
    %v1936 = vpack.c.b16 %v1856, %v1854
    %v1937 = vpack.c.b16 %v1859, %v1857
    %v1938 = vpack.c.b16 %v1860, %v1858
    %v1939 = vpack.c.b16 %v1863, %v1861
    %v1940 = vpack.c.b16 %v1864, %v1862
    %v1941 = vpack.c.b16 %v1867, %v1865
    %v1942 = vpack.c.b16 %v1868, %v1866
    %v1943 = vpack.c.b16 %v1871, %v1869
    %v1944 = vpack.c.b16 %v1872, %v1870
    %v1945 = vpack.c.b16 %v1875, %v1873
    %v1946 = vpack.c.b16 %v1876, %v1874
    %v1947 = vpack.c.b16 %v1879, %v1877
    %v1948 = vpack.c.b16 %v1880, %v1878
    %v1949 = vpack.c.b16 %v1883, %v1881
    %v1950 = vpack.c.b16 %v1884, %v1882
    %v1951 = vpack.c.b16 %v1887, %v1885
    %v1952 = vpack.c.b16 %v1888, %v1886
    %2017 = vmatprep.subr.bf16.mxu0 %v1904
    %2018 = vmatpush1.bf16.msra.mxu0 %v1903
    %2019 = vmatprep.subr.bf16.mxu0 %v1902
    %2020 = vmatpush1.bf16.msra.mxu0 %v1901
    %2021 = vmatprep.subr.bf16.mxu0 %v1900
    %2022 = vmatpush1.bf16.msra.mxu0 %v1899
    %2023 = vmatprep.subr.bf16.mxu0 %v1898
    %2024 = vmatpush1.bf16.msra.mxu0 %v1897
    %2025 = vmatprep.subr.bf16.mxu0 %v1896
    %2026 = vmatpush1.bf16.msra.mxu0 %v1895
    %2027 = vmatprep.subr.bf16.mxu0 %v1894
    %2028 = vmatpush1.bf16.msra.mxu0 %v1893
    %2029 = vmatprep.subr.bf16.mxu0 %v1892
    %2030 = vmatpush1.bf16.msra.mxu0 %v1891
    %2031 = vmatprep.subr.bf16.mxu0 %v1890
    %2032 = vmatpush1.bf16.msra.mxu0 %v1889
    %2033 = vmatprep.subr.bf16.mxu0 %v1920
    %2034 = vmatpush2.bf16.msra.mxu0 %v1919
    %2035 = vmatprep.subr.bf16.mxu0 %v1918
    %2036 = vmatpush2.bf16.msra.mxu0 %v1917
    %2037 = vmatprep.subr.bf16.mxu0 %v1916
    %2038 = vmatpush2.bf16.msra.mxu0 %v1915
    %2039 = vmatprep.subr.bf16.mxu0 %v1914
    %2040 = vmatpush2.bf16.msra.mxu0 %v1913
    %2041 = vmatprep.subr.bf16.mxu0 %v1912
    %2042 = vmatpush2.bf16.msra.mxu0 %v1911
    %2043 = vmatprep.subr.bf16.mxu0 %v1910
    %2044 = vmatpush2.bf16.msra.mxu0 %v1909
    %2045 = vmatprep.subr.bf16.mxu0 %v1908
    %2046 = vmatpush2.bf16.msra.mxu0 %v1907
    %2047 = vmatprep.subr.bf16.mxu0 %v1906
    %2048 = vmatpush2.bf16.msra.mxu0 %v1905
    %2049 = vmatprep.mubr.bf16.mxu0 %v1618
    %2050 = vmatmul.mubr.bf16.gmra.mxu0 %v1617
    %v2051 = vpop.f32.mrf.mxu0
    %v2052 = vadd.f32 %v1690, %v2051
    %v2053 = vpop.f32.mrf.mxu0
    %v2054 = vadd.f32 %v1694, %v2053
    %v2055 = vpop.f32.mrf.mxu0
    %v2056 = vpop.f32.mrf.mxu0
    %2057 = vdwg.mxu0
    %2058 = vmatprep.subr.bf16.mxu0 %v1936
    %2059 = vmatpush1.bf16.msra.mxu0 %v1935
    %2060 = vmatprep.subr.bf16.mxu0 %v1934
    %2061 = vmatpush1.bf16.msra.mxu0 %v1933
    %2062 = vmatprep.subr.bf16.mxu0 %v1932
    %2063 = vmatpush1.bf16.msra.mxu0 %v1931
    %2064 = vmatprep.subr.bf16.mxu0 %v1930
    %2065 = vmatpush1.bf16.msra.mxu0 %v1929
    %2066 = vmatprep.subr.bf16.mxu0 %v1928
    %2067 = vmatpush1.bf16.msra.mxu0 %v1927
    %2068 = vmatprep.subr.bf16.mxu0 %v1926
    %2069 = vmatpush1.bf16.msra.mxu0 %v1925
    %2070 = vmatprep.subr.bf16.mxu0 %v1924
    %2071 = vmatpush1.bf16.msra.mxu0 %v1923
    %2072 = vmatprep.subr.bf16.mxu0 %v1922
    %2073 = vmatpush1.bf16.msra.mxu0 %v1921
    %2074 = vmatprep.subr.bf16.mxu0 %v1952
    %2075 = vmatpush2.bf16.msra.mxu0 %v1951
    %2076 = vmatprep.subr.bf16.mxu0 %v1950
    %2077 = vmatpush2.bf16.msra.mxu0 %v1949
    %2078 = vmatprep.subr.bf16.mxu0 %v1948
    %2079 = vmatpush2.bf16.msra.mxu0 %v1947
    %2080 = vmatprep.subr.bf16.mxu0 %v1946
    %2081 = vmatpush2.bf16.msra.mxu0 %v1945
    %2082 = vmatprep.subr.bf16.mxu0 %v1944
    %2083 = vmatpush2.bf16.msra.mxu0 %v1943
    %2084 = vmatprep.subr.bf16.mxu0 %v1942
    %2085 = vmatpush2.bf16.msra.mxu0 %v1941
    %2086 = vmatprep.subr.bf16.mxu0 %v1940
    %2087 = vmatpush2.bf16.msra.mxu0 %v1939
    %2088 = vmatprep.subr.bf16.mxu0 %v1938
    %2089 = vmatpush2.bf16.msra.mxu0 %v1937
    %2090 = vmatprep.mubr.bf16.mxu0 %v1620
    %2091 = vmatmul.mubr.bf16.gmra.mxu0 %v1619
    %v2092 = vpop.f32.mrf.mxu0
    %v2093 = vadd.f32 %v2052, %v2092
    %v2094 = vpop.f32.mrf.mxu0
    %v2095 = vadd.f32 %v2054, %v2094
    %v2096 = vpop.f32.mrf.mxu0
    %v2097 = vpop.f32.mrf.mxu0
    %2098 = vdwg.mxu0
    %v2099 = vmax.f32 %v2093, 0.0
    %v2100 = vmax.f32 %v2095, 0.0
    %v2101 = vpack.c.bf16 %v2099, %v2099
    %v2102 = vpack.c.bf16 %v2100, %v2100
    %v2103 = vld [vmem:[%s5] sm:$0xf]
    %v2104 = vld [vmem:[%s5 + $0x4] sm:$0xf]
    %v2105 = vld [vmem:[%s5 + $0x8] sm:$0xf]
    %v2106 = vld [vmem:[%s5 + $0xc] sm:$0xf]
    %v2107 = vld [vmem:[%s5 + $0x10] sm:$0xf]
    %v2108 = vld [vmem:[%s5 + $0x14] sm:$0xf]
    %v2109 = vld [vmem:[%s5 + $0x18] sm:$0xf]
    %v2110 = vld [vmem:[%s5 + $0x1c] sm:$0xf]
    %v2111 = vld [vmem:[%s5 + $0x20] sm:$0xf]
    %v2112 = vld [vmem:[%s5 + $0x24] sm:$0xf]
    %v2113 = vld [vmem:[%s5 + $0x28] sm:$0xf]
    %v2114 = vld [vmem:[%s5 + $0x2c] sm:$0xf]
    %v2115 = vld [vmem:[%s5 + $0x30] sm:$0xf]
    %v2116 = vld [vmem:[%s5 + $0x34] sm:$0xf]
    %v2117 = vld [vmem:[%s5 + $0x38] sm:$0xf]
    %v2118 = vld [vmem:[%s5 + $0x3c] sm:$0xf]
    %v2119 = vld [vmem:[%s5 + $0x40] sm:$0xf]
    %v2120 = vld [vmem:[%s5 + $0x44] sm:$0xf]
    %v2121 = vld [vmem:[%s5 + $0x48] sm:$0xf]
    %v2122 = vld [vmem:[%s5 + $0x4c] sm:$0xf]
    %v2123 = vld [vmem:[%s5 + $0x50] sm:$0xf]
    %v2124 = vld [vmem:[%s5 + $0x54] sm:$0xf]
    %v2125 = vld [vmem:[%s5 + $0x58] sm:$0xf]
    %v2126 = vld [vmem:[%s5 + $0x5c] sm:$0xf]
    %v2127 = vld [vmem:[%s5 + $0x60] sm:$0xf]
    %v2128 = vld [vmem:[%s5 + $0x64] sm:$0xf]
    %v2129 = vld [vmem:[%s5 + $0x68] sm:$0xf]
    %v2130 = vld [vmem:[%s5 + $0x6c] sm:$0xf]
    %v2131 = vld [vmem:[%s5 + $0x70] sm:$0xf]
    %v2132 = vld [vmem:[%s5 + $0x74] sm:$0xf]
    %v2133 = vld [vmem:[%s5 + $0x78] sm:$0xf]
    %v2134 = vld [vmem:[%s5 + $0x7c] sm:$0xf]
    %v2135 = vld [vmem:[%s6] sm:$0x1]
    %v2137 = vlaneseq
    %v2138 = vshrl.u32 %v2137, 7
    %v2139 = vsub.s32 0, %v2138
    %v2140 = vrot.slane %v2135, %v2139
    %v2174 = vunpack.c.l.b16 %v2103
    %v2175 = vunpack.c.l.b16 %v2104
    %v2176 = vunpack.c.l.b16 %v2105
    %v2177 = vunpack.c.l.b16 %v2106
    %v2178 = vunpack.c.l.b16 %v2107
    %v2179 = vunpack.c.l.b16 %v2108
    %v2180 = vunpack.c.l.b16 %v2109
    %v2181 = vunpack.c.l.b16 %v2110
    %v2182 = vunpack.c.l.b16 %v2111
    %v2183 = vunpack.c.l.b16 %v2112
    %v2184 = vunpack.c.l.b16 %v2113
    %v2185 = vunpack.c.l.b16 %v2114
    %v2186 = vunpack.c.l.b16 %v2115
    %v2187 = vunpack.c.l.b16 %v2116
    %v2188 = vunpack.c.l.b16 %v2117
    %v2189 = vunpack.c.l.b16 %v2118
    %v2190 = vunpack.c.l.b16 %v2119
    %v2191 = vunpack.c.l.b16 %v2120
    %v2192 = vunpack.c.l.b16 %v2121
    %v2193 = vunpack.c.l.b16 %v2122
    %v2194 = vunpack.c.l.b16 %v2123
    %v2195 = vunpack.c.l.b16 %v2124
    %v2196 = vunpack.c.l.b16 %v2125
    %v2197 = vunpack.c.l.b16 %v2126
    %v2198 = vunpack.c.l.b16 %v2127
    %v2199 = vunpack.c.l.b16 %v2128
    %v2200 = vunpack.c.l.b16 %v2129
    %v2201 = vunpack.c.l.b16 %v2130
    %v2202 = vunpack.c.l.b16 %v2131
    %v2203 = vunpack.c.l.b16 %v2132
    %v2204 = vunpack.c.l.b16 %v2133
    %v2205 = vunpack.c.l.b16 %v2134
    %v2206 = vpack.c.b16 %v2175, %v2174
    %v2207 = vpack.c.b16 %v2177, %v2176
    %v2208 = vpack.c.b16 %v2179, %v2178
    %v2209 = vpack.c.b16 %v2181, %v2180
    %v2210 = vpack.c.b16 %v2183, %v2182
    %v2211 = vpack.c.b16 %v2185, %v2184
    %v2212 = vpack.c.b16 %v2187, %v2186
    %v2213 = vpack.c.b16 %v2189, %v2188
    %v2214 = vpack.c.b16 %v2191, %v2190
    %v2215 = vpack.c.b16 %v2193, %v2192
    %v2216 = vpack.c.b16 %v2195, %v2194
    %v2217 = vpack.c.b16 %v2197, %v2196
    %v2218 = vpack.c.b16 %v2199, %v2198
    %v2219 = vpack.c.b16 %v2201, %v2200
    %v2220 = vpack.c.b16 %v2203, %v2202
    %v2221 = vpack.c.b16 %v2205, %v2204
    %2238 = vmatprep.subr.bf16.mxu0 0
    %2239 = vmatpush1.bf16.msra.mxu0 %v2213
    %2240 = vmatprep.subr.bf16.mxu0 0
    %2241 = vmatpush1.bf16.msra.mxu0 %v2212
    %2242 = vmatprep.subr.bf16.mxu0 0
    %2243 = vmatpush1.bf16.msra.mxu0 %v2211
    %2244 = vmatprep.subr.bf16.mxu0 0
    %2245 = vmatpush1.bf16.msra.mxu0 %v2210
    %2246 = vmatprep.subr.bf16.mxu0 0
    %2247 = vmatpush1.bf16.msra.mxu0 %v2209
    %2248 = vmatprep.subr.bf16.mxu0 0
    %2249 = vmatpush1.bf16.msra.mxu0 %v2208
    %2250 = vmatprep.subr.bf16.mxu0 0
    %2251 = vmatpush1.bf16.msra.mxu0 %v2207
    %2252 = vmatprep.subr.bf16.mxu0 0
    %2253 = vmatpush1.bf16.msra.mxu0 %v2206
    %2254 = vmatprep.subr.bf16.mxu0 0
    %2255 = vmatpush2.bf16.msra.mxu0 %v2221
    %2256 = vmatprep.subr.bf16.mxu0 0
    %2257 = vmatpush2.bf16.msra.mxu0 %v2220
    %2258 = vmatprep.subr.bf16.mxu0 0
    %2259 = vmatpush2.bf16.msra.mxu0 %v2219
    %2260 = vmatprep.subr.bf16.mxu0 0
    %2261 = vmatpush2.bf16.msra.mxu0 %v2218
    %2262 = vmatprep.subr.bf16.mxu0 0
    %2263 = vmatpush2.bf16.msra.mxu0 %v2217
    %2264 = vmatprep.subr.bf16.mxu0 0
    %2265 = vmatpush2.bf16.msra.mxu0 %v2216
    %2266 = vmatprep.subr.bf16.mxu0 0
    %2267 = vmatpush2.bf16.msra.mxu0 %v2215
    %2268 = vmatprep.subr.bf16.mxu0 0
    %2269 = vmatpush2.bf16.msra.mxu0 %v2214
    %2270 = vmatprep.mubr.bf16.mxu0 %v2102
    %2271 = vmatmul.mubr.bf16.gmra.mxu0 %v2101
    %v2272 = vpop.f32.mrf.mxu0
    %v2273 = vadd.f32 %v2140, %v2272
    %v2274 = vpop.f32.mrf.mxu0
    %v2275 = vpop.f32.mrf.mxu0
    %v2276 = vpop.f32.mrf.mxu0
    %2277 = vdwg.mxu0
    %2278 = vst [vmem:[%s7] sm:$0xff] %v2273
    // Predicated region
    $region38: #{_forward_impl.1} parent=1 // pred_check
      _
    $region39: #{_forward_impl.1} parent=1 // pred_check_branch
      %2280 = sbr.rel (0) target = $region41
    $region40: #{_forward_impl.1} parent=1 // pred_region
      _
    $region41: #{_forward_impl.1} parent=1 // pred_fallthru
      _
    // Predicated region
    $region42: #{_forward_impl.1} parent=1 // pred_check
      _
    $region43: #{_forward_impl.1} parent=1 // pred_check_branch
      %2282 = sbr.rel (0) target = $region45
    $region44: #{_forward_impl.1} parent=1 // pred_region
      _
    $region45: #{_forward_impl.1} parent=1 // pred_fallthru
      _
    %2283 = vsyncpa [#allocation3], 1
    %2284 = vsyncpa [#allocation5], 1

// kernel: _forward_impl.1
$region0: #{_forward_impl.1}
  #allocation0 [shape = 'u32[]', space=smem, size = 0x4, offset = 0x4, fixed_abs, tag = 'smem constant byte address 0x4 - core index']
  #allocation1 [shape = 'u32[144,128]{1,0:T(1,128)}', space=vmem, size = 0x12000, scoped, tag = 'internal scratch']
  %s0 = inlined_call_operand.vmem [shape: bf16[8,784], index: 0, kind: input, shape index: {}]
  %s1 = inlined_call_operand.hbm [shape: bf16[784,512], index: 1, kind: input, shape index: {}]
  %s2 = inlined_call_operand.vmem [shape: f32[1,512], index: 2, kind: input, shape index: {}]
  %s3 = inlined_call_operand.hbm [shape: bf16[512,256], index: 3, kind: input, shape index: {}]
  %s4 = inlined_call_operand.vmem [shape: f32[1,256], index: 4, kind: input, shape index: {}]
  %s5 = inlined_call_operand.vmem [shape: bf16[256,128], index: 5, kind: input, shape index: {}]
  %s6 = inlined_call_operand.vmem [shape: f32[1,128], index: 6, kind: input, shape index: {}]
  %s7 = inlined_call_operand.vmem [shape: f32[8,128], index: 7, kind: output, shape index: {}]
  %s8 = sld [smem:[#allocation0]]
  $region46: #{_forward_impl.1} parent=0
    _
  %s10 = ssub.s32 1, %s8
  %s11 = scalar_select 0, %s10, %s8
  $region1: #{_forward_impl.1} parent=0
    #allocation2 [shape = 'u8[802816]{0}', space=vmem, size = 0xc4000, scoped, tag = 'input window, operand 1, single buffered']
    #allocation3 [shape = 's32[1]{0}', space=sflag, size = 0x4, scoped, tag = 'scoped memory for _forward_impl.1']
    #allocation4 [shape = 'u8[262144]{0}', space=vmem, size = 0x40000, scoped, tag = 'input window, operand 3, single buffered']
    #allocation5 [shape = 's32[1]{0}', space=sflag, size = 0x4, scoped, tag = 'scoped memory for _forward_impl.1']
    %12 = vsyncpa [#allocation3], 0
    %13 = vsyncpa [#allocation5], 0
    // Predicated region
    $region2: #{_forward_impl.1} parent=1 // pred_check
      _
    $region3: #{_forward_impl.1} parent=1 // pred_check_branch
      %15 = sbr.rel (0) target = $region5
    $region4: #{_forward_impl.1} parent=1 // pred_region
      _
    $region5: #{_forward_impl.1} parent=1 // pred_fallthru
      _
    // Predicated region
    $region6: #{_forward_impl.1} parent=1 // pred_check
      _
    $region7: #{_forward_impl.1} parent=1 // pred_check_branch
      %17 = sbr.rel (0) target = $region9
    $region8: #{_forward_impl.1} parent=1 // pred_region
      %s19 = ssub.s32 25088, 25088
      %20 = vsyncadd [#allocation3], %s19
      %s21 = sshll.u32 [#allocation2], 4
      %s22 = int_to_ptr.vmem [resolvable:$true] %s21
      %27 = dma.hbm_to_vmem [thread:$0]  %s1, 25088, %s22, [#allocation3], 256, 256, 16
    $region9: #{_forward_impl.1} parent=1 // pred_fallthru
      _
    // Predicated region
    $region10: #{_forward_impl.1} parent=1 // pred_check
      _
    $region11: #{_forward_impl.1} parent=1 // pred_check_branch
      %29 = sbr.rel (0) target = $region13
    $region12: #{_forward_impl.1} parent=1 // pred_region
      _
    $region13: #{_forward_impl.1} parent=1 // pred_fallthru
      _
    // Predicated region
    $region14: #{_forward_impl.1} parent=1 // pred_check
      _
    $region15: #{_forward_impl.1} parent=1 // pred_check_branch
      %31 = sbr.rel (0) target = $region17
    $region16: #{_forward_impl.1} parent=1 // pred_region
      %s33 = ssub.s32 8192, 8192
      %34 = vsyncadd [#allocation5], %s33
      %s35 = sshll.u32 [#allocation4], 4
      %s36 = int_to_ptr.vmem [resolvable:$true] %s35
      %41 = dma.hbm_to_vmem [thread:$0]  %s3, 8192, %s36, [#allocation5], 128, 128, 8
    $region17: #{_forward_impl.1} parent=1 // pred_fallthru
      _
    // Predicated region
    $region18: #{_forward_impl.1} parent=1 // pred_check
      _
    $region19: #{_forward_impl.1} parent=1 // pred_check_branch
      %43 = sbr.rel (0) target = $region21
    $region20: #{_forward_impl.1} parent=1 // pred_region
      _
    $region21: #{_forward_impl.1} parent=1 // pred_fallthru
      _
    // Predicated region
    $region22: #{_forward_impl.1} parent=1 // pred_check
      _
    $region23: #{_forward_impl.1} parent=1 // pred_check_branch
      %45 = sbr.rel (0) target = $region25
    $region24: #{_forward_impl.1} parent=1 // pred_region
      _
    $region25: #{_forward_impl.1} parent=1 // pred_fallthru
      _
    // Predicated region
    $region26: #{_forward_impl.1} parent=1 // pred_check
      _
    $region27: #{_forward_impl.1} parent=1 // pred_check_branch
      %47 = sbr.rel (0) target = $region29
    $region28: #{_forward_impl.1} parent=1 // pred_region
      _
    $region29: #{_forward_impl.1} parent=1 // pred_fallthru
      _
    // Predicated region
    $region30: #{_forward_impl.1} parent=1 // pred_check
      _
    $region31: #{_forward_impl.1} parent=1 // pred_check_branch
      %49 = sbr.rel (0) target = $region33
    $region32: #{_forward_impl.1} parent=1 // pred_region
      %50 = dma.done [#allocation3], 25088
    $region33: #{_forward_impl.1} parent=1 // pred_fallthru
      _
    // Predicated region
    $region34: #{_forward_impl.1} parent=1 // pred_check
      _
    $region35: #{_forward_impl.1} parent=1 // pred_check_branch
      %52 = sbr.rel (0) target = $region37
    $region36: #{_forward_impl.1} parent=1 // pred_region
      %53 = dma.done [#allocation5], 8192
    $region37: #{_forward_impl.1} parent=1 // pred_fallthru
      _
    %v55 = vld [vmem:[%s0] sm:$0xff]
    %v56 = vld [vmem:[%s0 + $0x8] sm:$0xff]
    %v57 = vld [vmem:[%s0 + $0x10] sm:$0xff]
    %v58 = vld [vmem:[%s0 + $0x18] sm:$0xf]
    %v59 = vld [vmem:[#allocation2] sm:$0xff]
    %v60 = vld [vmem:[#allocation2 + $0x8] sm:$0xff]
    %v61 = vld [vmem:[#allocation2 + $0x10] sm:$0xff]
    %v62 = vld [vmem:[#allocation2 + $0x18] sm:$0xff]
    %v63 = vld [vmem:[#allocation2 + $0x20] sm:$0xff]
    %v64 = vld [vmem:[#allocation2 + $0x28] sm:$0xff]
    %v65 = vld [vmem:[#allocation2 + $0x30] sm:$0xff]
    %v66 = vld [vmem:[#allocation2 + $0x38] sm:$0xff]
    %v67 = vld [vmem:[#allocation2 + $0x40] sm:$0xff]
    %v68 = vld [vmem:[#allocation2 + $0x48] sm:$0xff]
    %v69 = vld [vmem:[#allocation2 + $0x50] sm:$0xff]
    %v70 = vld [vmem:[#allocation2 + $0x58] sm:$0xff]
    %v71 = vld [vmem:[#allocation2 + $0x60] sm:$0xff]
    %v72 = vld [vmem:[#allocation2 + $0x68] sm:$0xff]
    %v73 = vld [vmem:[#allocation2 + $0x70] sm:$0xff]
    %v74 = vld [vmem:[#allocation2 + $0x78] sm:$0xff]
    %v75 = vld [vmem:[#allocation2 + $0x80] sm:$0xff]
    %v76 = vld [vmem:[#allocation2 + $0x88] sm:$0xff]
    %v77 = vld [vmem:[#allocation2 + $0x90] sm:$0xff]
    %v78 = vld [vmem:[#allocation2 + $0x98] sm:$0xff]
    %v79 = vld [vmem:[#allocation2 + $0xa0] sm:$0xff]
    %v80 = vld [vmem:[#allocation2 + $0xa8] sm:$0xff]
    %v81 = vld [vmem:[#allocation2 + $0xb0] sm:$0xff]
    %v82 = vld [vmem:[#allocation2 + $0xb8] sm:$0xff]
    %v83 = vld [vmem:[#allocation2 + $0xc0] sm:$0xff]
    %v84 = vld [vmem:[#allocation2 + $0xc8] sm:$0xff]
    %v85 = vld [vmem:[#allocation2 + $0xd0] sm:$0xff]
    %v86 = vld [vmem:[#allocation2 + $0xd8] sm:$0xff]
    %v87 = vld [vmem:[#allocation2 + $0xe0] sm:$0xff]
    %v88 = vld [vmem:[#allocation2 + $0xe8] sm:$0xff]
    %v89 = vld [vmem:[#allocation2 + $0xf0] sm:$0xff]
    %v90 = vld [vmem:[#allocation2 + $0xf8] sm:$0xff]
    %v91 = vld [vmem:[#allocation2 + $0x100] sm:$0xff]
    %v92 = vld [vmem:[#allocation2 + $0x108] sm:$0xff]
    %v93 = vld [vmem:[#allocation2 + $0x110] sm:$0xff]
    %v94 = vld [vmem:[#allocation2 + $0x118] sm:$0xff]
    %v95 = vld [vmem:[#allocation2 + $0x120] sm:$0xff]
    %v96 = vld [vmem:[#allocation2 + $0x128] sm:$0xff]
    %v97 = vld [vmem:[#allocation2 + $0x130] sm:$0xff]
    %v98 = vld [vmem:[#allocation2 + $0x138] sm:$0xff]
    %v99 = vld [vmem:[#allocation2 + $0x140] sm:$0xff]
    %v100 = vld [vmem:[#allocation2 + $0x148] sm:$0xff]
    %v101 = vld [vmem:[#allocation2 + $0x150] sm:$0xff]
    %v102 = vld [vmem:[#allocation2 + $0x158] sm:$0xff]
    %v103 = vld [vmem:[#allocation2 + $0x160] sm:$0xff]
    %v104 = vld [vmem:[#allocation2 + $0x168] sm:$0xff]
    %v105 = vld [vmem:[#allocation2 + $0x170] sm:$0xff]
    %v106 = vld [vmem:[#allocation2 + $0x178] sm:$0xff]
    %v107 = vld [vmem:[#allocation2 + $0x180] sm:$0xff]
    %v108 = vld [vmem:[#allocation2 + $0x188] sm:$0xff]
    %v109 = vld [vmem:[#allocation2 + $0x190] sm:$0xff]
    %v110 = vld [vmem:[#allocation2 + $0x198] sm:$0xff]
    %v111 = vld [vmem:[#allocation2 + $0x1a0] sm:$0xff]
    %v112 = vld [vmem:[#allocation2 + $0x1a8] sm:$0xff]
    %v113 = vld [vmem:[#allocation2 + $0x1b0] sm:$0xff]
    %v114 = vld [vmem:[#allocation2 + $0x1b8] sm:$0xff]
    %v115 = vld [vmem:[#allocation2 + $0x1c0] sm:$0xff]
    %v116 = vld [vmem:[#allocation2 + $0x1c8] sm:$0xff]
    %v117 = vld [vmem:[#allocation2 + $0x1d0] sm:$0xff]
    %v118 = vld [vmem:[#allocation2 + $0x1d8] sm:$0xff]
    %v119 = vld [vmem:[#allocation2 + $0x1e0] sm:$0xff]
    %v120 = vld [vmem:[#allocation2 + $0x1e8] sm:$0xff]
    %v121 = vld [vmem:[#allocation2 + $0x1f0] sm:$0xff]
    %v122 = vld [vmem:[#allocation2 + $0x1f8] sm:$0xff]
    %v123 = vld [vmem:[#allocation2 + $0x200] sm:$0xff]
    %v124 = vld [vmem:[#allocation2 + $0x208] sm:$0xff]
    %v125 = vld [vmem:[#allocation2 + $0x210] sm:$0xff]
    %v126 = vld [vmem:[#allocation2 + $0x218] sm:$0xff]
    %v127 = vld [vmem:[#allocation2 + $0x220] sm:$0xff]
    %v128 = vld [vmem:[#allocation2 + $0x228] sm:$0xff]
    %v129 = vld [vmem:[#allocation2 + $0x230] sm:$0xff]
    %v130 = vld [vmem:[#allocation2 + $0x238] sm:$0xff]
    %v131 = vld [vmem:[#allocation2 + $0x240] sm:$0xff]
    %v132 = vld [vmem:[#allocation2 + $0x248] sm:$0xff]
    %v133 = vld [vmem:[#allocation2 + $0x250] sm:$0xff]
    %v134 = vld [vmem:[#allocation2 + $0x258] sm:$0xff]
    %v135 = vld [vmem:[#allocation2 + $0x260] sm:$0xff]
    %v136 = vld [vmem:[#allocation2 + $0x268] sm:$0xff]
    %v137 = vld [vmem:[#allocation2 + $0x270] sm:$0xff]
    %v138 = vld [vmem:[#allocation2 + $0x278] sm:$0xff]
    %v139 = vld [vmem:[#allocation2 + $0x280] sm:$0xff]
    %v140 = vld [vmem:[#allocation2 + $0x288] sm:$0xff]
    %v141 = vld [vmem:[#allocation2 + $0x290] sm:$0xff]
    %v142 = vld [vmem:[#allocation2 + $0x298] sm:$0xff]
    %v143 = vld [vmem:[#allocation2 + $0x2a0] sm:$0xff]
    %v144 = vld [vmem:[#allocation2 + $0x2a8] sm:$0xff]
    %v145 = vld [vmem:[#allocation2 + $0x2b0] sm:$0xff]
    %v146 = vld [vmem:[#allocation2 + $0x2b8] sm:$0xff]
    %v147 = vld [vmem:[#allocation2 + $0x2c0] sm:$0xff]
    %v148 = vld [vmem:[#allocation2 + $0x2c8] sm:$0xff]
    %v149 = vld [vmem:[#allocation2 + $0x2d0] sm:$0xff]
    %v150 = vld [vmem:[#allocation2 + $0x2d8] sm:$0xff]
    %v151 = vld [vmem:[#allocation2 + $0x2e0] sm:$0xff]
    %v152 = vld [vmem:[#allocation2 + $0x2e8] sm:$0xff]
    %v153 = vld [vmem:[#allocation2 + $0x2f0] sm:$0xff]
    %v154 = vld [vmem:[#allocation2 + $0x2f8] sm:$0xff]
    %v155 = vld [vmem:[#allocation2 + $0x300] sm:$0xff]
    %v156 = vld [vmem:[#allocation2 + $0x308] sm:$0xff]
    %v157 = vld [vmem:[#allocation2 + $0x310] sm:$0xff]
    %v158 = vld [vmem:[#allocation2 + $0x318] sm:$0xff]
    %v159 = vld [vmem:[#allocation2 + $0x320] sm:$0xff]
    %v160 = vld [vmem:[#allocation2 + $0x328] sm:$0xff]
    %v161 = vld [vmem:[#allocation2 + $0x330] sm:$0xff]
    %v162 = vld [vmem:[#allocation2 + $0x338] sm:$0xff]
    %v163 = vld [vmem:[#allocation2 + $0x340] sm:$0xff]
    %v164 = vld [vmem:[#allocation2 + $0x348] sm:$0xff]
    %v165 = vld [vmem:[#allocation2 + $0x350] sm:$0xff]
    %v166 = vld [vmem:[#allocation2 + $0x358] sm:$0xff]
    %v167 = vld [vmem:[#allocation2 + $0x360] sm:$0xff]
    %v168 = vld [vmem:[#allocation2 + $0x368] sm:$0xff]
    %v169 = vld [vmem:[#allocation2 + $0x370] sm:$0xff]
    %v170 = vld [vmem:[#allocation2 + $0x378] sm:$0xff]
    %v171 = vld [vmem:[#allocation2 + $0x380] sm:$0xff]
    %v172 = vld [vmem:[#allocation2 + $0x388] sm:$0xff]
    %v173 = vld [vmem:[#allocation2 + $0x390] sm:$0xff]
    %v174 = vld [vmem:[#allocation2 + $0x398] sm:$0xff]
    %v175 = vld [vmem:[#allocation2 + $0x3a0] sm:$0xff]
    %v176 = vld [vmem:[#allocation2 + $0x3a8] sm:$0xff]
    %v177 = vld [vmem:[#allocation2 + $0x3b0] sm:$0xff]
    %v178 = vld [vmem:[#allocation2 + $0x3b8] sm:$0xff]
    %v179 = vld [vmem:[#allocation2 + $0x3c0] sm:$0xff]
    %v180 = vld [vmem:[#allocation2 + $0x3c8] sm:$0xff]
    %v181 = vld [vmem:[#allocation2 + $0x3d0] sm:$0xff]
    %v182 = vld [vmem:[#allocation2 + $0x3d8] sm:$0xff]
    %v183 = vld [vmem:[#allocation2 + $0x3e0] sm:$0xff]
    %v184 = vld [vmem:[#allocation2 + $0x3e8] sm:$0xff]
    %v185 = vld [vmem:[#allocation2 + $0x3f0] sm:$0xff]
    %v186 = vld [vmem:[#allocation2 + $0x3f8] sm:$0xff]
    %v187 = vld [vmem:[#allocation2 + $0x400] sm:$0xff]
    %v188 = vld [vmem:[#allocation2 + $0x408] sm:$0xff]
    %v189 = vld [vmem:[#allocation2 + $0x410] sm:$0xff]
    %v190 = vld [vmem:[#allocation2 + $0x418] sm:$0xff]
    %v191 = vld [vmem:[#allocation2 + $0x420] sm:$0xff]
    %v192 = vld [vmem:[#allocation2 + $0x428] sm:$0xff]
    %v193 = vld [vmem:[#allocation2 + $0x430] sm:$0xff]
    %v194 = vld [vmem:[#allocation2 + $0x438] sm:$0xff]
    %v195 = vld [vmem:[#allocation2 + $0x440] sm:$0xff]
    %v196 = vld [vmem:[#allocation2 + $0x448] sm:$0xff]
    %v197 = vld [vmem:[#allocation2 + $0x450] sm:$0xff]
    %v198 = vld [vmem:[#allocation2 + $0x458] sm:$0xff]
    %v199 = vld [vmem:[#allocation2 + $0x460] sm:$0xff]
    %v200 = vld [vmem:[#allocation2 + $0x468] sm:$0xff]
    %v201 = vld [vmem:[#allocation2 + $0x470] sm:$0xff]
    %v202 = vld [vmem:[#allocation2 + $0x478] sm:$0xff]
    %v203 = vld [vmem:[#allocation2 + $0x480] sm:$0xff]
    %v204 = vld [vmem:[#allocation2 + $0x488] sm:$0xff]
    %v205 = vld [vmem:[#allocation2 + $0x490] sm:$0xff]
    %v206 = vld [vmem:[#allocation2 + $0x498] sm:$0xff]
    %v207 = vld [vmem:[#allocation2 + $0x4a0] sm:$0xff]
    %v208 = vld [vmem:[#allocation2 + $0x4a8] sm:$0xff]
    %v209 = vld [vmem:[#allocation2 + $0x4b0] sm:$0xff]
    %v210 = vld [vmem:[#allocation2 + $0x4b8] sm:$0xff]
    %v211 = vld [vmem:[#allocation2 + $0x4c0] sm:$0xff]
    %v212 = vld [vmem:[#allocation2 + $0x4c8] sm:$0xff]
    %v213 = vld [vmem:[#allocation2 + $0x4d0] sm:$0xff]
    %v214 = vld [vmem:[#allocation2 + $0x4d8] sm:$0xff]
    %v215 = vld [vmem:[#allocation2 + $0x4e0] sm:$0xff]
    %v216 = vld [vmem:[#allocation2 + $0x4e8] sm:$0xff]
    %v217 = vld [vmem:[#allocation2 + $0x4f0] sm:$0xff]
    %v218 = vld [vmem:[#allocation2 + $0x4f8] sm:$0xff]
    %v219 = vld [vmem:[#allocation2 + $0x500] sm:$0xff]
    %v220 = vld [vmem:[#allocation2 + $0x508] sm:$0xff]
    %v221 = vld [vmem:[#allocation2 + $0x510] sm:$0xff]
    %v222 = vld [vmem:[#allocation2 + $0x518] sm:$0xff]
    %v223 = vld [vmem:[#allocation2 + $0x520] sm:$0xff]
    %v224 = vld [vmem:[#allocation2 + $0x528] sm:$0xff]
    %v225 = vld [vmem:[#allocation2 + $0x530] sm:$0xff]
    %v226 = vld [vmem:[#allocation2 + $0x538] sm:$0xff]
    %v227 = vld [vmem:[#allocation2 + $0x540] sm:$0xff]
    %v228 = vld [vmem:[#allocation2 + $0x548] sm:$0xff]
    %v229 = vld [vmem:[#allocation2 + $0x550] sm:$0xff]
    %v230 = vld [vmem:[#allocation2 + $0x558] sm:$0xff]
    %v231 = vld [vmem:[#allocation2 + $0x560] sm:$0xff]
    %v232 = vld [vmem:[#allocation2 + $0x568] sm:$0xff]
    %v233 = vld [vmem:[#allocation2 + $0x570] sm:$0xff]
    %v234 = vld [vmem:[#allocation2 + $0x578] sm:$0xff]
    %v235 = vld [vmem:[#allocation2 + $0x580] sm:$0xff]
    %v236 = vld [vmem:[#allocation2 + $0x588] sm:$0xff]
    %v237 = vld [vmem:[#allocation2 + $0x590] sm:$0xff]
    %v238 = vld [vmem:[#allocation2 + $0x598] sm:$0xff]
    %v239 = vld [vmem:[#allocation2 + $0x5a0] sm:$0xff]
    %v240 = vld [vmem:[#allocation2 + $0x5a8] sm:$0xff]
    %v241 = vld [vmem:[#allocation2 + $0x5b0] sm:$0xff]
    %v242 = vld [vmem:[#allocation2 + $0x5b8] sm:$0xff]
    %v243 = vld [vmem:[#allocation2 + $0x5c0] sm:$0xff]
    %v244 = vld [vmem:[#allocation2 + $0x5c8] sm:$0xff]
    %v245 = vld [vmem:[#allocation2 + $0x5d0] sm:$0xff]
    %v246 = vld [vmem:[#allocation2 + $0x5d8] sm:$0xff]
    %v247 = vld [vmem:[#allocation2 + $0x5e0] sm:$0xff]
    %v248 = vld [vmem:[#allocation2 + $0x5e8] sm:$0xff]
    %v249 = vld [vmem:[#allocation2 + $0x5f0] sm:$0xff]
    %v250 = vld [vmem:[#allocation2 + $0x5f8] sm:$0xff]
    %v251 = vld [vmem:[#allocation2 + $0x600] sm:$0xff]
    %v252 = vld [vmem:[#allocation2 + $0x608] sm:$0xff]
    %v253 = vld [vmem:[#allocation2 + $0x610] sm:$0xff]
    %v254 = vld [vmem:[#allocation2 + $0x618] sm:$0xff]
    %v255 = vld [vmem:[%s2] sm:$0xf]
    %v257 = vlaneseq
    %v258 = vshrl.u32 %v257, 7
    %v259 = vsub.s32 0, %v258
    %v260 = vrot.slane %v255, %v259
    %v261 = vlaneseq
    %v262 = vshrl.u32 %v261, 7
    %v263 = vsub.s32 1, %v262
    %v264 = vrot.slane %v255, %v263
    %v265 = vlaneseq
    %v266 = vshrl.u32 %v265, 7
    %v267 = vsub.s32 2, %v266
    %v268 = vrot.slane %v255, %v267
    %v269 = vlaneseq
    %v270 = vshrl.u32 %v269, 7
    %v271 = vsub.s32 3, %v270
    %v272 = vrot.slane %v255, %v271
    %v281 = vunpack.c.l.b16 %v55
    %v282 = vunpack.c.h.b16 %v55
    %v283 = vunpack.c.l.b16 %v56
    %v284 = vunpack.c.h.b16 %v56
    %v285 = vunpack.c.l.b16 %v57
    %v286 = vunpack.c.h.b16 %v57
    %v287 = vunpack.c.l.b16 %v58
    %v288 = vpack.c.b16 %v281, %v281
    %v289 = vpack.c.b16 %v282, %v282
    %v290 = vpack.c.b16 %v283, %v283
    %v291 = vpack.c.b16 %v284, %v284
    %v292 = vpack.c.b16 %v285, %v285
    %v293 = vpack.c.b16 %v286, %v286
    %v294 = vpack.c.b16 %v287, %v287
    %v497 = vunpack.c.l.b16 %v59
    %v498 = vunpack.c.h.b16 %v59
    %v499 = vunpack.c.l.b16 %v60
    %v500 = vunpack.c.h.b16 %v60
    %v501 = vunpack.c.l.b16 %v61
    %v502 = vunpack.c.h.b16 %v61
    %v503 = vunpack.c.l.b16 %v62
    %v504 = vunpack.c.h.b16 %v62
    %v505 = vunpack.c.l.b16 %v63
    %v506 = vunpack.c.h.b16 %v63
    %v507 = vunpack.c.l.b16 %v64
    %v508 = vunpack.c.h.b16 %v64
    %v509 = vunpack.c.l.b16 %v65
    %v510 = vunpack.c.h.b16 %v65
    %v511 = vunpack.c.l.b16 %v66
    %v512 = vunpack.c.h.b16 %v66
    %v513 = vunpack.c.l.b16 %v67
    %v514 = vunpack.c.h.b16 %v67
    %v515 = vunpack.c.l.b16 %v68
    %v516 = vunpack.c.h.b16 %v68
    %v517 = vunpack.c.l.b16 %v69
    %v518 = vunpack.c.h.b16 %v69
    %v519 = vunpack.c.l.b16 %v70
    %v520 = vunpack.c.h.b16 %v70
    %v521 = vunpack.c.l.b16 %v71
    %v522 = vunpack.c.h.b16 %v71
    %v523 = vunpack.c.l.b16 %v72
    %v524 = vunpack.c.h.b16 %v72
    %v525 = vunpack.c.l.b16 %v73
    %v526 = vunpack.c.h.b16 %v73
    %v527 = vunpack.c.l.b16 %v74
    %v528 = vunpack.c.h.b16 %v74
    %v529 = vunpack.c.l.b16 %v75
    %v530 = vunpack.c.h.b16 %v75
    %v531 = vunpack.c.l.b16 %v76
    %v532 = vunpack.c.h.b16 %v76
    %v533 = vunpack.c.l.b16 %v77
    %v534 = vunpack.c.h.b16 %v77
    %v535 = vunpack.c.l.b16 %v78
    %v536 = vunpack.c.h.b16 %v78
    %v537 = vunpack.c.l.b16 %v79
    %v538 = vunpack.c.h.b16 %v79
    %v539 = vunpack.c.l.b16 %v80
    %v540 = vunpack.c.h.b16 %v80
    %v541 = vunpack.c.l.b16 %v81
    %v542 = vunpack.c.h.b16 %v81
    %v543 = vunpack.c.l.b16 %v82
    %v544 = vunpack.c.h.b16 %v82
    %v545 = vunpack.c.l.b16 %v83
    %v546 = vunpack.c.h.b16 %v83
    %v547 = vunpack.c.l.b16 %v84
    %v548 = vunpack.c.h.b16 %v84
    %v549 = vunpack.c.l.b16 %v85
    %v550 = vunpack.c.h.b16 %v85
    %v551 = vunpack.c.l.b16 %v86
    %v552 = vunpack.c.h.b16 %v86
    %v553 = vunpack.c.l.b16 %v87
    %v554 = vunpack.c.h.b16 %v87
    %v555 = vunpack.c.l.b16 %v88
    %v556 = vunpack.c.h.b16 %v88
    %v557 = vunpack.c.l.b16 %v89
    %v558 = vunpack.c.h.b16 %v89
    %v559 = vunpack.c.l.b16 %v90
    %v560 = vunpack.c.h.b16 %v90
    %v561 = vunpack.c.l.b16 %v91
    %v562 = vunpack.c.h.b16 %v91
    %v563 = vunpack.c.l.b16 %v92
    %v564 = vunpack.c.h.b16 %v92
    %v565 = vunpack.c.l.b16 %v93
    %v566 = vunpack.c.h.b16 %v93
    %v567 = vunpack.c.l.b16 %v94
    %v568 = vunpack.c.h.b16 %v94
    %v569 = vunpack.c.l.b16 %v95
    %v570 = vunpack.c.h.b16 %v95
    %v571 = vunpack.c.l.b16 %v96
    %v572 = vunpack.c.h.b16 %v96
    %v573 = vunpack.c.l.b16 %v97
    %v574 = vunpack.c.h.b16 %v97
    %v575 = vunpack.c.l.b16 %v98
    %v576 = vunpack.c.h.b16 %v98
    %v577 = vunpack.c.l.b16 %v99
    %v578 = vunpack.c.h.b16 %v99
    %v579 = vunpack.c.l.b16 %v100
    %v580 = vunpack.c.h.b16 %v100
    %v581 = vunpack.c.l.b16 %v101
    %v582 = vunpack.c.h.b16 %v101
    %v583 = vunpack.c.l.b16 %v102
    %v584 = vunpack.c.h.b16 %v102
    %v585 = vunpack.c.l.b16 %v103
    %v586 = vunpack.c.h.b16 %v103
    %v587 = vunpack.c.l.b16 %v104
    %v588 = vunpack.c.h.b16 %v104
    %v589 = vunpack.c.l.b16 %v105
    %v590 = vunpack.c.h.b16 %v105
    %v591 = vunpack.c.l.b16 %v106
    %v592 = vunpack.c.h.b16 %v106
    %v593 = vunpack.c.l.b16 %v107
    %v594 = vunpack.c.h.b16 %v107
    %v595 = vunpack.c.l.b16 %v108
    %v596 = vunpack.c.h.b16 %v108
    %v597 = vunpack.c.l.b16 %v109
    %v598 = vunpack.c.h.b16 %v109
    %v599 = vunpack.c.l.b16 %v110
    %v600 = vunpack.c.h.b16 %v110
    %v601 = vunpack.c.l.b16 %v111
    %v602 = vunpack.c.h.b16 %v111
    %v603 = vunpack.c.l.b16 %v112
    %v604 = vunpack.c.h.b16 %v112
    %v605 = vunpack.c.l.b16 %v113
    %v606 = vunpack.c.h.b16 %v113
    %v607 = vunpack.c.l.b16 %v114
    %v608 = vunpack.c.h.b16 %v114
    %v609 = vunpack.c.l.b16 %v115
    %v610 = vunpack.c.h.b16 %v115
    %v611 = vunpack.c.l.b16 %v116
    %v612 = vunpack.c.h.b16 %v116
    %v613 = vunpack.c.l.b16 %v117
    %v614 = vunpack.c.h.b16 %v117
    %v615 = vunpack.c.l.b16 %v118
    %v616 = vunpack.c.h.b16 %v118
    %v617 = vunpack.c.l.b16 %v119
    %v618 = vunpack.c.h.b16 %v119
    %v619 = vunpack.c.l.b16 %v120
    %v620 = vunpack.c.h.b16 %v120
    %v621 = vunpack.c.l.b16 %v121
    %v622 = vunpack.c.h.b16 %v121
    %v623 = vunpack.c.l.b16 %v122
    %v624 = vunpack.c.h.b16 %v122
    %v625 = vunpack.c.l.b16 %v123
    %v626 = vunpack.c.h.b16 %v123
    %v627 = vunpack.c.l.b16 %v124
    %v628 = vunpack.c.h.b16 %v124
    %v629 = vunpack.c.l.b16 %v125
    %v630 = vunpack.c.h.b16 %v125
    %v631 = vunpack.c.l.b16 %v126
    %v632 = vunpack.c.h.b16 %v126
    %v633 = vunpack.c.l.b16 %v127
    %v634 = vunpack.c.h.b16 %v127
    %v635 = vunpack.c.l.b16 %v128
    %v636 = vunpack.c.h.b16 %v128
    %v637 = vunpack.c.l.b16 %v129
    %v638 = vunpack.c.h.b16 %v129
    %v639 = vunpack.c.l.b16 %v130
    %v640 = vunpack.c.h.b16 %v130
    %v641 = vunpack.c.l.b16 %v131
    %v642 = vunpack.c.h.b16 %v131
    %v643 = vunpack.c.l.b16 %v132
    %v644 = vunpack.c.h.b16 %v132
    %v645 = vunpack.c.l.b16 %v133
    %v646 = vunpack.c.h.b16 %v133
    %v647 = vunpack.c.l.b16 %v134
    %v648 = vunpack.c.h.b16 %v134
    %v649 = vunpack.c.l.b16 %v135
    %v650 = vunpack.c.h.b16 %v135
    %v651 = vunpack.c.l.b16 %v136
    %v652 = vunpack.c.h.b16 %v136
    %v653 = vunpack.c.l.b16 %v137
    %v654 = vunpack.c.h.b16 %v137
    %v655 = vunpack.c.l.b16 %v138
    %v656 = vunpack.c.h.b16 %v138
    %v657 = vunpack.c.l.b16 %v139
    %v658 = vunpack.c.h.b16 %v139
    %v659 = vunpack.c.l.b16 %v140
    %v660 = vunpack.c.h.b16 %v140
    %v661 = vunpack.c.l.b16 %v141
    %v662 = vunpack.c.h.b16 %v141
    %v663 = vunpack.c.l.b16 %v142
    %v664 = vunpack.c.h.b16 %v142
    %v665 = vunpack.c.l.b16 %v143
    %v666 = vunpack.c.h.b16 %v143
    %v667 = vunpack.c.l.b16 %v144
    %v668 = vunpack.c.h.b16 %v144
    %v669 = vunpack.c.l.b16 %v145
    %v670 = vunpack.c.h.b16 %v145
    %v671 = vunpack.c.l.b16 %v146
    %v672 = vunpack.c.h.b16 %v146
    %v673 = vunpack.c.l.b16 %v147
    %v674 = vunpack.c.h.b16 %v147
    %v675 = vunpack.c.l.b16 %v148
    %v676 = vunpack.c.h.b16 %v148
    %v677 = vunpack.c.l.b16 %v149
    %v678 = vunpack.c.h.b16 %v149
    %v679 = vunpack.c.l.b16 %v150
    %v680 = vunpack.c.h.b16 %v150
    %v681 = vunpack.c.l.b16 %v151
    %v682 = vunpack.c.h.b16 %v151
    %v683 = vunpack.c.l.b16 %v152
    %v684 = vunpack.c.h.b16 %v152
    %v685 = vunpack.c.l.b16 %v153
    %v686 = vunpack.c.h.b16 %v153
    %v687 = vunpack.c.l.b16 %v154
    %v688 = vunpack.c.h.b16 %v154
    %v689 = vunpack.c.l.b16 %v155
    %v690 = vunpack.c.h.b16 %v155
    %v691 = vunpack.c.l.b16 %v156
    %v692 = vunpack.c.h.b16 %v156
    %v693 = vunpack.c.l.b16 %v157
    %v694 = vunpack.c.h.b16 %v157
    %v695 = vunpack.c.l.b16 %v158
    %v696 = vunpack.c.h.b16 %v158
    %v697 = vunpack.c.l.b16 %v159
    %v698 = vunpack.c.h.b16 %v159
    %v699 = vunpack.c.l.b16 %v160
    %v700 = vunpack.c.h.b16 %v160
    %v701 = vunpack.c.l.b16 %v161
    %v702 = vunpack.c.h.b16 %v161
    %v703 = vunpack.c.l.b16 %v162
    %v704 = vunpack.c.h.b16 %v162
    %v705 = vunpack.c.l.b16 %v163
    %v706 = vunpack.c.h.b16 %v163
    %v707 = vunpack.c.l.b16 %v164
    %v708 = vunpack.c.h.b16 %v164
    %v709 = vunpack.c.l.b16 %v165
    %v710 = vunpack.c.h.b16 %v165
    %v711 = vunpack.c.l.b16 %v166
    %v712 = vunpack.c.h.b16 %v166
    %v713 = vunpack.c.l.b16 %v167
    %v714 = vunpack.c.h.b16 %v167
    %v715 = vunpack.c.l.b16 %v168
    %v716 = vunpack.c.h.b16 %v168
    %v717 = vunpack.c.l.b16 %v169
    %v718 = vunpack.c.h.b16 %v169
    %v719 = vunpack.c.l.b16 %v170
    %v720 = vunpack.c.h.b16 %v170
    %v721 = vunpack.c.l.b16 %v171
    %v722 = vunpack.c.h.b16 %v171
    %v723 = vunpack.c.l.b16 %v172
    %v724 = vunpack.c.h.b16 %v172
    %v725 = vunpack.c.l.b16 %v173
    %v726 = vunpack.c.h.b16 %v173
    %v727 = vunpack.c.l.b16 %v174
    %v728 = vunpack.c.h.b16 %v174
    %v729 = vunpack.c.l.b16 %v175
    %v730 = vunpack.c.h.b16 %v175
    %v731 = vunpack.c.l.b16 %v176
    %v732 = vunpack.c.h.b16 %v176
    %v733 = vunpack.c.l.b16 %v177
    %v734 = vunpack.c.h.b16 %v177
    %v735 = vunpack.c.l.b16 %v178
    %v736 = vunpack.c.h.b16 %v178
    %v737 = vunpack.c.l.b16 %v179
    %v738 = vunpack.c.h.b16 %v179
    %v739 = vunpack.c.l.b16 %v180
    %v740 = vunpack.c.h.b16 %v180
    %v741 = vunpack.c.l.b16 %v181
    %v742 = vunpack.c.h.b16 %v181
    %v743 = vunpack.c.l.b16 %v182
    %v744 = vunpack.c.h.b16 %v182
    %v745 = vunpack.c.l.b16 %v183
    %v746 = vunpack.c.h.b16 %v183
    %v747 = vunpack.c.l.b16 %v184
    %v748 = vunpack.c.h.b16 %v184
    %v749 = vunpack.c.l.b16 %v185
    %v750 = vunpack.c.h.b16 %v185
    %v751 = vunpack.c.l.b16 %v186
    %v752 = vunpack.c.h.b16 %v186
    %v753 = vunpack.c.l.b16 %v187
    %v754 = vunpack.c.h.b16 %v187
    %v755 = vunpack.c.l.b16 %v188
    %v756 = vunpack.c.h.b16 %v188
    %v757 = vunpack.c.l.b16 %v189
    %v758 = vunpack.c.h.b16 %v189
    %v759 = vunpack.c.l.b16 %v190
    %v760 = vunpack.c.h.b16 %v190
    %v761 = vunpack.c.l.b16 %v191
    %v762 = vunpack.c.h.b16 %v191
    %v763 = vunpack.c.l.b16 %v192
    %v764 = vunpack.c.h.b16 %v192
    %v765 = vunpack.c.l.b16 %v193
    %v766 = vunpack.c.h.b16 %v193
    %v767 = vunpack.c.l.b16 %v194
    %v768 = vunpack.c.h.b16 %v194
    %v769 = vunpack.c.l.b16 %v195
    %v770 = vunpack.c.h.b16 %v195
    %v771 = vunpack.c.l.b16 %v196
    %v772 = vunpack.c.h.b16 %v196
    %v773 = vunpack.c.l.b16 %v197
    %v774 = vunpack.c.h.b16 %v197
    %v775 = vunpack.c.l.b16 %v198
    %v776 = vunpack.c.h.b16 %v198
    %v777 = vunpack.c.l.b16 %v199
    %v778 = vunpack.c.h.b16 %v199
    %v779 = vunpack.c.l.b16 %v200
    %v780 = vunpack.c.h.b16 %v200
    %v781 = vunpack.c.l.b16 %v201
    %v782 = vunpack.c.h.b16 %v201
    %v783 = vunpack.c.l.b16 %v202
    %v784 = vunpack.c.h.b16 %v202
    %v785 = vunpack.c.l.b16 %v203
    %v786 = vunpack.c.h.b16 %v203
    %v787 = vunpack.c.l.b16 %v204
    %v788 = vunpack.c.h.b16 %v204
    %v789 = vunpack.c.l.b16 %v205
    %v790 = vunpack.c.h.b16 %v205
    %v791 = vunpack.c.l.b16 %v206
    %v792 = vunpack.c.h.b16 %v206
    %v793 = vunpack.c.l.b16 %v207
    %v794 = vunpack.c.h.b16 %v207
    %v795 = vunpack.c.l.b16 %v208
    %v796 = vunpack.c.h.b16 %v208
    %v797 = vunpack.c.l.b16 %v209
    %v798 = vunpack.c.h.b16 %v209
    %v799 = vunpack.c.l.b16 %v210
    %v800 = vunpack.c.h.b16 %v210
    %v801 = vunpack.c.l.b16 %v211
    %v802 = vunpack.c.h.b16 %v211
    %v803 = vunpack.c.l.b16 %v212
    %v804 = vunpack.c.h.b16 %v212
    %v805 = vunpack.c.l.b16 %v213
    %v806 = vunpack.c.h.b16 %v213
    %v807 = vunpack.c.l.b16 %v214
    %v808 = vunpack.c.h.b16 %v214
    %v809 = vunpack.c.l.b16 %v215
    %v810 = vunpack.c.h.b16 %v215
    %v811 = vunpack.c.l.b16 %v216
    %v812 = vunpack.c.h.b16 %v216
    %v813 = vunpack.c.l.b16 %v217
    %v814 = vunpack.c.h.b16 %v217
    %v815 = vunpack.c.l.b16 %v218
    %v816 = vunpack.c.h.b16 %v218
    %v817 = vunpack.c.l.b16 %v219
    %v818 = vunpack.c.h.b16 %v219
    %v819 = vunpack.c.l.b16 %v220
    %v820 = vunpack.c.h.b16 %v220
    %v821 = vunpack.c.l.b16 %v221
    %v822 = vunpack.c.h.b16 %v221
    %v823 = vunpack.c.l.b16 %v222
    %v824 = vunpack.c.h.b16 %v222
    %v825 = vunpack.c.l.b16 %v223
    %v826 = vunpack.c.h.b16 %v223
    %v827 = vunpack.c.l.b16 %v224
    %v828 = vunpack.c.h.b16 %v224
    %v829 = vunpack.c.l.b16 %v225
    %v830 = vunpack.c.h.b16 %v225
    %v831 = vunpack.c.l.b16 %v226
    %v832 = vunpack.c.h.b16 %v226
    %v833 = vunpack.c.l.b16 %v227
    %v834 = vunpack.c.h.b16 %v227
    %v835 = vunpack.c.l.b16 %v228
    %v836 = vunpack.c.h.b16 %v228
    %v837 = vunpack.c.l.b16 %v229
    %v838 = vunpack.c.h.b16 %v229
    %v839 = vunpack.c.l.b16 %v230
    %v840 = vunpack.c.h.b16 %v230
    %v841 = vunpack.c.l.b16 %v231
    %v842 = vunpack.c.h.b16 %v231
    %v843 = vunpack.c.l.b16 %v232
    %v844 = vunpack.c.h.b16 %v232
    %v845 = vunpack.c.l.b16 %v233
    %v846 = vunpack.c.h.b16 %v233
    %v847 = vunpack.c.l.b16 %v234
    %v848 = vunpack.c.h.b16 %v234
    %v849 = vunpack.c.l.b16 %v235
    %v850 = vunpack.c.h.b16 %v235
    %v851 = vunpack.c.l.b16 %v236
    %v852 = vunpack.c.h.b16 %v236
    %v853 = vunpack.c.l.b16 %v237
    %v854 = vunpack.c.h.b16 %v237
    %v855 = vunpack.c.l.b16 %v238
    %v856 = vunpack.c.h.b16 %v238
    %v857 = vunpack.c.l.b16 %v239
    %v858 = vunpack.c.h.b16 %v239
    %v859 = vunpack.c.l.b16 %v240
    %v860 = vunpack.c.h.b16 %v240
    %v861 = vunpack.c.l.b16 %v241
    %v862 = vunpack.c.h.b16 %v241
    %v863 = vunpack.c.l.b16 %v242
    %v864 = vunpack.c.h.b16 %v242
    %v865 = vunpack.c.l.b16 %v243
    %v866 = vunpack.c.h.b16 %v243
    %v867 = vunpack.c.l.b16 %v244
    %v868 = vunpack.c.h.b16 %v244
    %v869 = vunpack.c.l.b16 %v245
    %v870 = vunpack.c.h.b16 %v245
    %v871 = vunpack.c.l.b16 %v246
    %v872 = vunpack.c.h.b16 %v246
    %v873 = vunpack.c.l.b16 %v247
    %v874 = vunpack.c.h.b16 %v247
    %v875 = vunpack.c.l.b16 %v248
    %v876 = vunpack.c.h.b16 %v248
    %v877 = vunpack.c.l.b16 %v249
    %v878 = vunpack.c.h.b16 %v249
    %v879 = vunpack.c.l.b16 %v250
    %v880 = vunpack.c.h.b16 %v250
    %v881 = vunpack.c.l.b16 %v251
    %v882 = vunpack.c.h.b16 %v251
    %v883 = vunpack.c.l.b16 %v252
    %v884 = vunpack.c.h.b16 %v252
    %v885 = vunpack.c.l.b16 %v253
    %v886 = vunpack.c.h.b16 %v253
    %v887 = vunpack.c.l.b16 %v254
    %v888 = vunpack.c.h.b16 %v254
    %v889 = vpack.c.b16 %v501, %v497
    %v890 = vpack.c.b16 %v502, %v498
    %v891 = vpack.c.b16 %v503, %v499
    %v892 = vpack.c.b16 %v504, %v500
    %v893 = vpack.c.b16 %v509, %v505
    %v894 = vpack.c.b16 %v510, %v506
    %v895 = vpack.c.b16 %v511, %v507
    %v896 = vpack.c.b16 %v512, %v508
    %v897 = vpack.c.b16 %v517, %v513
    %v898 = vpack.c.b16 %v518, %v514
    %v899 = vpack.c.b16 %v519, %v515
    %v900 = vpack.c.b16 %v520, %v516
    %v901 = vpack.c.b16 %v525, %v521
    %v902 = vpack.c.b16 %v526, %v522
    %v903 = vpack.c.b16 %v527, %v523
    %v904 = vpack.c.b16 %v528, %v524
    %v905 = vpack.c.b16 %v533, %v529
    %v906 = vpack.c.b16 %v534, %v530
    %v907 = vpack.c.b16 %v535, %v531
    %v908 = vpack.c.b16 %v536, %v532
    %v909 = vpack.c.b16 %v541, %v537
    %v910 = vpack.c.b16 %v542, %v538
    %v911 = vpack.c.b16 %v543, %v539
    %v912 = vpack.c.b16 %v544, %v540
    %v913 = vpack.c.b16 %v549, %v545
    %v914 = vpack.c.b16 %v550, %v546
    %v915 = vpack.c.b16 %v551, %v547
    %v916 = vpack.c.b16 %v552, %v548
    %v917 = vpack.c.b16 %v557, %v553
    %v918 = vpack.c.b16 %v558, %v554
    %v919 = vpack.c.b16 %v559, %v555
    %v920 = vpack.c.b16 %v560, %v556
    %v921 = vpack.c.b16 %v565, %v561
    %v922 = vpack.c.b16 %v566, %v562
    %v923 = vpack.c.b16 %v567, %v563
    %v924 = vpack.c.b16 %v568, %v564
    %v925 = vpack.c.b16 %v573, %v569
    %v926 = vpack.c.b16 %v574, %v570
    %v927 = vpack.c.b16 %v575, %v571
    %v928 = vpack.c.b16 %v576, %v572
    %v929 = vpack.c.b16 %v581, %v577
    %v930 = vpack.c.b16 %v582, %v578
    %v931 = vpack.c.b16 %v583, %v579
    %v932 = vpack.c.b16 %v584, %v580
    %v933 = vpack.c.b16 %v589, %v585
    %v934 = vpack.c.b16 %v590, %v586
    %v935 = vpack.c.b16 %v591, %v587
    %v936 = vpack.c.b16 %v592, %v588
    %v937 = vpack.c.b16 %v597, %v593
    %v938 = vpack.c.b16 %v598, %v594
    %v939 = vpack.c.b16 %v599, %v595
    %v940 = vpack.c.b16 %v600, %v596
    %v941 = vpack.c.b16 %v605, %v601
    %v942 = vpack.c.b16 %v606, %v602
    %v943 = vpack.c.b16 %v607, %v603
    %v944 = vpack.c.b16 %v608, %v604
    %v945 = vpack.c.b16 %v613, %v609
    %v946 = vpack.c.b16 %v614, %v610
    %v947 = vpack.c.b16 %v615, %v611
    %v948 = vpack.c.b16 %v616, %v612
    %v949 = vpack.c.b16 %v621, %v617
    %v950 = vpack.c.b16 %v622, %v618
    %v951 = vpack.c.b16 %v623, %v619
    %v952 = vpack.c.b16 %v624, %v620
    %v953 = vpack.c.b16 %v629, %v625
    %v954 = vpack.c.b16 %v630, %v626
    %v955 = vpack.c.b16 %v631, %v627
    %v956 = vpack.c.b16 %v632, %v628
    %v957 = vpack.c.b16 %v637, %v633
    %v958 = vpack.c.b16 %v638, %v634
    %v959 = vpack.c.b16 %v639, %v635
    %v960 = vpack.c.b16 %v640, %v636
    %v961 = vpack.c.b16 %v645, %v641
    %v962 = vpack.c.b16 %v646, %v642
    %v963 = vpack.c.b16 %v647, %v643
    %v964 = vpack.c.b16 %v648, %v644
    %v965 = vpack.c.b16 %v653, %v649
    %v966 = vpack.c.b16 %v654, %v650
    %v967 = vpack.c.b16 %v655, %v651
    %v968 = vpack.c.b16 %v656, %v652
    %v969 = vpack.c.b16 %v661, %v657
    %v970 = vpack.c.b16 %v662, %v658
    %v971 = vpack.c.b16 %v663, %v659
    %v972 = vpack.c.b16 %v664, %v660
    %v973 = vpack.c.b16 %v669, %v665
    %v974 = vpack.c.b16 %v670, %v666
    %v975 = vpack.c.b16 %v671, %v667
    %v976 = vpack.c.b16 %v672, %v668
    %v977 = vpack.c.b16 %v677, %v673
    %v978 = vpack.c.b16 %v678, %v674
    %v979 = vpack.c.b16 %v679, %v675
    %v980 = vpack.c.b16 %v680, %v676
    %v981 = vpack.c.b16 %v685, %v681
    %v982 = vpack.c.b16 %v686, %v682
    %v983 = vpack.c.b16 %v687, %v683
    %v984 = vpack.c.b16 %v688, %v684
    %v985 = vpack.c.b16 %v693, %v689
    %v986 = vpack.c.b16 %v694, %v690
    %v987 = vpack.c.b16 %v695, %v691
    %v988 = vpack.c.b16 %v696, %v692
    %v989 = vpack.c.b16 %v701, %v697
    %v990 = vpack.c.b16 %v702, %v698
    %v991 = vpack.c.b16 %v703, %v699
    %v992 = vpack.c.b16 %v704, %v700
    %v993 = vpack.c.b16 %v709, %v705
    %v994 = vpack.c.b16 %v710, %v706
    %v995 = vpack.c.b16 %v711, %v707
    %v996 = vpack.c.b16 %v712, %v708
    %v997 = vpack.c.b16 %v717, %v713
    %v998 = vpack.c.b16 %v718, %v714
    %v999 = vpack.c.b16 %v719, %v715
    %v1000 = vpack.c.b16 %v720, %v716
    %v1001 = vpack.c.b16 %v725, %v721
    %v1002 = vpack.c.b16 %v726, %v722
    %v1003 = vpack.c.b16 %v727, %v723
    %v1004 = vpack.c.b16 %v728, %v724
    %v1005 = vpack.c.b16 %v733, %v729
    %v1006 = vpack.c.b16 %v734, %v730
    %v1007 = vpack.c.b16 %v735, %v731
    %v1008 = vpack.c.b16 %v736, %v732
    %v1009 = vpack.c.b16 %v741, %v737
    %v1010 = vpack.c.b16 %v742, %v738
    %v1011 = vpack.c.b16 %v743, %v739
    %v1012 = vpack.c.b16 %v744, %v740
    %v1013 = vpack.c.b16 %v749, %v745
    %v1014 = vpack.c.b16 %v750, %v746
    %v1015 = vpack.c.b16 %v751, %v747
    %v1016 = vpack.c.b16 %v752, %v748
    %v1017 = vpack.c.b16 %v757, %v753
    %v1018 = vpack.c.b16 %v758, %v754
    %v1019 = vpack.c.b16 %v759, %v755
    %v1020 = vpack.c.b16 %v760, %v756
    %v1021 = vpack.c.b16 %v765, %v761
    %v1022 = vpack.c.b16 %v766, %v762
    %v1023 = vpack.c.b16 %v767, %v763
    %v1024 = vpack.c.b16 %v768, %v764
    %v1025 = vpack.c.b16 %v773, %v769
    %v1026 = vpack.c.b16 %v774, %v770
    %v1027 = vpack.c.b16 %v775, %v771
    %v1028 = vpack.c.b16 %v776, %v772
    %v1029 = vpack.c.b16 %v781, %v777
    %v1030 = vpack.c.b16 %v782, %v778
    %v1031 = vpack.c.b16 %v783, %v779
    %v1032 = vpack.c.b16 %v784, %v780
    %v1033 = vpack.c.b16 %v789, %v785
    %v1034 = vpack.c.b16 %v790, %v786
    %v1035 = vpack.c.b16 %v791, %v787
    %v1036 = vpack.c.b16 %v792, %v788
    %v1037 = vpack.c.b16 %v797, %v793
    %v1038 = vpack.c.b16 %v798, %v794
    %v1039 = vpack.c.b16 %v799, %v795
    %v1040 = vpack.c.b16 %v800, %v796
    %v1041 = vpack.c.b16 %v805, %v801
    %v1042 = vpack.c.b16 %v806, %v802
    %v1043 = vpack.c.b16 %v807, %v803
    %v1044 = vpack.c.b16 %v808, %v804
    %v1045 = vpack.c.b16 %v813, %v809
    %v1046 = vpack.c.b16 %v814, %v810
    %v1047 = vpack.c.b16 %v815, %v811
    %v1048 = vpack.c.b16 %v816, %v812
    %v1049 = vpack.c.b16 %v821, %v817
    %v1050 = vpack.c.b16 %v822, %v818
    %v1051 = vpack.c.b16 %v823, %v819
    %v1052 = vpack.c.b16 %v824, %v820
    %v1053 = vpack.c.b16 %v829, %v825
    %v1054 = vpack.c.b16 %v830, %v826
    %v1055 = vpack.c.b16 %v831, %v827
    %v1056 = vpack.c.b16 %v832, %v828
    %v1057 = vpack.c.b16 %v837, %v833
    %v1058 = vpack.c.b16 %v838, %v834
    %v1059 = vpack.c.b16 %v839, %v835
    %v1060 = vpack.c.b16 %v840, %v836
    %v1061 = vpack.c.b16 %v845, %v841
    %v1062 = vpack.c.b16 %v846, %v842
    %v1063 = vpack.c.b16 %v847, %v843
    %v1064 = vpack.c.b16 %v848, %v844
    %v1065 = vpack.c.b16 %v853, %v849
    %v1066 = vpack.c.b16 %v854, %v850
    %v1067 = vpack.c.b16 %v855, %v851
    %v1068 = vpack.c.b16 %v856, %v852
    %v1069 = vpack.c.b16 %v861, %v857
    %v1070 = vpack.c.b16 %v862, %v858
    %v1071 = vpack.c.b16 %v863, %v859
    %v1072 = vpack.c.b16 %v864, %v860
    %v1073 = vpack.c.b16 %v869, %v865
    %v1074 = vpack.c.b16 %v870, %v866
    %v1075 = vpack.c.b16 %v871, %v867
    %v1076 = vpack.c.b16 %v872, %v868
    %v1077 = vpack.c.b16 %v877, %v873
    %v1078 = vpack.c.b16 %v878, %v874
    %v1079 = vpack.c.b16 %v879, %v875
    %v1080 = vpack.c.b16 %v880, %v876
    %v1081 = vpack.c.b16 %v885, %v881
    %v1082 = vpack.c.b16 %v886, %v882
    %v1083 = vpack.c.b16 %v887, %v883
    %v1084 = vpack.c.b16 %v888, %v884
    %vm1281 = vcmask 130048
    %v1283 = vsel %vm1281, %v294, 0
    %1285 = vmatprep.subr.bf16.mxu0 %v918
    %1286 = vmatpush1.bf16.msra.mxu0 %v917
    %1287 = vmatprep.subr.bf16.mxu0 %v914
    %1288 = vmatpush1.bf16.msra.mxu0 %v913
    %1289 = vmatprep.subr.bf16.mxu0 %v910
    %1290 = vmatpush1.bf16.msra.mxu0 %v909
    %1291 = vmatprep.subr.bf16.mxu0 %v906
    %1292 = vmatpush1.bf16.msra.mxu0 %v905
    %1293 = vmatprep.subr.bf16.mxu0 %v902
    %1294 = vmatpush1.bf16.msra.mxu0 %v901
    %1295 = vmatprep.subr.bf16.mxu0 %v898
    %1296 = vmatpush1.bf16.msra.mxu0 %v897
    %1297 = vmatprep.subr.bf16.mxu0 %v894
    %1298 = vmatpush1.bf16.msra.mxu0 %v893
    %1299 = vmatprep.subr.bf16.mxu0 %v890
    %1300 = vmatpush1.bf16.msra.mxu0 %v889
    %1301 = vmatprep.subr.bf16.mxu0 %v950
    %1302 = vmatpush2.bf16.msra.mxu0 %v949
    %1303 = vmatprep.subr.bf16.mxu0 %v946
    %1304 = vmatpush2.bf16.msra.mxu0 %v945
    %1305 = vmatprep.subr.bf16.mxu0 %v942
    %1306 = vmatpush2.bf16.msra.mxu0 %v941
    %1307 = vmatprep.subr.bf16.mxu0 %v938
    %1308 = vmatpush2.bf16.msra.mxu0 %v937
    %1309 = vmatprep.subr.bf16.mxu0 %v934
    %1310 = vmatpush2.bf16.msra.mxu0 %v933
    %1311 = vmatprep.subr.bf16.mxu0 %v930
    %1312 = vmatpush2.bf16.msra.mxu0 %v929
    %1313 = vmatprep.subr.bf16.mxu0 %v926
    %1314 = vmatpush2.bf16.msra.mxu0 %v925
    %1315 = vmatprep.subr.bf16.mxu0 %v922
    %1316 = vmatpush2.bf16.msra.mxu0 %v921
    %1317 = vmatprep.mubr.bf16.mxu0 %v289
    %1318 = vmatmul.mubr.bf16.gmra.mxu0 %v288
    %v1319 = vpop.f32.mrf.mxu0
    %v1320 = vadd.f32 %v260, %v1319
    %v1321 = vpop.f32.mrf.mxu0
    %v1322 = vadd.f32 %v264, %v1321
    %v1323 = vpop.f32.mrf.mxu0
    %v1324 = vpop.f32.mrf.mxu0
    %1325 = vdwg.mxu0
    %1326 = vmatprep.subr.bf16.mxu0 %v982
    %1327 = vmatpush1.bf16.msra.mxu0 %v981
    %1328 = vmatprep.subr.bf16.mxu0 %v978
    %1329 = vmatpush1.bf16.msra.mxu0 %v977
    %1330 = vmatprep.subr.bf16.mxu0 %v974
    %1331 = vmatpush1.bf16.msra.mxu0 %v973
    %1332 = vmatprep.subr.bf16.mxu0 %v970
    %1333 = vmatpush1.bf16.msra.mxu0 %v969
    %1334 = vmatprep.subr.bf16.mxu0 %v966
    %1335 = vmatpush1.bf16.msra.mxu0 %v965
    %1336 = vmatprep.subr.bf16.mxu0 %v962
    %1337 = vmatpush1.bf16.msra.mxu0 %v961
    %1338 = vmatprep.subr.bf16.mxu0 %v958
    %1339 = vmatpush1.bf16.msra.mxu0 %v957
    %1340 = vmatprep.subr.bf16.mxu0 %v954
    %1341 = vmatpush1.bf16.msra.mxu0 %v953
    %1342 = vmatprep.subr.bf16.mxu0 %v1014
    %1343 = vmatpush2.bf16.msra.mxu0 %v1013
    %1344 = vmatprep.subr.bf16.mxu0 %v1010
    %1345 = vmatpush2.bf16.msra.mxu0 %v1009
    %1346 = vmatprep.subr.bf16.mxu0 %v1006
    %1347 = vmatpush2.bf16.msra.mxu0 %v1005
    %1348 = vmatprep.subr.bf16.mxu0 %v1002
    %1349 = vmatpush2.bf16.msra.mxu0 %v1001
    %1350 = vmatprep.subr.bf16.mxu0 %v998
    %1351 = vmatpush2.bf16.msra.mxu0 %v997
    %1352 = vmatprep.subr.bf16.mxu0 %v994
    %1353 = vmatpush2.bf16.msra.mxu0 %v993
    %1354 = vmatprep.subr.bf16.mxu0 %v990
    %1355 = vmatpush2.bf16.msra.mxu0 %v989
    %1356 = vmatprep.subr.bf16.mxu0 %v986
    %1357 = vmatpush2.bf16.msra.mxu0 %v985
    %1358 = vmatprep.mubr.bf16.mxu0 %v291
    %1359 = vmatmul.mubr.bf16.gmra.mxu0 %v290
    %v1360 = vpop.f32.mrf.mxu0
    %v1361 = vadd.f32 %v1320, %v1360
    %v1362 = vpop.f32.mrf.mxu0
    %v1363 = vadd.f32 %v1322, %v1362
    %v1364 = vpop.f32.mrf.mxu0
    %v1365 = vpop.f32.mrf.mxu0
    %1366 = vdwg.mxu0
    %1367 = vmatprep.subr.bf16.mxu0 %v1046
    %1368 = vmatpush1.bf16.msra.mxu0 %v1045
    %1369 = vmatprep.subr.bf16.mxu0 %v1042
    %1370 = vmatpush1.bf16.msra.mxu0 %v1041
    %1371 = vmatprep.subr.bf16.mxu0 %v1038
    %1372 = vmatpush1.bf16.msra.mxu0 %v1037
    %1373 = vmatprep.subr.bf16.mxu0 %v1034
    %1374 = vmatpush1.bf16.msra.mxu0 %v1033
    %1375 = vmatprep.subr.bf16.mxu0 %v1030
    %1376 = vmatpush1.bf16.msra.mxu0 %v1029
    %1377 = vmatprep.subr.bf16.mxu0 %v1026
    %1378 = vmatpush1.bf16.msra.mxu0 %v1025
    %1379 = vmatprep.subr.bf16.mxu0 %v1022
    %1380 = vmatpush1.bf16.msra.mxu0 %v1021
    %1381 = vmatprep.subr.bf16.mxu0 %v1018
    %1382 = vmatpush1.bf16.msra.mxu0 %v1017
    %1383 = vmatprep.subr.bf16.mxu0 %v1078
    %1384 = vmatpush2.bf16.msra.mxu0 %v1077
    %1385 = vmatprep.subr.bf16.mxu0 %v1074
    %1386 = vmatpush2.bf16.msra.mxu0 %v1073
    %1387 = vmatprep.subr.bf16.mxu0 %v1070
    %1388 = vmatpush2.bf16.msra.mxu0 %v1069
    %1389 = vmatprep.subr.bf16.mxu0 %v1066
    %1390 = vmatpush2.bf16.msra.mxu0 %v1065
    %1391 = vmatprep.subr.bf16.mxu0 %v1062
    %1392 = vmatpush2.bf16.msra.mxu0 %v1061
    %1393 = vmatprep.subr.bf16.mxu0 %v1058
    %1394 = vmatpush2.bf16.msra.mxu0 %v1057
    %1395 = vmatprep.subr.bf16.mxu0 %v1054
    %1396 = vmatpush2.bf16.msra.mxu0 %v1053
    %1397 = vmatprep.subr.bf16.mxu0 %v1050
    %1398 = vmatpush2.bf16.msra.mxu0 %v1049
    %1399 = vmatprep.mubr.bf16.mxu0 %v293
    %1400 = vmatmul.mubr.bf16.gmra.mxu0 %v292
    %v1401 = vpop.f32.mrf.mxu0
    %v1402 = vadd.f32 %v1361, %v1401
    %v1403 = vpop.f32.mrf.mxu0
    %v1404 = vadd.f32 %v1363, %v1403
    %v1405 = vpop.f32.mrf.mxu0
    %v1406 = vpop.f32.mrf.mxu0
    %1407 = vdwg.mxu0
    %1408 = vmatprep.subr.bf16.mxu0 0
    %1409 = vmatpush1.bf16.msra.mxu0 0
    %1410 = vmatprep.subr.bf16.mxu0 0
    %1411 = vmatpush1.bf16.msra.mxu0 0
    %1412 = vmatprep.subr.bf16.mxu0 0
    %1413 = vmatpush1.bf16.msra.mxu0 0
    %1414 = vmatprep.subr.bf16.mxu0 0
    %1415 = vmatpush1.bf16.msra.mxu0 0
    %1416 = vmatprep.subr.bf16.mxu0 0
    %1417 = vmatpush1.bf16.msra.mxu0 0
    %1418 = vmatprep.subr.bf16.mxu0 0
    %1419 = vmatpush1.bf16.msra.mxu0 0
    %1420 = vmatprep.subr.bf16.mxu0 0
    %1421 = vmatpush1.bf16.msra.mxu0 0
    %1422 = vmatprep.subr.bf16.mxu0 %v1082
    %1423 = vmatpush1.bf16.msra.mxu0 %v1081
    %1424 = vmatprep.subr.bf16.mxu0 0
    %1425 = vmatpush2.bf16.msra.mxu0 0
    %1426 = vmatprep.subr.bf16.mxu0 0
    %1427 = vmatpush2.bf16.msra.mxu0 0
    %1428 = vmatprep.subr.bf16.mxu0 0
    %1429 = vmatpush2.bf16.msra.mxu0 0
    %1430 = vmatprep.subr.bf16.mxu0 0
    %1431 = vmatpush2.bf16.msra.mxu0 0
    %1432 = vmatprep.subr.bf16.mxu0 0
    %1433 = vmatpush2.bf16.msra.mxu0 0
    %1434 = vmatprep.subr.bf16.mxu0 0
    %1435 = vmatpush2.bf16.msra.mxu0 0
    %1436 = vmatprep.subr.bf16.mxu0 0
    %1437 = vmatpush2.bf16.msra.mxu0 0
    %1438 = vmatprep.subr.bf16.mxu0 0
    %1439 = vmatpush2.bf16.msra.mxu0 0
    %1440 = vmatprep.mubr.bf16.mxu0 0
    %1441 = vmatmul.mubr.bf16.gmra.mxu0 %v1283
    %v1442 = vpop.f32.mrf.mxu0
    %v1443 = vadd.f32 %v1402, %v1442
    %v1444 = vpop.f32.mrf.mxu0
    %v1445 = vadd.f32 %v1404, %v1444
    %v1446 = vpop.f32.mrf.mxu0
    %v1447 = vpop.f32.mrf.mxu0
    %1448 = vdwg.mxu0
    %1449 = vmatprep.subr.bf16.mxu0 %v920
    %1450 = vmatpush1.bf16.msra.mxu0 %v919
    %1451 = vmatprep.subr.bf16.mxu0 %v916
    %1452 = vmatpush1.bf16.msra.mxu0 %v915
    %1453 = vmatprep.subr.bf16.mxu0 %v912
    %1454 = vmatpush1.bf16.msra.mxu0 %v911
    %1455 = vmatprep.subr.bf16.mxu0 %v908
    %1456 = vmatpush1.bf16.msra.mxu0 %v907
    %1457 = vmatprep.subr.bf16.mxu0 %v904
    %1458 = vmatpush1.bf16.msra.mxu0 %v903
    %1459 = vmatprep.subr.bf16.mxu0 %v900
    %1460 = vmatpush1.bf16.msra.mxu0 %v899
    %1461 = vmatprep.subr.bf16.mxu0 %v896
    %1462 = vmatpush1.bf16.msra.mxu0 %v895
    %1463 = vmatprep.subr.bf16.mxu0 %v892
    %1464 = vmatpush1.bf16.msra.mxu0 %v891
    %1465 = vmatprep.subr.bf16.mxu0 %v952
    %1466 = vmatpush2.bf16.msra.mxu0 %v951
    %1467 = vmatprep.subr.bf16.mxu0 %v948
    %1468 = vmatpush2.bf16.msra.mxu0 %v947
    %1469 = vmatprep.subr.bf16.mxu0 %v944
    %1470 = vmatpush2.bf16.msra.mxu0 %v943
    %1471 = vmatprep.subr.bf16.mxu0 %v940
    %1472 = vmatpush2.bf16.msra.mxu0 %v939
    %1473 = vmatprep.subr.bf16.mxu0 %v936
    %1474 = vmatpush2.bf16.msra.mxu0 %v935
    %1475 = vmatprep.subr.bf16.mxu0 %v932
    %1476 = vmatpush2.bf16.msra.mxu0 %v931
    %1477 = vmatprep.subr.bf16.mxu0 %v928
    %1478 = vmatpush2.bf16.msra.mxu0 %v927
    %1479 = vmatprep.subr.bf16.mxu0 %v924
    %1480 = vmatpush2.bf16.msra.mxu0 %v923
    %1481 = vmatprep.mubr.bf16.mxu0 %v289
    %1482 = vmatmul.mubr.bf16.gmra.mxu0 %v288
    %v1483 = vpop.f32.mrf.mxu0
    %v1484 = vadd.f32 %v268, %v1483
    %v1485 = vpop.f32.mrf.mxu0
    %v1486 = vadd.f32 %v272, %v1485
    %v1487 = vpop.f32.mrf.mxu0
    %v1488 = vpop.f32.mrf.mxu0
    %1489 = vdwg.mxu0
    %1490 = vmatprep.subr.bf16.mxu0 %v984
    %1491 = vmatpush1.bf16.msra.mxu0 %v983
    %1492 = vmatprep.subr.bf16.mxu0 %v980
    %1493 = vmatpush1.bf16.msra.mxu0 %v979
    %1494 = vmatprep.subr.bf16.mxu0 %v976
    %1495 = vmatpush1.bf16.msra.mxu0 %v975
    %1496 = vmatprep.subr.bf16.mxu0 %v972
    %1497 = vmatpush1.bf16.msra.mxu0 %v971
    %1498 = vmatprep.subr.bf16.mxu0 %v968
    %1499 = vmatpush1.bf16.msra.mxu0 %v967
    %1500 = vmatprep.subr.bf16.mxu0 %v964
    %1501 = vmatpush1.bf16.msra.mxu0 %v963
    %1502 = vmatprep.subr.bf16.mxu0 %v960
    %1503 = vmatpush1.bf16.msra.mxu0 %v959
    %1504 = vmatprep.subr.bf16.mxu0 %v956
    %1505 = vmatpush1.bf16.msra.mxu0 %v955
    %1506 = vmatprep.subr.bf16.mxu0 %v1016
    %1507 = vmatpush2.bf16.msra.mxu0 %v1015
    %1508 = vmatprep.subr.bf16.mxu0 %v1012
    %1509 = vmatpush2.bf16.msra.mxu0 %v1011
    %1510 = vmatprep.subr.bf16.mxu0 %v1008
    %1511 = vmatpush2.bf16.msra.mxu0 %v1007
    %1512 = vmatprep.subr.bf16.mxu0 %v1004
    %1513 = vmatpush2.bf16.msra.mxu0 %v1003
    %1514 = vmatprep.subr.bf16.mxu0 %v1000
    %1515 = vmatpush2.bf16.msra.mxu0 %v999
    %1516 = vmatprep.subr.bf16.mxu0 %v996
    %1517 = vmatpush2.bf16.msra.mxu0 %v995
    %1518 = vmatprep.subr.bf16.mxu0 %v992
    %1519 = vmatpush2.bf16.msra.mxu0 %v991
    %1520 = vmatprep.subr.bf16.mxu0 %v988
    %1521 = vmatpush2.bf16.msra.mxu0 %v987
    %1522 = vmatprep.mubr.bf16.mxu0 %v291
    %1523 = vmatmul.mubr.bf16.gmra.mxu0 %v290
    %v1524 = vpop.f32.mrf.mxu0
    %v1525 = vadd.f32 %v1484, %v1524
    %v1526 = vpop.f32.mrf.mxu0
    %v1527 = vadd.f32 %v1486, %v1526
    %v1528 = vpop.f32.mrf.mxu0
    %v1529 = vpop.f32.mrf.mxu0
    %1530 = vdwg.mxu0
    %1531 = vmatprep.subr.bf16.mxu0 %v1048
    %1532 = vmatpush1.bf16.msra.mxu0 %v1047
    %1533 = vmatprep.subr.bf16.mxu0 %v1044
    %1534 = vmatpush1.bf16.msra.mxu0 %v1043
    %1535 = vmatprep.subr.bf16.mxu0 %v1040
    %1536 = vmatpush1.bf16.msra.mxu0 %v1039
    %1537 = vmatprep.subr.bf16.mxu0 %v1036
    %1538 = vmatpush1.bf16.msra.mxu0 %v1035
    %1539 = vmatprep.subr.bf16.mxu0 %v1032
    %1540 = vmatpush1.bf16.msra.mxu0 %v1031
    %1541 = vmatprep.subr.bf16.mxu0 %v1028
    %1542 = vmatpush1.bf16.msra.mxu0 %v1027
    %1543 = vmatprep.subr.bf16.mxu0 %v1024
    %1544 = vmatpush1.bf16.msra.mxu0 %v1023
    %1545 = vmatprep.subr.bf16.mxu0 %v1020
    %1546 = vmatpush1.bf16.msra.mxu0 %v1019
    %1547 = vmatprep.subr.bf16.mxu0 %v1080
    %1548 = vmatpush2.bf16.msra.mxu0 %v1079
    %1549 = vmatprep.subr.bf16.mxu0 %v1076
    %1550 = vmatpush2.bf16.msra.mxu0 %v1075
    %1551 = vmatprep.subr.bf16.mxu0 %v1072
    %1552 = vmatpush2.bf16.msra.mxu0 %v1071
    %1553 = vmatprep.subr.bf16.mxu0 %v1068
    %1554 = vmatpush2.bf16.msra.mxu0 %v1067
    %1555 = vmatprep.subr.bf16.mxu0 %v1064
    %1556 = vmatpush2.bf16.msra.mxu0 %v1063
    %1557 = vmatprep.subr.bf16.mxu0 %v1060
    %1558 = vmatpush2.bf16.msra.mxu0 %v1059
    %1559 = vmatprep.subr.bf16.mxu0 %v1056
    %1560 = vmatpush2.bf16.msra.mxu0 %v1055
    %1561 = vmatprep.subr.bf16.mxu0 %v1052
    %1562 = vmatpush2.bf16.msra.mxu0 %v1051
    %1563 = vmatprep.mubr.bf16.mxu0 %v293
    %1564 = vmatmul.mubr.bf16.gmra.mxu0 %v292
    %v1565 = vpop.f32.mrf.mxu0
    %v1566 = vadd.f32 %v1525, %v1565
    %v1567 = vpop.f32.mrf.mxu0
    %v1568 = vadd.f32 %v1527, %v1567
    %v1569 = vpop.f32.mrf.mxu0
    %v1570 = vpop.f32.mrf.mxu0
    %1571 = vdwg.mxu0
    %1572 = vmatprep.subr.bf16.mxu0 0
    %1573 = vmatpush1.bf16.msra.mxu0 0
    %1574 = vmatprep.subr.bf16.mxu0 0
    %1575 = vmatpush1.bf16.msra.mxu0 0
    %1576 = vmatprep.subr.bf16.mxu0 0
    %1577 = vmatpush1.bf16.msra.mxu0 0
    %1578 = vmatprep.subr.bf16.mxu0 0
    %1579 = vmatpush1.bf16.msra.mxu0 0
    %1580 = vmatprep.subr.bf16.mxu0 0
    %1581 = vmatpush1.bf16.msra.mxu0 0
    %1582 = vmatprep.subr.bf16.mxu0 0
    %1583 = vmatpush1.bf16.msra.mxu0 0
    %1584 = vmatprep.subr.bf16.mxu0 0
    %1585 = vmatpush1.bf16.msra.mxu0 0
    %1586 = vmatprep.subr.bf16.mxu0 %v1084
    %1587 = vmatpush1.bf16.msra.mxu0 %v1083
    %1588 = vmatprep.subr.bf16.mxu0 0
    %1589 = vmatpush2.bf16.msra.mxu0 0
    %1590 = vmatprep.subr.bf16.mxu0 0
    %1591 = vmatpush2.bf16.msra.mxu0 0
    %1592 = vmatprep.subr.bf16.mxu0 0
    %1593 = vmatpush2.bf16.msra.mxu0 0
    %1594 = vmatprep.subr.bf16.mxu0 0
    %1595 = vmatpush2.bf16.msra.mxu0 0
    %1596 = vmatprep.subr.bf16.mxu0 0
    %1597 = vmatpush2.bf16.msra.mxu0 0
    %1598 = vmatprep.subr.bf16.mxu0 0
    %1599 = vmatpush2.bf16.msra.mxu0 0
    %1600 = vmatprep.subr.bf16.mxu0 0
    %1601 = vmatpush2.bf16.msra.mxu0 0
    %1602 = vmatprep.subr.bf16.mxu0 0
    %1603 = vmatpush2.bf16.msra.mxu0 0
    %1604 = vmatprep.mubr.bf16.mxu0 0
    %1605 = vmatmul.mubr.bf16.gmra.mxu0 %v1283
    %v1606 = vpop.f32.mrf.mxu0
    %v1607 = vadd.f32 %v1566, %v1606
    %v1608 = vpop.f32.mrf.mxu0
    %v1609 = vadd.f32 %v1568, %v1608
    %v1610 = vpop.f32.mrf.mxu0
    %v1611 = vpop.f32.mrf.mxu0
    %1612 = vdwg.mxu0
    %v1613 = vmax.f32 %v1443, 0.0
    %v1614 = vmax.f32 %v1445, 0.0
    %v1615 = vmax.f32 %v1607, 0.0
    %v1616 = vmax.f32 %v1609, 0.0
    %v1617 = vpack.c.bf16 %v1613, %v1613
    %v1618 = vpack.c.bf16 %v1614, %v1614
    %v1619 = vpack.c.bf16 %v1615, %v1615
    %v1620 = vpack.c.bf16 %v1616, %v1616
    %v1621 = vld [vmem:[#allocation4] sm:$0xff]
    %v1622 = vld [vmem:[#allocation4 + $0x8] sm:$0xff]
    %v1623 = vld [vmem:[#allocation4 + $0x10] sm:$0xff]
    %v1624 = vld [vmem:[#allocation4 + $0x18] sm:$0xff]
    %v1625 = vld [vmem:[#allocation4 + $0x20] sm:$0xff]
    %v1626 = vld [vmem:[#allocation4 + $0x28] sm:$0xff]
    %v1627 = vld [vmem:[#allocation4 + $0x30] sm:$0xff]
    %v1628 = vld [vmem:[#allocation4 + $0x38] sm:$0xff]
    %v1629 = vld [vmem:[#allocation4 + $0x40] sm:$0xff]
    %v1630 = vld [vmem:[#allocation4 + $0x48] sm:$0xff]
    %v1631 = vld [vmem:[#allocation4 + $0x50] sm:$0xff]
    %v1632 = vld [vmem:[#allocation4 + $0x58] sm:$0xff]
    %v1633 = vld [vmem:[#allocation4 + $0x60] sm:$0xff]
    %v1634 = vld [vmem:[#allocation4 + $0x68] sm:$0xff]
    %v1635 = vld [vmem:[#allocation4 + $0x70] sm:$0xff]
    %v1636 = vld [vmem:[#allocation4 + $0x78] sm:$0xff]
    %v1637 = vld [vmem:[#allocation4 + $0x80] sm:$0xff]
    %v1638 = vld [vmem:[#allocation4 + $0x88] sm:$0xff]
    %v1639 = vld [vmem:[#allocation4 + $0x90] sm:$0xff]
    %v1640 = vld [vmem:[#allocation4 + $0x98] sm:$0xff]
    %v1641 = vld [vmem:[#allocation4 + $0xa0] sm:$0xff]
    %v1642 = vld [vmem:[#allocation4 + $0xa8] sm:$0xff]
    %v1643 = vld [vmem:[#allocation4 + $0xb0] sm:$0xff]
    %v1644 = vld [vmem:[#allocation4 + $0xb8] sm:$0xff]
    %v1645 = vld [vmem:[#allocation4 + $0xc0] sm:$0xff]
    %v1646 = vld [vmem:[#allocation4 + $0xc8] sm:$0xff]
    %v1647 = vld [vmem:[#allocation4 + $0xd0] sm:$0xff]
    %v1648 = vld [vmem:[#allocation4 + $0xd8] sm:$0xff]
    %v1649 = vld [vmem:[#allocation4 + $0xe0] sm:$0xff]
    %v1650 = vld [vmem:[#allocation4 + $0xe8] sm:$0xff]
    %v1651 = vld [vmem:[#allocation4 + $0xf0] sm:$0xff]
    %v1652 = vld [vmem:[#allocation4 + $0xf8] sm:$0xff]
    %v1653 = vld [vmem:[#allocation4 + $0x100] sm:$0xff]
    %v1654 = vld [vmem:[#allocation4 + $0x108] sm:$0xff]
    %v1655 = vld [vmem:[#allocation4 + $0x110] sm:$0xff]
    %v1656 = vld [vmem:[#allocation4 + $0x118] sm:$0xff]
    %v1657 = vld [vmem:[#allocation4 + $0x120] sm:$0xff]
    %v1658 = vld [vmem:[#allocation4 + $0x128] sm:$0xff]
    %v1659 = vld [vmem:[#allocation4 + $0x130] sm:$0xff]
    %v1660 = vld [vmem:[#allocation4 + $0x138] sm:$0xff]
    %v1661 = vld [vmem:[#allocation4 + $0x140] sm:$0xff]
    %v1662 = vld [vmem:[#allocation4 + $0x148] sm:$0xff]
    %v1663 = vld [vmem:[#allocation4 + $0x150] sm:$0xff]
    %v1664 = vld [vmem:[#allocation4 + $0x158] sm:$0xff]
    %v1665 = vld [vmem:[#allocation4 + $0x160] sm:$0xff]
    %v1666 = vld [vmem:[#allocation4 + $0x168] sm:$0xff]
    %v1667 = vld [vmem:[#allocation4 + $0x170] sm:$0xff]
    %v1668 = vld [vmem:[#allocation4 + $0x178] sm:$0xff]
    %v1669 = vld [vmem:[#allocation4 + $0x180] sm:$0xff]
    %v1670 = vld [vmem:[#allocation4 + $0x188] sm:$0xff]
    %v1671 = vld [vmem:[#allocation4 + $0x190] sm:$0xff]
    %v1672 = vld [vmem:[#allocation4 + $0x198] sm:$0xff]
    %v1673 = vld [vmem:[#allocation4 + $0x1a0] sm:$0xff]
    %v1674 = vld [vmem:[#allocation4 + $0x1a8] sm:$0xff]
    %v1675 = vld [vmem:[#allocation4 + $0x1b0] sm:$0xff]
    %v1676 = vld [vmem:[#allocation4 + $0x1b8] sm:$0xff]
    %v1677 = vld [vmem:[#allocation4 + $0x1c0] sm:$0xff]
    %v1678 = vld [vmem:[#allocation4 + $0x1c8] sm:$0xff]
    %v1679 = vld [vmem:[#allocation4 + $0x1d0] sm:$0xff]
    %v1680 = vld [vmem:[#allocation4 + $0x1d8] sm:$0xff]
    %v1681 = vld [vmem:[#allocation4 + $0x1e0] sm:$0xff]
    %v1682 = vld [vmem:[#allocation4 + $0x1e8] sm:$0xff]
    %v1683 = vld [vmem:[#allocation4 + $0x1f0] sm:$0xff]
    %v1684 = vld [vmem:[#allocation4 + $0x1f8] sm:$0xff]
    %v1685 = vld [vmem:[%s4] sm:$0x3]
    %v1687 = vlaneseq
    %v1688 = vshrl.u32 %v1687, 7
    %v1689 = vsub.s32 0, %v1688
    %v1690 = vrot.slane %v1685, %v1689
    %v1691 = vlaneseq
    %v1692 = vshrl.u32 %v1691, 7
    %v1693 = vsub.s32 1, %v1692
    %v1694 = vrot.slane %v1685, %v1693
    %v1761 = vunpack.c.l.b16 %v1621
    %v1762 = vunpack.c.h.b16 %v1621
    %v1763 = vunpack.c.l.b16 %v1622
    %v1764 = vunpack.c.h.b16 %v1622
    %v1765 = vunpack.c.l.b16 %v1623
    %v1766 = vunpack.c.h.b16 %v1623
    %v1767 = vunpack.c.l.b16 %v1624
    %v1768 = vunpack.c.h.b16 %v1624
    %v1769 = vunpack.c.l.b16 %v1625
    %v1770 = vunpack.c.h.b16 %v1625
    %v1771 = vunpack.c.l.b16 %v1626
    %v1772 = vunpack.c.h.b16 %v1626
    %v1773 = vunpack.c.l.b16 %v1627
    %v1774 = vunpack.c.h.b16 %v1627
    %v1775 = vunpack.c.l.b16 %v1628
    %v1776 = vunpack.c.h.b16 %v1628
    %v1777 = vunpack.c.l.b16 %v1629
    %v1778 = vunpack.c.h.b16 %v1629
    %v1779 = vunpack.c.l.b16 %v1630
    %v1780 = vunpack.c.h.b16 %v1630
    %v1781 = vunpack.c.l.b16 %v1631
    %v1782 = vunpack.c.h.b16 %v1631
    %v1783 = vunpack.c.l.b16 %v1632
    %v1784 = vunpack.c.h.b16 %v1632
    %v1785 = vunpack.c.l.b16 %v1633
    %v1786 = vunpack.c.h.b16 %v1633
    %v1787 = vunpack.c.l.b16 %v1634
    %v1788 = vunpack.c.h.b16 %v1634
    %v1789 = vunpack.c.l.b16 %v1635
    %v1790 = vunpack.c.h.b16 %v1635
    %v1791 = vunpack.c.l.b16 %v1636
    %v1792 = vunpack.c.h.b16 %v1636
    %v1793 = vunpack.c.l.b16 %v1637
    %v1794 = vunpack.c.h.b16 %v1637
    %v1795 = vunpack.c.l.b16 %v1638
    %v1796 = vunpack.c.h.b16 %v1638
    %v1797 = vunpack.c.l.b16 %v1639
    %v1798 = vunpack.c.h.b16 %v1639
    %v1799 = vunpack.c.l.b16 %v1640
    %v1800 = vunpack.c.h.b16 %v1640
    %v1801 = vunpack.c.l.b16 %v1641
    %v1802 = vunpack.c.h.b16 %v1641
    %v1803 = vunpack.c.l.b16 %v1642
    %v1804 = vunpack.c.h.b16 %v1642
    %v1805 = vunpack.c.l.b16 %v1643
    %v1806 = vunpack.c.h.b16 %v1643
    %v1807 = vunpack.c.l.b16 %v1644
    %v1808 = vunpack.c.h.b16 %v1644
    %v1809 = vunpack.c.l.b16 %v1645
    %v1810 = vunpack.c.h.b16 %v1645
    %v1811 = vunpack.c.l.b16 %v1646
    %v1812 = vunpack.c.h.b16 %v1646
    %v1813 = vunpack.c.l.b16 %v1647
    %v1814 = vunpack.c.h.b16 %v1647
    %v1815 = vunpack.c.l.b16 %v1648
    %v1816 = vunpack.c.h.b16 %v1648
    %v1817 = vunpack.c.l.b16 %v1649
    %v1818 = vunpack.c.h.b16 %v1649
    %v1819 = vunpack.c.l.b16 %v1650
    %v1820 = vunpack.c.h.b16 %v1650
    %v1821 = vunpack.c.l.b16 %v1651
    %v1822 = vunpack.c.h.b16 %v1651
    %v1823 = vunpack.c.l.b16 %v1652
    %v1824 = vunpack.c.h.b16 %v1652
    %v1825 = vunpack.c.l.b16 %v1653
    %v1826 = vunpack.c.h.b16 %v1653
    %v1827 = vunpack.c.l.b16 %v1654
    %v1828 = vunpack.c.h.b16 %v1654
    %v1829 = vunpack.c.l.b16 %v1655
    %v1830 = vunpack.c.h.b16 %v1655
    %v1831 = vunpack.c.l.b16 %v1656
    %v1832 = vunpack.c.h.b16 %v1656
    %v1833 = vunpack.c.l.b16 %v1657
    %v1834 = vunpack.c.h.b16 %v1657
    %v1835 = vunpack.c.l.b16 %v1658
    %v1836 = vunpack.c.h.b16 %v1658
    %v1837 = vunpack.c.l.b16 %v1659
    %v1838 = vunpack.c.h.b16 %v1659
    %v1839 = vunpack.c.l.b16 %v1660
    %v1840 = vunpack.c.h.b16 %v1660
    %v1841 = vunpack.c.l.b16 %v1661
    %v1842 = vunpack.c.h.b16 %v1661
    %v1843 = vunpack.c.l.b16 %v1662
    %v1844 = vunpack.c.h.b16 %v1662
    %v1845 = vunpack.c.l.b16 %v1663
    %v1846 = vunpack.c.h.b16 %v1663
    %v1847 = vunpack.c.l.b16 %v1664
    %v1848 = vunpack.c.h.b16 %v1664
    %v1849 = vunpack.c.l.b16 %v1665
    %v1850 = vunpack.c.h.b16 %v1665
    %v1851 = vunpack.c.l.b16 %v1666
    %v1852 = vunpack.c.h.b16 %v1666
    %v1853 = vunpack.c.l.b16 %v1667
    %v1854 = vunpack.c.h.b16 %v1667
    %v1855 = vunpack.c.l.b16 %v1668
    %v1856 = vunpack.c.h.b16 %v1668
    %v1857 = vunpack.c.l.b16 %v1669
    %v1858 = vunpack.c.h.b16 %v1669
    %v1859 = vunpack.c.l.b16 %v1670
    %v1860 = vunpack.c.h.b16 %v1670
    %v1861 = vunpack.c.l.b16 %v1671
    %v1862 = vunpack.c.h.b16 %v1671
    %v1863 = vunpack.c.l.b16 %v1672
    %v1864 = vunpack.c.h.b16 %v1672
    %v1865 = vunpack.c.l.b16 %v1673
    %v1866 = vunpack.c.h.b16 %v1673
    %v1867 = vunpack.c.l.b16 %v1674
    %v1868 = vunpack.c.h.b16 %v1674
    %v1869 = vunpack.c.l.b16 %v1675
    %v1870 = vunpack.c.h.b16 %v1675
    %v1871 = vunpack.c.l.b16 %v1676
    %v1872 = vunpack.c.h.b16 %v1676
    %v1873 = vunpack.c.l.b16 %v1677
    %v1874 = vunpack.c.h.b16 %v1677
    %v1875 = vunpack.c.l.b16 %v1678
    %v1876 = vunpack.c.h.b16 %v1678
    %v1877 = vunpack.c.l.b16 %v1679
    %v1878 = vunpack.c.h.b16 %v1679
    %v1879 = vunpack.c.l.b16 %v1680
    %v1880 = vunpack.c.h.b16 %v1680
    %v1881 = vunpack.c.l.b16 %v1681
    %v1882 = vunpack.c.h.b16 %v1681
    %v1883 = vunpack.c.l.b16 %v1682
    %v1884 = vunpack.c.h.b16 %v1682
    %v1885 = vunpack.c.l.b16 %v1683
    %v1886 = vunpack.c.h.b16 %v1683
    %v1887 = vunpack.c.l.b16 %v1684
    %v1888 = vunpack.c.h.b16 %v1684
    %v1889 = vpack.c.b16 %v1763, %v1761
    %v1890 = vpack.c.b16 %v1764, %v1762
    %v1891 = vpack.c.b16 %v1767, %v1765
    %v1892 = vpack.c.b16 %v1768, %v1766
    %v1893 = vpack.c.b16 %v1771, %v1769
    %v1894 = vpack.c.b16 %v1772, %v1770
    %v1895 = vpack.c.b16 %v1775, %v1773
    %v1896 = vpack.c.b16 %v1776, %v1774
    %v1897 = vpack.c.b16 %v1779, %v1777
    %v1898 = vpack.c.b16 %v1780, %v1778
    %v1899 = vpack.c.b16 %v1783, %v1781
    %v1900 = vpack.c.b16 %v1784, %v1782
    %v1901 = vpack.c.b16 %v1787, %v1785
    %v1902 = vpack.c.b16 %v1788, %v1786
    %v1903 = vpack.c.b16 %v1791, %v1789
    %v1904 = vpack.c.b16 %v1792, %v1790
    %v1905 = vpack.c.b16 %v1795, %v1793
    %v1906 = vpack.c.b16 %v1796, %v1794
    %v1907 = vpack.c.b16 %v1799, %v1797
    %v1908 = vpack.c.b16 %v1800, %v1798
    %v1909 = vpack.c.b16 %v1803, %v1801
    %v1910 = vpack.c.b16 %v1804, %v1802
    %v1911 = vpack.c.b16 %v1807, %v1805
    %v1912 = vpack.c.b16 %v1808, %v1806
    %v1913 = vpack.c.b16 %v1811, %v1809
    %v1914 = vpack.c.b16 %v1812, %v1810
    %v1915 = vpack.c.b16 %v1815, %v1813
    %v1916 = vpack.c.b16 %v1816, %v1814
    %v1917 = vpack.c.b16 %v1819, %v1817
    %v1918 = vpack.c.b16 %v1820, %v1818
    %v1919 = vpack.c.b16 %v1823, %v1821
    %v1920 = vpack.c.b16 %v1824, %v1822
    %v1921 = vpack.c.b16 %v1827, %v1825
    %v1922 = vpack.c.b16 %v1828, %v1826
    %v1923 = vpack.c.b16 %v1831, %v1829
    %v1924 = vpack.c.b16 %v1832, %v1830
    %v1925 = vpack.c.b16 %v1835, %v1833
    %v1926 = vpack.c.b16 %v1836, %v1834
    %v1927 = vpack.c.b16 %v1839, %v1837
    %v1928 = vpack.c.b16 %v1840, %v1838
    %v1929 = vpack.c.b16 %v1843, %v1841
    %v1930 = vpack.c.b16 %v1844, %v1842
    %v1931 = vpack.c.b16 %v1847, %v1845
    %v1932 = vpack.c.b16 %v1848, %v1846
    %v1933 = vpack.c.b16 %v1851, %v1849
    %v1934 = vpack.c.b16 %v1852, %v1850
    %v1935 = vpack.c.b16 %v1855, %v1853
    %v1936 = vpack.c.b16 %v1856, %v1854
    %v1937 = vpack.c.b16 %v1859, %v1857
    %v1938 = vpack.c.b16 %v1860, %v1858
    %v1939 = vpack.c.b16 %v1863, %v1861
    %v1940 = vpack.c.b16 %v1864, %v1862
    %v1941 = vpack.c.b16 %v1867, %v1865
    %v1942 = vpack.c.b16 %v1868, %v1866
    %v1943 = vpack.c.b16 %v1871, %v1869
    %v1944 = vpack.c.b16 %v1872, %v1870
    %v1945 = vpack.c.b16 %v1875, %v1873
    %v1946 = vpack.c.b16 %v1876, %v1874
    %v1947 = vpack.c.b16 %v1879, %v1877
    %v1948 = vpack.c.b16 %v1880, %v1878
    %v1949 = vpack.c.b16 %v1883, %v1881
    %v1950 = vpack.c.b16 %v1884, %v1882
    %v1951 = vpack.c.b16 %v1887, %v1885
    %v1952 = vpack.c.b16 %v1888, %v1886
    %2017 = vmatprep.subr.bf16.mxu0 %v1904
    %2018 = vmatpush1.bf16.msra.mxu0 %v1903
    %2019 = vmatprep.subr.bf16.mxu0 %v1902
    %2020 = vmatpush1.bf16.msra.mxu0 %v1901
    %2021 = vmatprep.subr.bf16.mxu0 %v1900
    %2022 = vmatpush1.bf16.msra.mxu0 %v1899
    %2023 = vmatprep.subr.bf16.mxu0 %v1898
    %2024 = vmatpush1.bf16.msra.mxu0 %v1897
    %2025 = vmatprep.subr.bf16.mxu0 %v1896
    %2026 = vmatpush1.bf16.msra.mxu0 %v1895
    %2027 = vmatprep.subr.bf16.mxu0 %v1894
    %2028 = vmatpush1.bf16.msra.mxu0 %v1893
    %2029 = vmatprep.subr.bf16.mxu0 %v1892
    %2030 = vmatpush1.bf16.msra.mxu0 %v1891
    %2031 = vmatprep.subr.bf16.mxu0 %v1890
    %2032 = vmatpush1.bf16.msra.mxu0 %v1889
    %2033 = vmatprep.subr.bf16.mxu0 %v1920
    %2034 = vmatpush2.bf16.msra.mxu0 %v1919
    %2035 = vmatprep.subr.bf16.mxu0 %v1918
    %2036 = vmatpush2.bf16.msra.mxu0 %v1917
    %2037 = vmatprep.subr.bf16.mxu0 %v1916
    %2038 = vmatpush2.bf16.msra.mxu0 %v1915
    %2039 = vmatprep.subr.bf16.mxu0 %v1914
    %2040 = vmatpush2.bf16.msra.mxu0 %v1913
    %2041 = vmatprep.subr.bf16.mxu0 %v1912
    %2042 = vmatpush2.bf16.msra.mxu0 %v1911
    %2043 = vmatprep.subr.bf16.mxu0 %v1910
    %2044 = vmatpush2.bf16.msra.mxu0 %v1909
    %2045 = vmatprep.subr.bf16.mxu0 %v1908
    %2046 = vmatpush2.bf16.msra.mxu0 %v1907
    %2047 = vmatprep.subr.bf16.mxu0 %v1906
    %2048 = vmatpush2.bf16.msra.mxu0 %v1905
    %2049 = vmatprep.mubr.bf16.mxu0 %v1618
    %2050 = vmatmul.mubr.bf16.gmra.mxu0 %v1617
    %v2051 = vpop.f32.mrf.mxu0
    %v2052 = vadd.f32 %v1690, %v2051
    %v2053 = vpop.f32.mrf.mxu0
    %v2054 = vadd.f32 %v1694, %v2053
    %v2055 = vpop.f32.mrf.mxu0
    %v2056 = vpop.f32.mrf.mxu0
    %2057 = vdwg.mxu0
    %2058 = vmatprep.subr.bf16.mxu0 %v1936
    %2059 = vmatpush1.bf16.msra.mxu0 %v1935
    %2060 = vmatprep.subr.bf16.mxu0 %v1934
    %2061 = vmatpush1.bf16.msra.mxu0 %v1933
    %2062 = vmatprep.subr.bf16.mxu0 %v1932
    %2063 = vmatpush1.bf16.msra.mxu0 %v1931
    %2064 = vmatprep.subr.bf16.mxu0 %v1930
    %2065 = vmatpush1.bf16.msra.mxu0 %v1929
    %2066 = vmatprep.subr.bf16.mxu0 %v1928
    %2067 = vmatpush1.bf16.msra.mxu0 %v1927
    %2068 = vmatprep.subr.bf16.mxu0 %v1926
    %2069 = vmatpush1.bf16.msra.mxu0 %v1925
    %2070 = vmatprep.subr.bf16.mxu0 %v1924
    %2071 = vmatpush1.bf16.msra.mxu0 %v1923
    %2072 = vmatprep.subr.bf16.mxu0 %v1922
    %2073 = vmatpush1.bf16.msra.mxu0 %v1921
    %2074 = vmatprep.subr.bf16.mxu0 %v1952
    %2075 = vmatpush2.bf16.msra.mxu0 %v1951
    %2076 = vmatprep.subr.bf16.mxu0 %v1950
    %2077 = vmatpush2.bf16.msra.mxu0 %v1949
    %2078 = vmatprep.subr.bf16.mxu0 %v1948
    %2079 = vmatpush2.bf16.msra.mxu0 %v1947
    %2080 = vmatprep.subr.bf16.mxu0 %v1946
    %2081 = vmatpush2.bf16.msra.mxu0 %v1945
    %2082 = vmatprep.subr.bf16.mxu0 %v1944
    %2083 = vmatpush2.bf16.msra.mxu0 %v1943
    %2084 = vmatprep.subr.bf16.mxu0 %v1942
    %2085 = vmatpush2.bf16.msra.mxu0 %v1941
    %2086 = vmatprep.subr.bf16.mxu0 %v1940
    %2087 = vmatpush2.bf16.msra.mxu0 %v1939
    %2088 = vmatprep.subr.bf16.mxu0 %v1938
    %2089 = vmatpush2.bf16.msra.mxu0 %v1937
    %2090 = vmatprep.mubr.bf16.mxu0 %v1620
    %2091 = vmatmul.mubr.bf16.gmra.mxu0 %v1619
    %v2092 = vpop.f32.mrf.mxu0
    %v2093 = vadd.f32 %v2052, %v2092
    %v2094 = vpop.f32.mrf.mxu0
    %v2095 = vadd.f32 %v2054, %v2094
    %v2096 = vpop.f32.mrf.mxu0
    %v2097 = vpop.f32.mrf.mxu0
    %2098 = vdwg.mxu0
    %v2099 = vmax.f32 %v2093, 0.0
    %v2100 = vmax.f32 %v2095, 0.0
    %v2101 = vpack.c.bf16 %v2099, %v2099
    %v2102 = vpack.c.bf16 %v2100, %v2100
    %v2103 = vld [vmem:[%s5] sm:$0xf]
    %v2104 = vld [vmem:[%s5 + $0x4] sm:$0xf]
    %v2105 = vld [vmem:[%s5 + $0x8] sm:$0xf]
    %v2106 = vld [vmem:[%s5 + $0xc] sm:$0xf]
    %v2107 = vld [vmem:[%s5 + $0x10] sm:$0xf]
    %v2108 = vld [vmem:[%s5 + $0x14] sm:$0xf]
    %v2109 = vld [vmem:[%s5 + $0x18] sm:$0xf]
    %v2110 = vld [vmem:[%s5 + $0x1c] sm:$0xf]
    %v2111 = vld [vmem:[%s5 + $0x20] sm:$0xf]
    %v2112 = vld [vmem:[%s5 + $0x24] sm:$0xf]
    %v2113 = vld [vmem:[%s5 + $0x28] sm:$0xf]
    %v2114 = vld [vmem:[%s5 + $0x2c] sm:$0xf]
    %v2115 = vld [vmem:[%s5 + $0x30] sm:$0xf]
    %v2116 = vld [vmem:[%s5 + $0x34] sm:$0xf]
    %v2117 = vld [vmem:[%s5 + $0x38] sm:$0xf]
    %v2118 = vld [vmem:[%s5 + $0x3c] sm:$0xf]
    %v2119 = vld [vmem:[%s5 + $0x40] sm:$0xf]
    %v2120 = vld [vmem:[%s5 + $0x44] sm:$0xf]
    %v2121 = vld [vmem:[%s5 + $0x48] sm:$0xf]
    %v2122 = vld [vmem:[%s5 + $0x4c] sm:$0xf]
    %v2123 = vld [vmem:[%s5 + $0x50] sm:$0xf]
    %v2124 = vld [vmem:[%s5 + $0x54] sm:$0xf]
    %v2125 = vld [vmem:[%s5 + $0x58] sm:$0xf]
    %v2126 = vld [vmem:[%s5 + $0x5c] sm:$0xf]
    %v2127 = vld [vmem:[%s5 + $0x60] sm:$0xf]
    %v2128 = vld [vmem:[%s5 + $0x64] sm:$0xf]
    %v2129 = vld [vmem:[%s5 + $0x68] sm:$0xf]
    %v2130 = vld [vmem:[%s5 + $0x6c] sm:$0xf]
    %v2131 = vld [vmem:[%s5 + $0x70] sm:$0xf]
    %v2132 = vld [vmem:[%s5 + $0x74] sm:$0xf]
    %v2133 = vld [vmem:[%s5 + $0x78] sm:$0xf]
    %v2134 = vld [vmem:[%s5 + $0x7c] sm:$0xf]
    %v2135 = vld [vmem:[%s6] sm:$0x1]
    %v2137 = vlaneseq
    %v2138 = vshrl.u32 %v2137, 7
    %v2139 = vsub.s32 0, %v2138
    %v2140 = vrot.slane %v2135, %v2139
    %v2174 = vunpack.c.l.b16 %v2103
    %v2175 = vunpack.c.l.b16 %v2104
    %v2176 = vunpack.c.l.b16 %v2105
    %v2177 = vunpack.c.l.b16 %v2106
    %v2178 = vunpack.c.l.b16 %v2107
    %v2179 = vunpack.c.l.b16 %v2108
    %v2180 = vunpack.c.l.b16 %v2109
    %v2181 = vunpack.c.l.b16 %v2110
    %v2182 = vunpack.c.l.b16 %v2111
    %v2183 = vunpack.c.l.b16 %v2112
    %v2184 = vunpack.c.l.b16 %v2113
    %v2185 = vunpack.c.l.b16 %v2114
    %v2186 = vunpack.c.l.b16 %v2115
    %v2187 = vunpack.c.l.b16 %v2116
    %v2188 = vunpack.c.l.b16 %v2117
    %v2189 = vunpack.c.l.b16 %v2118
    %v2190 = vunpack.c.l.b16 %v2119
    %v2191 = vunpack.c.l.b16 %v2120
    %v2192 = vunpack.c.l.b16 %v2121
    %v2193 = vunpack.c.l.b16 %v2122
    %v2194 = vunpack.c.l.b16 %v2123
    %v2195 = vunpack.c.l.b16 %v2124
    %v2196 = vunpack.c.l.b16 %v2125
    %v2197 = vunpack.c.l.b16 %v2126
    %v2198 = vunpack.c.l.b16 %v2127
    %v2199 = vunpack.c.l.b16 %v2128
    %v2200 = vunpack.c.l.b16 %v2129
    %v2201 = vunpack.c.l.b16 %v2130
    %v2202 = vunpack.c.l.b16 %v2131
    %v2203 = vunpack.c.l.b16 %v2132
    %v2204 = vunpack.c.l.b16 %v2133
    %v2205 = vunpack.c.l.b16 %v2134
    %v2206 = vpack.c.b16 %v2175, %v2174
    %v2207 = vpack.c.b16 %v2177, %v2176
    %v2208 = vpack.c.b16 %v2179, %v2178
    %v2209 = vpack.c.b16 %v2181, %v2180
    %v2210 = vpack.c.b16 %v2183, %v2182
    %v2211 = vpack.c.b16 %v2185, %v2184
    %v2212 = vpack.c.b16 %v2187, %v2186
    %v2213 = vpack.c.b16 %v2189, %v2188
    %v2214 = vpack.c.b16 %v2191, %v2190
    %v2215 = vpack.c.b16 %v2193, %v2192
    %v2216 = vpack.c.b16 %v2195, %v2194
    %v2217 = vpack.c.b16 %v2197, %v2196
    %v2218 = vpack.c.b16 %v2199, %v2198
    %v2219 = vpack.c.b16 %v2201, %v2200
    %v2220 = vpack.c.b16 %v2203, %v2202
    %v2221 = vpack.c.b16 %v2205, %v2204
    %2238 = vmatprep.subr.bf16.mxu0 0
    %2239 = vmatpush1.bf16.msra.mxu0 %v2213
    %2240 = vmatprep.subr.bf16.mxu0 0
    %2241 = vmatpush1.bf16.msra.mxu0 %v2212
    %2242 = vmatprep.subr.bf16.mxu0 0
    %2243 = vmatpush1.bf16.msra.mxu0 %v2211
    %2244 = vmatprep.subr.bf16.mxu0 0
    %2245 = vmatpush1.bf16.msra.mxu0 %v2210
    %2246 = vmatprep.subr.bf16.mxu0 0
    %2247 = vmatpush1.bf16.msra.mxu0 %v2209
    %2248 = vmatprep.subr.bf16.mxu0 0
    %2249 = vmatpush1.bf16.msra.mxu0 %v2208
    %2250 = vmatprep.subr.bf16.mxu0 0
    %2251 = vmatpush1.bf16.msra.mxu0 %v2207
    %2252 = vmatprep.subr.bf16.mxu0 0
    %2253 = vmatpush1.bf16.msra.mxu0 %v2206
    %2254 = vmatprep.subr.bf16.mxu0 0
    %2255 = vmatpush2.bf16.msra.mxu0 %v2221
    %2256 = vmatprep.subr.bf16.mxu0 0
    %2257 = vmatpush2.bf16.msra.mxu0 %v2220
    %2258 = vmatprep.subr.bf16.mxu0 0
    %2259 = vmatpush2.bf16.msra.mxu0 %v2219
    %2260 = vmatprep.subr.bf16.mxu0 0
    %2261 = vmatpush2.bf16.msra.mxu0 %v2218
    %2262 = vmatprep.subr.bf16.mxu0 0
    %2263 = vmatpush2.bf16.msra.mxu0 %v2217
    %2264 = vmatprep.subr.bf16.mxu0 0
    %2265 = vmatpush2.bf16.msra.mxu0 %v2216
    %2266 = vmatprep.subr.bf16.mxu0 0
    %2267 = vmatpush2.bf16.msra.mxu0 %v2215
    %2268 = vmatprep.subr.bf16.mxu0 0
    %2269 = vmatpush2.bf16.msra.mxu0 %v2214
    %2270 = vmatprep.mubr.bf16.mxu0 %v2102
    %2271 = vmatmul.mubr.bf16.gmra.mxu0 %v2101
    %v2272 = vpop.f32.mrf.mxu0
    %v2273 = vadd.f32 %v2140, %v2272
    %v2274 = vpop.f32.mrf.mxu0
    %v2275 = vpop.f32.mrf.mxu0
    %v2276 = vpop.f32.mrf.mxu0
    %2277 = vdwg.mxu0
    %2278 = vst [vmem:[%s7] sm:$0xff] %v2273
    // Predicated region
    $region38: #{_forward_impl.1} parent=1 // pred_check
      _
    $region39: #{_forward_impl.1} parent=1 // pred_check_branch
      %2280 = sbr.rel (0) target = $region41
    $region40: #{_forward_impl.1} parent=1 // pred_region
      _
    $region41: #{_forward_impl.1} parent=1 // pred_fallthru
      _
    // Predicated region
    $region42: #{_forward_impl.1} parent=1 // pred_check
      _
    $region43: #{_forward_impl.1} parent=1 // pred_check_branch
      %2282 = sbr.rel (0) target = $region45
    $region44: #{_forward_impl.1} parent=1 // pred_region
      _
    $region45: #{_forward_impl.1} parent=1 // pred_fallthru
      _
    %2283 = vsyncpa [#allocation3], 1
    %2284 = vsyncpa [#allocation5], 1

</llo_original>
